<compile_context>
chip_gen: v5e
topology: v5e:2x2
jax: 0.10.0
libtpu: 0.0.40
codegen_flags: <defaults>
</compile_context>

<pallas_src>
import functools

import jax
import jax.numpy as jnp
from jax import lax
from jax.experimental import pallas as pl
from jax.experimental.pallas import tpu as pltpu


def _meta_kernel(x_ref, y_ref, w_ref, b_ref, corr_ref, loss_ref, *,
                 update_lr, update_step, n_way, setsz, querysz,
                 tasks_per_block):
    """One grid step == TB tasks of the MAML inner loop."""
    C = n_way
    S = setsz
    Q = querysz
    SQ = S + Q
    TB = tasks_per_block
    n_steps = update_step + 1

    x_all = x_ref[0]            # [TB*SQ, D]  (support rows then query rows, per task)
    y_all = y_ref[0]            # [TB*SQ, 1]  int32 labels
    W0 = w_ref[...]             # [C, D]
    b0 = b_ref[...]             # [1, C]

    N_all = TB * SQ

    # ---- one-hot labels built in-kernel (no HBM one-hot) -------------------
    col_all = lax.broadcasted_iota(jnp.int32, (N_all, C), 1)
    y_oh_all = (y_all == col_all).astype(jnp.float32)          # [N_all, C]

    # ---- batched step-0 pass: shared base weights for every task -----------
    z0_all = lax.dot_general(x_all, W0, (((1,), (1,)), ((), ())),
                             preferred_element_type=jnp.float32) + b0   # [N_all, C]

    m0 = jnp.max(z0_all, axis=-1, keepdims=True)
    e0 = jnp.exp(z0_all - m0)
    se0 = jnp.sum(e0, axis=-1, keepdims=True)
    p0_all = e0 / se0                                           # softmax  [N_all, C]
    lse0 = m0 + jnp.log(se0)
    nll0_all = lse0 - jnp.sum(z0_all * y_oh_all, axis=-1, keepdims=True)  # [N_all,1]

    is_max0 = z0_all >= m0
    pred0 = jnp.min(jnp.where(is_max0, col_all, C), axis=-1, keepdims=True)
    hit0_all = jnp.sum(jnp.where(col_all == pred0, y_oh_all, 0.0),
                       axis=-1, keepdims=True)                  # [N_all,1] 1.0 if correct

    # ---- per-task helpers (fast weights differ per task after step 0) ------
    def logits(x, W, b):
        return lax.dot_general(x, W, (((1,), (1,)), ((), ())),
                               preferred_element_type=jnp.float32) + b

    def softmax(z):
        m = jnp.max(z, axis=-1, keepdims=True)
        e = jnp.exp(z - m)
        return e / jnp.sum(e, axis=-1, keepdims=True)

    def query_stats(z, y_oh):
        # mean cross-entropy + correct count (first-max argmax matches torch)
        m = jnp.max(z, axis=-1, keepdims=True)
        lse = m + jnp.log(jnp.sum(jnp.exp(z - m), axis=-1, keepdims=True))
        nll = lse - jnp.sum(z * y_oh, axis=-1, keepdims=True)
        loss = jnp.sum(nll) / Q
        col = lax.broadcasted_iota(jnp.int32, z.shape, 1)
        is_max = z >= m
        pred = jnp.min(jnp.where(is_max, col, C), axis=-1, keepdims=True)
        correct = jnp.sum(jnp.where(col == pred, y_oh, 0.0))
        return correct, loss

    def grads(xs, ys_oh, W, b):
        z = logits(xs, W, b)
        g = (softmax(z) - ys_oh) / S                            # [S, C]
        gW = lax.dot_general(g, xs, (((0,), (0,)), ((), ())),
                             preferred_element_type=jnp.float32)  # [C, D]
        gb = jnp.sum(g, axis=0, keepdims=True)                    # [1, C]
        return gW, gb

    # ---- per-task / per-step bookkeeping (write-once output block) ---------
    row_iota = lax.broadcasted_iota(jnp.int32, (TB, n_steps), 0)
    col_iota = lax.broadcasted_iota(jnp.int32, (TB, n_steps), 1)
    corr_out = jnp.zeros((TB, n_steps), jnp.float32)
    loss_out = jnp.zeros((TB, n_steps), jnp.float32)

    def record(co, lo, t, k, c, l):
        m = (row_iota == t) & (col_iota == k)
        return co + jnp.where(m, c, 0.0), lo + jnp.where(m, l, 0.0)

    for t in range(TB):                      # static unroll over tasks in block
        base = t * SQ
        qbase = base + S

        xs = x_all[base:base + S]            # [S, D]
        xq = x_all[qbase:qbase + Q]          # [Q, D]
        ys_oh = y_oh_all[base:base + S]      # [S, C]
        yq_oh = y_oh_all[qbase:qbase + Q]    # [Q, C]

        # step 0: query stats with the base parameters (from batched pass)
        c0 = jnp.sum(hit0_all[qbase:qbase + Q])
        l0 = jnp.sum(nll0_all[qbase:qbase + Q]) / Q
        corr_out, loss_out = record(corr_out, loss_out, t, 0, c0, l0)

        # first inner update (support softmax reused from batched pass)
        g = (p0_all[base:base + S] - ys_oh) / S
        gW = lax.dot_general(g, xs, (((0,), (0,)), ((), ())),
                             preferred_element_type=jnp.float32)
        gb = jnp.sum(g, axis=0, keepdims=True)
        fW = W0 - update_lr * gW
        fb = b0 - update_lr * gb
        c1, l1 = query_stats(logits(xq, fW, fb), yq_oh)
        corr_out, loss_out = record(corr_out, loss_out, t, 1, c1, l1)

        # remaining inner updates (static unroll: update_step is small)
        for k in range(1, update_step):
            gW, gb = grads(xs, ys_oh, fW, fb)
            fW = fW - update_lr * gW
            fb = fb - update_lr * gb
            ck, lk = query_stats(logits(xq, fW, fb), yq_oh)
            corr_out, loss_out = record(corr_out, loss_out, t, k + 1, ck, lk)

    corr_ref[0] = corr_out                   # [TB, n_steps] write-once
    loss_ref[0] = loss_out


def meta_forward(x_spt, y_spt, x_qry, y_qry, W, b, *, update_lr, update_step,
                 tasks_per_block=4):
    """MAML inner-loop forward.  Returns (accs[update_step+1], final mean query loss)."""
    T, S, c_, E = x_spt.shape
    Q = x_qry.shape[1]
    C, D = W.shape
    assert D == c_ * E
    SQ = S + Q
    n_steps = update_step + 1

    TB = min(tasks_per_block, T)
    NB = pl.cdiv(T, TB)
    T_pad = NB * TB

    # glue (plain JAX): flatten features, fuse support+query into one stream
    xs = x_spt.reshape(T, S, D)
    xq = x_qry.reshape(T, Q, D)
    x_all = jnp.concatenate([xs, xq], axis=1).astype(jnp.float32)    # [T, SQ, D]
    y_all = jnp.concatenate([y_spt, y_qry], axis=1).astype(jnp.int32)  # [T, SQ]

    if T_pad != T:
        x_all = jnp.pad(x_all, ((0, T_pad - T), (0, 0), (0, 0)))
        y_all = jnp.pad(y_all, ((0, T_pad - T), (0, 0)))

    x_blk = x_all.reshape(NB, TB * SQ, D)
    y_blk = y_all.reshape(NB, TB * SQ, 1)
    W32 = W.astype(jnp.float32)
    b32 = b.reshape(1, C).astype(jnp.float32)

    kernel = functools.partial(_meta_kernel, update_lr=update_lr,
                               update_step=update_step, n_way=C,
                               setsz=S, querysz=Q, tasks_per_block=TB)

    corrects, losses = pl.pallas_call(
        kernel,
        out_shape=(jax.ShapeDtypeStruct((NB, TB, n_steps), jnp.float32),
                   jax.ShapeDtypeStruct((NB, TB, n_steps), jnp.float32)),
        grid_spec=pltpu.PrefetchScalarGridSpec(
            num_scalar_prefetch=0,
            grid=(NB,),
            in_specs=[
                pl.BlockSpec((1, TB * SQ, D), lambda nb: (nb, 0, 0)),
                pl.BlockSpec((1, TB * SQ, 1), lambda nb: (nb, 0, 0)),
                pl.BlockSpec((C, D), lambda nb: (0, 0)),
                pl.BlockSpec((1, C), lambda nb: (0, 0)),
            ],
            out_specs=[
                pl.BlockSpec((1, TB, n_steps), lambda nb: (nb, 0, 0)),
                pl.BlockSpec((1, TB, n_steps), lambda nb: (nb, 0, 0)),
            ],
        ),
        compiler_params=pltpu.CompilerParams(
            dimension_semantics=("parallel",)),   # per-task outputs -> no cross-step deps
    )(x_blk, y_blk, W32, b32)

    corr = corrects.reshape(T_pad, n_steps)[:T]   # drop padded tasks
    loss = losses.reshape(T_pad, n_steps)[:T]
    accs = jnp.sum(corr, axis=0) / (Q * T)        # mirrors np.array(corrects)/(querysz*task_num)
    loss_q_final = jnp.sum(loss[:, -1]) / T       # mirrors losses_q[-1] / task_num
    return accs, loss_q_final


def _meta_forward_ref(x_spt, y_spt, x_qry, y_qry, W, b, *, update_lr, update_step):
    """Pure-JAX reference (same math, no Pallas) for a sanity check."""
    T, S, c_, E = x_spt.shape
    Q = x_qry.shape[1]
    C, D = W.shape
    xs = x_spt.reshape(T, S, D).astype(jnp.float32)
    xq = x_qry.reshape(T, Q, D).astype(jnp.float32)
    n_steps = update_step + 1
    corrects = jnp.zeros((n_steps,), jnp.float32)
    losses = jnp.zeros((n_steps,), jnp.float32)

    def ce(z, y):
        logp = jax.nn.log_softmax(z, axis=-1)
        return -jnp.mean(jnp.take_along_axis(logp, y[:, None], axis=-1))

    def qstats(z, y):
        pred = jnp.argmax(jax.nn.softmax(z, axis=-1), axis=-1)
        return jnp.sum((pred == y).astype(jnp.float32)), ce(z, y)

    for i in range(T):
        Wf = W.astype(jnp.float32)
        bf = b.astype(jnp.float32)

        def grad_fn(Wc, bc):
            def loss_fn(params):
                Wp, bp = params
                return ce(xs[i] @ Wp.T + bp, y_spt[i])
            return jax.grad(loss_fn)((Wc, bc))

        c, l = qstats(xq[i] @ Wf.T + bf, y_qry[i])
        corrects = corrects.at[0].add(c)
        losses = losses.at[0].add(l)

        gW, gb = grad_fn(Wf, bf)
        fW, fb = Wf - update_lr * gW, bf - update_lr * gb
        c, l = qstats(xq[i] @ fW.T + fb, y_qry[i])
        corrects = corrects.at[1].add(c)
        losses = losses.at[1].add(l)

        for k in range(1, update_step):
            gW, gb = grad_fn(fW, fb)
            fW, fb = fW - update_lr * gW, fb - update_lr * gb
            c, l = qstats(xq[i] @ fW.T + fb, y_qry[i])
            corrects = corrects.at[k + 1].add(c)
            losses = losses.at[k + 1].add(l)

    return corrects / (Q * T), losses[-1] / T


if __name__ == "__main__":
    key = jax.random.PRNGKey(0)
    k1, k2, k3, k4, k5 = jax.random.split(key, 5)

    # small shapes consistent with forward(): x_spt [task, setsz, c_, embedsz]
    task_num, setsz, querysz = 8, 8, 16
    c_, embedsz = 4, 32
    n_way = 8
    update_lr = 0.4
    update_step = 3
    D = c_ * embedsz

    x_spt = jax.random.normal(k1, (task_num, setsz, c_, embedsz), jnp.float32)
    y_spt = jax.random.randint(k2, (task_num, setsz), 0, n_way, jnp.int32)
    x_qry = jax.random.normal(k3, (task_num, querysz, c_, embedsz), jnp.float32)
    y_qry = jax.random.randint(k4, (task_num, querysz), 0, n_way, jnp.int32)

    # deterministic learner parameters (single linear layer)
    W = 0.02 * jax.random.normal(k5, (n_way, D), jnp.float32)
    b = jnp.zeros((n_way,), jnp.float32)

    accs, loss_q = meta_forward(x_spt, y_spt, x_qry, y_qry, W, b,
                                update_lr=update_lr, update_step=update_step,
                                tasks_per_block=4)
    jax.block_until_ready((accs, loss_q))
    assert accs.shape == (update_step + 1,)

    # loose-tolerance sanity check against the pure-JAX reference
    accs_ref, loss_ref = _meta_forward_ref(
        x_spt, y_spt, x_qry, y_qry, W, b,
        update_lr=update_lr, update_step=update_step)
    jax.block_until_ready((accs_ref, loss_ref))
    assert jnp.allclose(accs, accs_ref, atol=5e-2), (accs, accs_ref)
    assert jnp.allclose(loss_q, loss_ref, rtol=5e-2, atol=5e-2), (loss_q, loss_ref)

    print("KERNEL_OK")
</pallas_src>

<mosaic_0001>
module attributes {stable_mosaic.version = 11 : i64} {
  func.func @_meta_kernel(%arg0: i32, %arg1: memref<1x96x128xf32, #tpu.memory_space<vmem>>, %arg2: memref<1x96x1xi32, #tpu.memory_space<vmem>>, %arg3: memref<8x128xf32, #tpu.memory_space<vmem>>, %arg4: memref<1x8xf32, #tpu.memory_space<vmem>>, %arg5: memref<1x4x4xf32, #tpu.memory_space<vmem>>, %arg6: memref<1x4x4xf32, #tpu.memory_space<vmem>>) attributes {dimension_semantics = [#tpu.dimension_semantics<parallel>], iteration_bounds = array<i64: 2>, scalar_prefetch = 0 : i64, scratch_operands = 0 : i64, tpu.core_type = #tpu.core_type<tc>, window_params = [{transform_indices = @transform_0, window_bounds = array<i64: 1, 96, 128>}, {transform_indices = @transform_1, window_bounds = array<i64: 1, 96, 1>}, {pipeline_mode = #tpu.pipeline_mode<synchronous>, transform_indices = @transform_2, window_bounds = array<i64: 8, 128>}, {pipeline_mode = #tpu.pipeline_mode<synchronous>, transform_indices = @transform_3, window_bounds = array<i64: 1, 8>}, {transform_indices = @transform_4, window_bounds = array<i64: 1, 4, 4>}, {transform_indices = @transform_5, window_bounds = array<i64: 1, 4, 4>}]} {
    %c0 = arith.constant 0 : index
    %c0_0 = arith.constant 0 : index
    %c0_1 = arith.constant 0 : index
    %0 = vector.load %arg1[%c0, %c0_0, %c0_1] : memref<1x96x128xf32, #tpu.memory_space<vmem>>, vector<1x96x128xf32>
    %1 = vector.shape_cast %0 : vector<1x96x128xf32> to vector<96x128xf32>
    %c0_2 = arith.constant 0 : index
    %c0_3 = arith.constant 0 : index
    %c0_4 = arith.constant 0 : index
    %2 = vector.load %arg2[%c0_2, %c0_3, %c0_4] : memref<1x96x1xi32, #tpu.memory_space<vmem>>, vector<1x96x1xi32>
    %3 = vector.shape_cast %2 : vector<1x96x1xi32> to vector<96x1xi32>
    %c0_5 = arith.constant 0 : index
    %c0_6 = arith.constant 0 : index
    %4 = vector.load %arg3[%c0_5, %c0_6] : memref<8x128xf32, #tpu.memory_space<vmem>>, vector<8x128xf32>
    %c0_7 = arith.constant 0 : index
    %c0_8 = arith.constant 0 : index
    %5 = vector.load %arg4[%c0_7, %c0_8] : memref<1x8xf32, #tpu.memory_space<vmem>>, vector<1x8xf32>
    %6 = tpu.iota {dimensions = array<i32: 1>} : vector<96x8xi32>
    %7 = vector.broadcast %3 : vector<96x1xi32> to vector<96x8xi32>
    %8 = arith.cmpi eq, %7, %6 : vector<96x8xi32>
    %9 = arith.extui %8 : vector<96x8xi1> to vector<96x8xi32>
    %10 = arith.sitofp %9 : vector<96x8xi32> to vector<96x8xf32>
    %cst = arith.constant dense<0.000000e+00> : vector<96x8xf32>
    %11 = tpu.matmul %1, %4, %cst {dimension_numbers = #tpu.dot_dimension_numbers<[1], [1], [0], [0], [0, 0, 1, 0], [], []>} : vector<96x128xf32>, vector<8x128xf32>, vector<96x8xf32> -> vector<96x8xf32>
    %12 = vector.broadcast %5 : vector<1x8xf32> to vector<96x8xf32>
    %13 = arith.addf %11, %12 : vector<96x8xf32>
    %cst_9 = arith.constant dense<0xFF800000> : vector<96xf32>
    %14 = vector.multi_reduction <maximumf>, %13, %cst_9 [1] : vector<96x8xf32> to vector<96xf32>
    %15 = vector.shape_cast %14 : vector<96xf32> to vector<96x1xf32>
    %16 = vector.broadcast %15 : vector<96x1xf32> to vector<96x8xf32>
    %17 = arith.subf %13, %16 : vector<96x8xf32>
    %18 = math.exp %17 : vector<96x8xf32>
    %cst_10 = arith.constant dense<0.000000e+00> : vector<96xf32>
    %19 = vector.multi_reduction <add>, %18, %cst_10 [1] : vector<96x8xf32> to vector<96xf32>
    %20 = vector.shape_cast %19 : vector<96xf32> to vector<96x1xf32>
    %21 = vector.broadcast %20 : vector<96x1xf32> to vector<96x8xf32>
    %22 = arith.divf %18, %21 : vector<96x8xf32>
    %23 = math.log %20 : vector<96x1xf32>
    %24 = arith.addf %15, %23 : vector<96x1xf32>
    %25 = arith.mulf %13, %10 : vector<96x8xf32>
    %cst_11 = arith.constant dense<0.000000e+00> : vector<96xf32>
    %26 = vector.multi_reduction <add>, %25, %cst_11 [1] : vector<96x8xf32> to vector<96xf32>
    %27 = vector.shape_cast %26 : vector<96xf32> to vector<96x1xf32>
    %28 = arith.subf %24, %27 : vector<96x1xf32>
    %29 = vector.broadcast %15 : vector<96x1xf32> to vector<96x8xf32>
    %30 = arith.cmpf oge, %13, %29 : vector<96x8xf32>
    %c8_i32 = arith.constant 8 : i32
    %31 = vector.broadcast %c8_i32 : i32 to vector<96x8xi32>
    %32 = arith.select %30, %6, %31 : vector<96x8xi1>, vector<96x8xi32>
    %cst_12 = arith.constant dense<2147483647> : vector<96xi32>
    %33 = vector.multi_reduction <minsi>, %32, %cst_12 [1] : vector<96x8xi32> to vector<96xi32>
    %34 = vector.shape_cast %33 : vector<96xi32> to vector<96x1xi32>
    %35 = vector.broadcast %34 : vector<96x1xi32> to vector<96x8xi32>
    %36 = arith.cmpi eq, %6, %35 : vector<96x8xi32>
    %cst_13 = arith.constant 0.000000e+00 : f32
    %37 = vector.broadcast %cst_13 : f32 to vector<96x8xf32>
    %38 = arith.select %36, %10, %37 : vector<96x8xi1>, vector<96x8xf32>
    %cst_14 = arith.constant dense<0.000000e+00> : vector<96xf32>
    %39 = vector.multi_reduction <add>, %38, %cst_14 [1] : vector<96x8xf32> to vector<96xf32>
    %40 = vector.shape_cast %39 : vector<96xf32> to vector<96x1xf32>
    %41 = tpu.iota {dimensions = array<i32: 0>} : vector<4x4xi32>
    %42 = tpu.iota {dimensions = array<i32: 1>} : vector<4x4xi32>
    %cst_15 = arith.constant 0.000000e+00 : f32
    %43 = vector.broadcast %cst_15 : f32 to vector<4x4xf32>
    %cst_16 = arith.constant 0.000000e+00 : f32
    %44 = vector.broadcast %cst_16 : f32 to vector<4x4xf32>
    %45 = vector.extract_strided_slice %1 {offsets = [0, 0], sizes = [8, 128], strides = [1, 1]} : vector<96x128xf32> to vector<8x128xf32>
    %46 = vector.extract_strided_slice %1 {offsets = [8, 0], sizes = [16, 128], strides = [1, 1]} : vector<96x128xf32> to vector<16x128xf32>
    %47 = vector.extract_strided_slice %10 {offsets = [0, 0], sizes = [8, 8], strides = [1, 1]} : vector<96x8xf32> to vector<8x8xf32>
    %48 = vector.extract_strided_slice %10 {offsets = [8, 0], sizes = [16, 8], strides = [1, 1]} : vector<96x8xf32> to vector<16x8xf32>
    %49 = vector.extract_strided_slice %40 {offsets = [8, 0], sizes = [16, 1], strides = [1, 1]} : vector<96x1xf32> to vector<16x1xf32>
    %50 = vector.shape_cast %49 : vector<16x1xf32> to vector<1x16x1xf32>
    %cst_17 = arith.constant dense<0.000000e+00> : vector<1xf32>
    %51 = vector.multi_reduction <add>, %50, %cst_17 [1, 2] : vector<1x16x1xf32> to vector<1xf32>
    %52 = vector.shape_cast %51 : vector<1xf32> to vector<1x1x1xf32>
    %53 = vector.extract %52[0, 0, 0] : f32 from vector<1x1x1xf32>
    %54 = vector.extract_strided_slice %28 {offsets = [8, 0], sizes = [16, 1], strides = [1, 1]} : vector<96x1xf32> to vector<16x1xf32>
    %55 = vector.shape_cast %54 : vector<16x1xf32> to vector<1x16x1xf32>
    %cst_18 = arith.constant dense<0.000000e+00> : vector<1xf32>
    %56 = vector.multi_reduction <add>, %55, %cst_18 [1, 2] : vector<1x16x1xf32> to vector<1xf32>
    %57 = vector.shape_cast %56 : vector<1xf32> to vector<1x1x1xf32>
    %58 = vector.extract %57[0, 0, 0] : f32 from vector<1x1x1xf32>
    %cst_19 = arith.constant 1.600000e+01 : f32
    %59 = arith.divf %58, %cst_19 : f32
    %c0_i32 = arith.constant 0 : i32
    %60 = vector.broadcast %c0_i32 : i32 to vector<4x4xi32>
    %61 = arith.cmpi eq, %41, %60 : vector<4x4xi32>
    %c0_i32_20 = arith.constant 0 : i32
    %62 = vector.broadcast %c0_i32_20 : i32 to vector<4x4xi32>
    %63 = arith.cmpi eq, %42, %62 : vector<4x4xi32>
    %64 = arith.andi %61, %63 : vector<4x4xi1>
    %cst_21 = arith.constant 0.000000e+00 : f32
    %65 = vector.broadcast %53 : f32 to vector<4x4xf32>
    %66 = vector.broadcast %cst_21 : f32 to vector<4x4xf32>
    %67 = arith.select %64, %65, %66 : vector<4x4xi1>, vector<4x4xf32>
    %68 = arith.addf %43, %67 : vector<4x4xf32>
    %cst_22 = arith.constant 0.000000e+00 : f32
    %69 = vector.broadcast %59 : f32 to vector<4x4xf32>
    %70 = vector.broadcast %cst_22 : f32 to vector<4x4xf32>
    %71 = arith.select %64, %69, %70 : vector<4x4xi1>, vector<4x4xf32>
    %72 = arith.addf %44, %71 : vector<4x4xf32>
    %73 = vector.extract_strided_slice %22 {offsets = [0, 0], sizes = [8, 8], strides = [1, 1]} : vector<96x8xf32> to vector<8x8xf32>
    %74 = arith.subf %73, %47 : vector<8x8xf32>
    %cst_23 = arith.constant 8.000000e+00 : f32
    %75 = vector.broadcast %cst_23 : f32 to vector<8x8xf32>
    %76 = arith.divf %74, %75 : vector<8x8xf32>
    %cst_24 = arith.constant dense<0.000000e+00> : vector<8x128xf32>
    %77 = tpu.matmul %76, %45, %cst_24 {dimension_numbers = #tpu.dot_dimension_numbers<[0], [0], [1], [1], [0, 1, 1, 1], [], []>} : vector<8x8xf32>, vector<8x128xf32>, vector<8x128xf32> -> vector<8x128xf32>
    %cst_25 = arith.constant dense<0.000000e+00> : vector<8xf32>
    %78 = vector.multi_reduction <add>, %76, %cst_25 [0] : vector<8x8xf32> to vector<8xf32>
    %79 = vector.shape_cast %78 : vector<8xf32> to vector<1x8xf32>
    %cst_26 = arith.constant 4.000000e-01 : f32
    %80 = vector.broadcast %cst_26 : f32 to vector<8x128xf32>
    %81 = arith.mulf %80, %77 : vector<8x128xf32>
    %82 = arith.subf %4, %81 : vector<8x128xf32>
    %cst_27 = arith.constant 4.000000e-01 : f32
    %83 = vector.broadcast %cst_27 : f32 to vector<1x8xf32>
    %84 = arith.mulf %83, %79 : vector<1x8xf32>
    %85 = arith.subf %5, %84 : vector<1x8xf32>
    %cst_28 = arith.constant dense<0.000000e+00> : vector<16x8xf32>
    %86 = tpu.matmul %46, %82, %cst_28 {dimension_numbers = #tpu.dot_dimension_numbers<[1], [1], [0], [0], [0, 0, 1, 0], [], []>} : vector<16x128xf32>, vector<8x128xf32>, vector<16x8xf32> -> vector<16x8xf32>
    %87 = vector.broadcast %85 : vector<1x8xf32> to vector<16x8xf32>
    %88 = arith.addf %86, %87 : vector<16x8xf32>
    %cst_29 = arith.constant dense<0xFF800000> : vector<16xf32>
    %89 = vector.multi_reduction <maximumf>, %88, %cst_29 [1] : vector<16x8xf32> to vector<16xf32>
    %90 = vector.shape_cast %89 : vector<16xf32> to vector<16x1xf32>
    %91 = vector.broadcast %90 : vector<16x1xf32> to vector<16x8xf32>
    %92 = arith.subf %88, %91 : vector<16x8xf32>
    %93 = math.exp %92 : vector<16x8xf32>
    %cst_30 = arith.constant dense<0.000000e+00> : vector<16xf32>
    %94 = vector.multi_reduction <add>, %93, %cst_30 [1] : vector<16x8xf32> to vector<16xf32>
    %95 = vector.shape_cast %94 : vector<16xf32> to vector<16x1xf32>
    %96 = math.log %95 : vector<16x1xf32>
    %97 = arith.addf %90, %96 : vector<16x1xf32>
    %98 = arith.mulf %88, %48 : vector<16x8xf32>
    %cst_31 = arith.constant dense<0.000000e+00> : vector<16xf32>
    %99 = vector.multi_reduction <add>, %98, %cst_31 [1] : vector<16x8xf32> to vector<16xf32>
    %100 = vector.shape_cast %99 : vector<16xf32> to vector<16x1xf32>
    %101 = arith.subf %97, %100 : vector<16x1xf32>
    %102 = vector.shape_cast %101 : vector<16x1xf32> to vector<1x16x1xf32>
    %cst_32 = arith.constant dense<0.000000e+00> : vector<1xf32>
    %103 = vector.multi_reduction <add>, %102, %cst_32 [1, 2] : vector<1x16x1xf32> to vector<1xf32>
    %104 = vector.shape_cast %103 : vector<1xf32> to vector<1x1x1xf32>
    %105 = vector.extract %104[0, 0, 0] : f32 from vector<1x1x1xf32>
    %cst_33 = arith.constant 1.600000e+01 : f32
    %106 = arith.divf %105, %cst_33 : f32
    %107 = tpu.iota {dimensions = array<i32: 1>} : vector<16x8xi32>
    %108 = vector.broadcast %90 : vector<16x1xf32> to vector<16x8xf32>
    %109 = arith.cmpf oge, %88, %108 : vector<16x8xf32>
    %c8_i32_34 = arith.constant 8 : i32
    %110 = vector.broadcast %c8_i32_34 : i32 to vector<16x8xi32>
    %111 = arith.select %109, %107, %110 : vector<16x8xi1>, vector<16x8xi32>
    %cst_35 = arith.constant dense<2147483647> : vector<16xi32>
    %112 = vector.multi_reduction <minsi>, %111, %cst_35 [1] : vector<16x8xi32> to vector<16xi32>
    %113 = vector.shape_cast %112 : vector<16xi32> to vector<16x1xi32>
    %114 = vector.broadcast %113 : vector<16x1xi32> to vector<16x8xi32>
    %115 = arith.cmpi eq, %107, %114 : vector<16x8xi32>
    %cst_36 = arith.constant 0.000000e+00 : f32
    %116 = vector.broadcast %cst_36 : f32 to vector<16x8xf32>
    %117 = arith.select %115, %48, %116 : vector<16x8xi1>, vector<16x8xf32>
    %118 = vector.shape_cast %117 : vector<16x8xf32> to vector<1x16x8xf32>
    %cst_37 = arith.constant dense<0.000000e+00> : vector<1xf32>
    %119 = vector.multi_reduction <add>, %118, %cst_37 [1, 2] : vector<1x16x8xf32> to vector<1xf32>
    %120 = vector.shape_cast %119 : vector<1xf32> to vector<1x1x1xf32>
    %121 = vector.extract %120[0, 0, 0] : f32 from vector<1x1x1xf32>
    %c0_i32_38 = arith.constant 0 : i32
    %122 = vector.broadcast %c0_i32_38 : i32 to vector<4x4xi32>
    %123 = arith.cmpi eq, %41, %122 : vector<4x4xi32>
    %c1_i32 = arith.constant 1 : i32
    %124 = vector.broadcast %c1_i32 : i32 to vector<4x4xi32>
    %125 = arith.cmpi eq, %42, %124 : vector<4x4xi32>
    %126 = arith.andi %123, %125 : vector<4x4xi1>
    %cst_39 = arith.constant 0.000000e+00 : f32
    %127 = vector.broadcast %121 : f32 to vector<4x4xf32>
    %128 = vector.broadcast %cst_39 : f32 to vector<4x4xf32>
    %129 = arith.select %126, %127, %128 : vector<4x4xi1>, vector<4x4xf32>
    %130 = arith.addf %68, %129 : vector<4x4xf32>
    %cst_40 = arith.constant 0.000000e+00 : f32
    %131 = vector.broadcast %106 : f32 to vector<4x4xf32>
    %132 = vector.broadcast %cst_40 : f32 to vector<4x4xf32>
    %133 = arith.select %126, %131, %132 : vector<4x4xi1>, vector<4x4xf32>
    %134 = arith.addf %72, %133 : vector<4x4xf32>
    %cst_41 = arith.constant dense<0.000000e+00> : vector<8x8xf32>
    %135 = tpu.matmul %45, %82, %cst_41 {dimension_numbers = #tpu.dot_dimension_numbers<[1], [1], [0], [0], [0, 0, 1, 0], [], []>} : vector<8x128xf32>, vector<8x128xf32>, vector<8x8xf32> -> vector<8x8xf32>
    %136 = vector.broadcast %85 : vector<1x8xf32> to vector<8x8xf32>
    %137 = arith.addf %135, %136 : vector<8x8xf32>
    %cst_42 = arith.constant dense<0xFF800000> : vector<8xf32>
    %138 = vector.multi_reduction <maximumf>, %137, %cst_42 [1] : vector<8x8xf32> to vector<8xf32>
    %139 = vector.shape_cast %138 : vector<8xf32> to vector<8x1xf32>
    %140 = vector.broadcast %139 : vector<8x1xf32> to vector<8x8xf32>
    %141 = arith.subf %137, %140 : vector<8x8xf32>
    %142 = math.exp %141 : vector<8x8xf32>
    %cst_43 = arith.constant dense<0.000000e+00> : vector<8xf32>
    %143 = vector.multi_reduction <add>, %142, %cst_43 [1] : vector<8x8xf32> to vector<8xf32>
    %144 = vector.shape_cast %143 : vector<8xf32> to vector<8x1xf32>
    %145 = vector.broadcast %144 : vector<8x1xf32> to vector<8x8xf32>
    %146 = arith.divf %142, %145 : vector<8x8xf32>
    %147 = arith.subf %146, %47 : vector<8x8xf32>
    %cst_44 = arith.constant 8.000000e+00 : f32
    %148 = vector.broadcast %cst_44 : f32 to vector<8x8xf32>
    %149 = arith.divf %147, %148 : vector<8x8xf32>
    %cst_45 = arith.constant dense<0.000000e+00> : vector<8x128xf32>
    %150 = tpu.matmul %149, %45, %cst_45 {dimension_numbers = #tpu.dot_dimension_numbers<[0], [0], [1], [1], [0, 1, 1, 1], [], []>} : vector<8x8xf32>, vector<8x128xf32>, vector<8x128xf32> -> vector<8x128xf32>
    %cst_46 = arith.constant dense<0.000000e+00> : vector<8xf32>
    %151 = vector.multi_reduction <add>, %149, %cst_46 [0] : vector<8x8xf32> to vector<8xf32>
    %152 = vector.shape_cast %151 : vector<8xf32> to vector<1x8xf32>
    %cst_47 = arith.constant 4.000000e-01 : f32
    %153 = vector.broadcast %cst_47 : f32 to vector<8x128xf32>
    %154 = arith.mulf %153, %150 : vector<8x128xf32>
    %155 = arith.subf %82, %154 : vector<8x128xf32>
    %cst_48 = arith.constant 4.000000e-01 : f32
    %156 = vector.broadcast %cst_48 : f32 to vector<1x8xf32>
    %157 = arith.mulf %156, %152 : vector<1x8xf32>
    %158 = arith.subf %85, %157 : vector<1x8xf32>
    %cst_49 = arith.constant dense<0.000000e+00> : vector<16x8xf32>
    %159 = tpu.matmul %46, %155, %cst_49 {dimension_numbers = #tpu.dot_dimension_numbers<[1], [1], [0], [0], [0, 0, 1, 0], [], []>} : vector<16x128xf32>, vector<8x128xf32>, vector<16x8xf32> -> vector<16x8xf32>
    %160 = vector.broadcast %158 : vector<1x8xf32> to vector<16x8xf32>
    %161 = arith.addf %159, %160 : vector<16x8xf32>
    %cst_50 = arith.constant dense<0xFF800000> : vector<16xf32>
    %162 = vector.multi_reduction <maximumf>, %161, %cst_50 [1] : vector<16x8xf32> to vector<16xf32>
    %163 = vector.shape_cast %162 : vector<16xf32> to vector<16x1xf32>
    %164 = vector.broadcast %163 : vector<16x1xf32> to vector<16x8xf32>
    %165 = arith.subf %161, %164 : vector<16x8xf32>
    %166 = math.exp %165 : vector<16x8xf32>
    %cst_51 = arith.constant dense<0.000000e+00> : vector<16xf32>
    %167 = vector.multi_reduction <add>, %166, %cst_51 [1] : vector<16x8xf32> to vector<16xf32>
    %168 = vector.shape_cast %167 : vector<16xf32> to vector<16x1xf32>
    %169 = math.log %168 : vector<16x1xf32>
    %170 = arith.addf %163, %169 : vector<16x1xf32>
    %171 = arith.mulf %161, %48 : vector<16x8xf32>
    %cst_52 = arith.constant dense<0.000000e+00> : vector<16xf32>
    %172 = vector.multi_reduction <add>, %171, %cst_52 [1] : vector<16x8xf32> to vector<16xf32>
    %173 = vector.shape_cast %172 : vector<16xf32> to vector<16x1xf32>
    %174 = arith.subf %170, %173 : vector<16x1xf32>
    %175 = vector.shape_cast %174 : vector<16x1xf32> to vector<1x16x1xf32>
    %cst_53 = arith.constant dense<0.000000e+00> : vector<1xf32>
    %176 = vector.multi_reduction <add>, %175, %cst_53 [1, 2] : vector<1x16x1xf32> to vector<1xf32>
    %177 = vector.shape_cast %176 : vector<1xf32> to vector<1x1x1xf32>
    %178 = vector.extract %177[0, 0, 0] : f32 from vector<1x1x1xf32>
    %cst_54 = arith.constant 1.600000e+01 : f32
    %179 = arith.divf %178, %cst_54 : f32
    %180 = tpu.iota {dimensions = array<i32: 1>} : vector<16x8xi32>
    %181 = vector.broadcast %163 : vector<16x1xf32> to vector<16x8xf32>
    %182 = arith.cmpf oge, %161, %181 : vector<16x8xf32>
    %c8_i32_55 = arith.constant 8 : i32
    %183 = vector.broadcast %c8_i32_55 : i32 to vector<16x8xi32>
    %184 = arith.select %182, %180, %183 : vector<16x8xi1>, vector<16x8xi32>
    %cst_56 = arith.constant dense<2147483647> : vector<16xi32>
    %185 = vector.multi_reduction <minsi>, %184, %cst_56 [1] : vector<16x8xi32> to vector<16xi32>
    %186 = vector.shape_cast %185 : vector<16xi32> to vector<16x1xi32>
    %187 = vector.broadcast %186 : vector<16x1xi32> to vector<16x8xi32>
    %188 = arith.cmpi eq, %180, %187 : vector<16x8xi32>
    %cst_57 = arith.constant 0.000000e+00 : f32
    %189 = vector.broadcast %cst_57 : f32 to vector<16x8xf32>
    %190 = arith.select %188, %48, %189 : vector<16x8xi1>, vector<16x8xf32>
    %191 = vector.shape_cast %190 : vector<16x8xf32> to vector<1x16x8xf32>
    %cst_58 = arith.constant dense<0.000000e+00> : vector<1xf32>
    %192 = vector.multi_reduction <add>, %191, %cst_58 [1, 2] : vector<1x16x8xf32> to vector<1xf32>
    %193 = vector.shape_cast %192 : vector<1xf32> to vector<1x1x1xf32>
    %194 = vector.extract %193[0, 0, 0] : f32 from vector<1x1x1xf32>
    %c0_i32_59 = arith.constant 0 : i32
    %195 = vector.broadcast %c0_i32_59 : i32 to vector<4x4xi32>
    %196 = arith.cmpi eq, %41, %195 : vector<4x4xi32>
    %c2_i32 = arith.constant 2 : i32
    %197 = vector.broadcast %c2_i32 : i32 to vector<4x4xi32>
    %198 = arith.cmpi eq, %42, %197 : vector<4x4xi32>
    %199 = arith.andi %196, %198 : vector<4x4xi1>
    %cst_60 = arith.constant 0.000000e+00 : f32
    %200 = vector.broadcast %194 : f32 to vector<4x4xf32>
    %201 = vector.broadcast %cst_60 : f32 to vector<4x4xf32>
    %202 = arith.select %199, %200, %201 : vector<4x4xi1>, vector<4x4xf32>
    %203 = arith.addf %130, %202 : vector<4x4xf32>
    %cst_61 = arith.constant 0.000000e+00 : f32
    %204 = vector.broadcast %179 : f32 to vector<4x4xf32>
    %205 = vector.broadcast %cst_61 : f32 to vector<4x4xf32>
    %206 = arith.select %199, %204, %205 : vector<4x4xi1>, vector<4x4xf32>
    %207 = arith.addf %134, %206 : vector<4x4xf32>
    %cst_62 = arith.constant dense<0.000000e+00> : vector<8x8xf32>
    %208 = tpu.matmul %45, %155, %cst_62 {dimension_numbers = #tpu.dot_dimension_numbers<[1], [1], [0], [0], [0, 0, 1, 0], [], []>} : vector<8x128xf32>, vector<8x128xf32>, vector<8x8xf32> -> vector<8x8xf32>
    %209 = vector.broadcast %158 : vector<1x8xf32> to vector<8x8xf32>
    %210 = arith.addf %208, %209 : vector<8x8xf32>
    %cst_63 = arith.constant dense<0xFF800000> : vector<8xf32>
    %211 = vector.multi_reduction <maximumf>, %210, %cst_63 [1] : vector<8x8xf32> to vector<8xf32>
    %212 = vector.shape_cast %211 : vector<8xf32> to vector<8x1xf32>
    %213 = vector.broadcast %212 : vector<8x1xf32> to vector<8x8xf32>
    %214 = arith.subf %210, %213 : vector<8x8xf32>
    %215 = math.exp %214 : vector<8x8xf32>
    %cst_64 = arith.constant dense<0.000000e+00> : vector<8xf32>
    %216 = vector.multi_reduction <add>, %215, %cst_64 [1] : vector<8x8xf32> to vector<8xf32>
    %217 = vector.shape_cast %216 : vector<8xf32> to vector<8x1xf32>
    %218 = vector.broadcast %217 : vector<8x1xf32> to vector<8x8xf32>
    %219 = arith.divf %215, %218 : vector<8x8xf32>
    %220 = arith.subf %219, %47 : vector<8x8xf32>
    %cst_65 = arith.constant 8.000000e+00 : f32
    %221 = vector.broadcast %cst_65 : f32 to vector<8x8xf32>
    %222 = arith.divf %220, %221 : vector<8x8xf32>
    %cst_66 = arith.constant dense<0.000000e+00> : vector<8x128xf32>
    %223 = tpu.matmul %222, %45, %cst_66 {dimension_numbers = #tpu.dot_dimension_numbers<[0], [0], [1], [1], [0, 1, 1, 1], [], []>} : vector<8x8xf32>, vector<8x128xf32>, vector<8x128xf32> -> vector<8x128xf32>
    %cst_67 = arith.constant dense<0.000000e+00> : vector<8xf32>
    %224 = vector.multi_reduction <add>, %222, %cst_67 [0] : vector<8x8xf32> to vector<8xf32>
    %225 = vector.shape_cast %224 : vector<8xf32> to vector<1x8xf32>
    %cst_68 = arith.constant 4.000000e-01 : f32
    %226 = vector.broadcast %cst_68 : f32 to vector<8x128xf32>
    %227 = arith.mulf %226, %223 : vector<8x128xf32>
    %228 = arith.subf %155, %227 : vector<8x128xf32>
    %cst_69 = arith.constant 4.000000e-01 : f32
    %229 = vector.broadcast %cst_69 : f32 to vector<1x8xf32>
    %230 = arith.mulf %229, %225 : vector<1x8xf32>
    %231 = arith.subf %158, %230 : vector<1x8xf32>
    %cst_70 = arith.constant dense<0.000000e+00> : vector<16x8xf32>
    %232 = tpu.matmul %46, %228, %cst_70 {dimension_numbers = #tpu.dot_dimension_numbers<[1], [1], [0], [0], [0, 0, 1, 0], [], []>} : vector<16x128xf32>, vector<8x128xf32>, vector<16x8xf32> -> vector<16x8xf32>
    %233 = vector.broadcast %231 : vector<1x8xf32> to vector<16x8xf32>
    %234 = arith.addf %232, %233 : vector<16x8xf32>
    %cst_71 = arith.constant dense<0xFF800000> : vector<16xf32>
    %235 = vector.multi_reduction <maximumf>, %234, %cst_71 [1] : vector<16x8xf32> to vector<16xf32>
    %236 = vector.shape_cast %235 : vector<16xf32> to vector<16x1xf32>
    %237 = vector.broadcast %236 : vector<16x1xf32> to vector<16x8xf32>
    %238 = arith.subf %234, %237 : vector<16x8xf32>
    %239 = math.exp %238 : vector<16x8xf32>
    %cst_72 = arith.constant dense<0.000000e+00> : vector<16xf32>
    %240 = vector.multi_reduction <add>, %239, %cst_72 [1] : vector<16x8xf32> to vector<16xf32>
    %241 = vector.shape_cast %240 : vector<16xf32> to vector<16x1xf32>
    %242 = math.log %241 : vector<16x1xf32>
    %243 = arith.addf %236, %242 : vector<16x1xf32>
    %244 = arith.mulf %234, %48 : vector<16x8xf32>
    %cst_73 = arith.constant dense<0.000000e+00> : vector<16xf32>
    %245 = vector.multi_reduction <add>, %244, %cst_73 [1] : vector<16x8xf32> to vector<16xf32>
    %246 = vector.shape_cast %245 : vector<16xf32> to vector<16x1xf32>
    %247 = arith.subf %243, %246 : vector<16x1xf32>
    %248 = vector.shape_cast %247 : vector<16x1xf32> to vector<1x16x1xf32>
    %cst_74 = arith.constant dense<0.000000e+00> : vector<1xf32>
    %249 = vector.multi_reduction <add>, %248, %cst_74 [1, 2] : vector<1x16x1xf32> to vector<1xf32>
    %250 = vector.shape_cast %249 : vector<1xf32> to vector<1x1x1xf32>
    %251 = vector.extract %250[0, 0, 0] : f32 from vector<1x1x1xf32>
    %cst_75 = arith.constant 1.600000e+01 : f32
    %252 = arith.divf %251, %cst_75 : f32
    %253 = tpu.iota {dimensions = array<i32: 1>} : vector<16x8xi32>
    %254 = vector.broadcast %236 : vector<16x1xf32> to vector<16x8xf32>
    %255 = arith.cmpf oge, %234, %254 : vector<16x8xf32>
    %c8_i32_76 = arith.constant 8 : i32
    %256 = vector.broadcast %c8_i32_76 : i32 to vector<16x8xi32>
    %257 = arith.select %255, %253, %256 : vector<16x8xi1>, vector<16x8xi32>
    %cst_77 = arith.constant dense<2147483647> : vector<16xi32>
    %258 = vector.multi_reduction <minsi>, %257, %cst_77 [1] : vector<16x8xi32> to vector<16xi32>
    %259 = vector.shape_cast %258 : vector<16xi32> to vector<16x1xi32>
    %260 = vector.broadcast %259 : vector<16x1xi32> to vector<16x8xi32>
    %261 = arith.cmpi eq, %253, %260 : vector<16x8xi32>
    %cst_78 = arith.constant 0.000000e+00 : f32
    %262 = vector.broadcast %cst_78 : f32 to vector<16x8xf32>
    %263 = arith.select %261, %48, %262 : vector<16x8xi1>, vector<16x8xf32>
    %264 = vector.shape_cast %263 : vector<16x8xf32> to vector<1x16x8xf32>
    %cst_79 = arith.constant dense<0.000000e+00> : vector<1xf32>
    %265 = vector.multi_reduction <add>, %264, %cst_79 [1, 2] : vector<1x16x8xf32> to vector<1xf32>
    %266 = vector.shape_cast %265 : vector<1xf32> to vector<1x1x1xf32>
    %267 = vector.extract %266[0, 0, 0] : f32 from vector<1x1x1xf32>
    %c0_i32_80 = arith.constant 0 : i32
    %268 = vector.broadcast %c0_i32_80 : i32 to vector<4x4xi32>
    %269 = arith.cmpi eq, %41, %268 : vector<4x4xi32>
    %c3_i32 = arith.constant 3 : i32
    %270 = vector.broadcast %c3_i32 : i32 to vector<4x4xi32>
    %271 = arith.cmpi eq, %42, %270 : vector<4x4xi32>
    %272 = arith.andi %269, %271 : vector<4x4xi1>
    %cst_81 = arith.constant 0.000000e+00 : f32
    %273 = vector.broadcast %267 : f32 to vector<4x4xf32>
    %274 = vector.broadcast %cst_81 : f32 to vector<4x4xf32>
    %275 = arith.select %272, %273, %274 : vector<4x4xi1>, vector<4x4xf32>
    %276 = arith.addf %203, %275 : vector<4x4xf32>
    %cst_82 = arith.constant 0.000000e+00 : f32
    %277 = vector.broadcast %252 : f32 to vector<4x4xf32>
    %278 = vector.broadcast %cst_82 : f32 to vector<4x4xf32>
    %279 = arith.select %272, %277, %278 : vector<4x4xi1>, vector<4x4xf32>
    %280 = arith.addf %207, %279 : vector<4x4xf32>
    %281 = vector.extract_strided_slice %1 {offsets = [24, 0], sizes = [8, 128], strides = [1, 1]} : vector<96x128xf32> to vector<8x128xf32>
    %282 = vector.extract_strided_slice %1 {offsets = [32, 0], sizes = [16, 128], strides = [1, 1]} : vector<96x128xf32> to vector<16x128xf32>
    %283 = vector.extract_strided_slice %10 {offsets = [24, 0], sizes = [8, 8], strides = [1, 1]} : vector<96x8xf32> to vector<8x8xf32>
    %284 = vector.extract_strided_slice %10 {offsets = [32, 0], sizes = [16, 8], strides = [1, 1]} : vector<96x8xf32> to vector<16x8xf32>
    %285 = vector.extract_strided_slice %40 {offsets = [32, 0], sizes = [16, 1], strides = [1, 1]} : vector<96x1xf32> to vector<16x1xf32>
    %286 = vector.shape_cast %285 : vector<16x1xf32> to vector<1x16x1xf32>
    %cst_83 = arith.constant dense<0.000000e+00> : vector<1xf32>
    %287 = vector.multi_reduction <add>, %286, %cst_83 [1, 2] : vector<1x16x1xf32> to vector<1xf32>
    %288 = vector.shape_cast %287 : vector<1xf32> to vector<1x1x1xf32>
    %289 = vector.extract %288[0, 0, 0] : f32 from vector<1x1x1xf32>
    %290 = vector.extract_strided_slice %28 {offsets = [32, 0], sizes = [16, 1], strides = [1, 1]} : vector<96x1xf32> to vector<16x1xf32>
    %291 = vector.shape_cast %290 : vector<16x1xf32> to vector<1x16x1xf32>
    %cst_84 = arith.constant dense<0.000000e+00> : vector<1xf32>
    %292 = vector.multi_reduction <add>, %291, %cst_84 [1, 2] : vector<1x16x1xf32> to vector<1xf32>
    %293 = vector.shape_cast %292 : vector<1xf32> to vector<1x1x1xf32>
    %294 = vector.extract %293[0, 0, 0] : f32 from vector<1x1x1xf32>
    %cst_85 = arith.constant 1.600000e+01 : f32
    %295 = arith.divf %294, %cst_85 : f32
    %c1_i32_86 = arith.constant 1 : i32
    %296 = vector.broadcast %c1_i32_86 : i32 to vector<4x4xi32>
    %297 = arith.cmpi eq, %41, %296 : vector<4x4xi32>
    %c0_i32_87 = arith.constant 0 : i32
    %298 = vector.broadcast %c0_i32_87 : i32 to vector<4x4xi32>
    %299 = arith.cmpi eq, %42, %298 : vector<4x4xi32>
    %300 = arith.andi %297, %299 : vector<4x4xi1>
    %cst_88 = arith.constant 0.000000e+00 : f32
    %301 = vector.broadcast %289 : f32 to vector<4x4xf32>
    %302 = vector.broadcast %cst_88 : f32 to vector<4x4xf32>
    %303 = arith.select %300, %301, %302 : vector<4x4xi1>, vector<4x4xf32>
    %304 = arith.addf %276, %303 : vector<4x4xf32>
    %cst_89 = arith.constant 0.000000e+00 : f32
    %305 = vector.broadcast %295 : f32 to vector<4x4xf32>
    %306 = vector.broadcast %cst_89 : f32 to vector<4x4xf32>
    %307 = arith.select %300, %305, %306 : vector<4x4xi1>, vector<4x4xf32>
    %308 = arith.addf %280, %307 : vector<4x4xf32>
    %309 = vector.extract_strided_slice %22 {offsets = [24, 0], sizes = [8, 8], strides = [1, 1]} : vector<96x8xf32> to vector<8x8xf32>
    %310 = arith.subf %309, %283 : vector<8x8xf32>
    %cst_90 = arith.constant 8.000000e+00 : f32
    %311 = vector.broadcast %cst_90 : f32 to vector<8x8xf32>
    %312 = arith.divf %310, %311 : vector<8x8xf32>
    %cst_91 = arith.constant dense<0.000000e+00> : vector<8x128xf32>
    %313 = tpu.matmul %312, %281, %cst_91 {dimension_numbers = #tpu.dot_dimension_numbers<[0], [0], [1], [1], [0, 1, 1, 1], [], []>} : vector<8x8xf32>, vector<8x128xf32>, vector<8x128xf32> -> vector<8x128xf32>
    %cst_92 = arith.constant dense<0.000000e+00> : vector<8xf32>
    %314 = vector.multi_reduction <add>, %312, %cst_92 [0] : vector<8x8xf32> to vector<8xf32>
    %315 = vector.shape_cast %314 : vector<8xf32> to vector<1x8xf32>
    %cst_93 = arith.constant 4.000000e-01 : f32
    %316 = vector.broadcast %cst_93 : f32 to vector<8x128xf32>
    %317 = arith.mulf %316, %313 : vector<8x128xf32>
    %318 = arith.subf %4, %317 : vector<8x128xf32>
    %cst_94 = arith.constant 4.000000e-01 : f32
    %319 = vector.broadcast %cst_94 : f32 to vector<1x8xf32>
    %320 = arith.mulf %319, %315 : vector<1x8xf32>
    %321 = arith.subf %5, %320 : vector<1x8xf32>
    %cst_95 = arith.constant dense<0.000000e+00> : vector<16x8xf32>
    %322 = tpu.matmul %282, %318, %cst_95 {dimension_numbers = #tpu.dot_dimension_numbers<[1], [1], [0], [0], [0, 0, 1, 0], [], []>} : vector<16x128xf32>, vector<8x128xf32>, vector<16x8xf32> -> vector<16x8xf32>
    %323 = vector.broadcast %321 : vector<1x8xf32> to vector<16x8xf32>
    %324 = arith.addf %322, %323 : vector<16x8xf32>
    %cst_96 = arith.constant dense<0xFF800000> : vector<16xf32>
    %325 = vector.multi_reduction <maximumf>, %324, %cst_96 [1] : vector<16x8xf32> to vector<16xf32>
    %326 = vector.shape_cast %325 : vector<16xf32> to vector<16x1xf32>
    %327 = vector.broadcast %326 : vector<16x1xf32> to vector<16x8xf32>
    %328 = arith.subf %324, %327 : vector<16x8xf32>
    %329 = math.exp %328 : vector<16x8xf32>
    %cst_97 = arith.constant dense<0.000000e+00> : vector<16xf32>
    %330 = vector.multi_reduction <add>, %329, %cst_97 [1] : vector<16x8xf32> to vector<16xf32>
    %331 = vector.shape_cast %330 : vector<16xf32> to vector<16x1xf32>
    %332 = math.log %331 : vector<16x1xf32>
    %333 = arith.addf %326, %332 : vector<16x1xf32>
    %334 = arith.mulf %324, %284 : vector<16x8xf32>
    %cst_98 = arith.constant dense<0.000000e+00> : vector<16xf32>
    %335 = vector.multi_reduction <add>, %334, %cst_98 [1] : vector<16x8xf32> to vector<16xf32>
    %336 = vector.shape_cast %335 : vector<16xf32> to vector<16x1xf32>
    %337 = arith.subf %333, %336 : vector<16x1xf32>
    %338 = vector.shape_cast %337 : vector<16x1xf32> to vector<1x16x1xf32>
    %cst_99 = arith.constant dense<0.000000e+00> : vector<1xf32>
    %339 = vector.multi_reduction <add>, %338, %cst_99 [1, 2] : vector<1x16x1xf32> to vector<1xf32>
    %340 = vector.shape_cast %339 : vector<1xf32> to vector<1x1x1xf32>
    %341 = vector.extract %340[0, 0, 0] : f32 from vector<1x1x1xf32>
    %cst_100 = arith.constant 1.600000e+01 : f32
    %342 = arith.divf %341, %cst_100 : f32
    %343 = tpu.iota {dimensions = array<i32: 1>} : vector<16x8xi32>
    %344 = vector.broadcast %326 : vector<16x1xf32> to vector<16x8xf32>
    %345 = arith.cmpf oge, %324, %344 : vector<16x8xf32>
    %c8_i32_101 = arith.constant 8 : i32
    %346 = vector.broadcast %c8_i32_101 : i32 to vector<16x8xi32>
    %347 = arith.select %345, %343, %346 : vector<16x8xi1>, vector<16x8xi32>
    %cst_102 = arith.constant dense<2147483647> : vector<16xi32>
    %348 = vector.multi_reduction <minsi>, %347, %cst_102 [1] : vector<16x8xi32> to vector<16xi32>
    %349 = vector.shape_cast %348 : vector<16xi32> to vector<16x1xi32>
    %350 = vector.broadcast %349 : vector<16x1xi32> to vector<16x8xi32>
    %351 = arith.cmpi eq, %343, %350 : vector<16x8xi32>
    %cst_103 = arith.constant 0.000000e+00 : f32
    %352 = vector.broadcast %cst_103 : f32 to vector<16x8xf32>
    %353 = arith.select %351, %284, %352 : vector<16x8xi1>, vector<16x8xf32>
    %354 = vector.shape_cast %353 : vector<16x8xf32> to vector<1x16x8xf32>
    %cst_104 = arith.constant dense<0.000000e+00> : vector<1xf32>
    %355 = vector.multi_reduction <add>, %354, %cst_104 [1, 2] : vector<1x16x8xf32> to vector<1xf32>
    %356 = vector.shape_cast %355 : vector<1xf32> to vector<1x1x1xf32>
    %357 = vector.extract %356[0, 0, 0] : f32 from vector<1x1x1xf32>
    %c1_i32_105 = arith.constant 1 : i32
    %358 = vector.broadcast %c1_i32_105 : i32 to vector<4x4xi32>
    %359 = arith.cmpi eq, %41, %358 : vector<4x4xi32>
    %c1_i32_106 = arith.constant 1 : i32
    %360 = vector.broadcast %c1_i32_106 : i32 to vector<4x4xi32>
    %361 = arith.cmpi eq, %42, %360 : vector<4x4xi32>
    %362 = arith.andi %359, %361 : vector<4x4xi1>
    %cst_107 = arith.constant 0.000000e+00 : f32
    %363 = vector.broadcast %357 : f32 to vector<4x4xf32>
    %364 = vector.broadcast %cst_107 : f32 to vector<4x4xf32>
    %365 = arith.select %362, %363, %364 : vector<4x4xi1>, vector<4x4xf32>
    %366 = arith.addf %304, %365 : vector<4x4xf32>
    %cst_108 = arith.constant 0.000000e+00 : f32
    %367 = vector.broadcast %342 : f32 to vector<4x4xf32>
    %368 = vector.broadcast %cst_108 : f32 to vector<4x4xf32>
    %369 = arith.select %362, %367, %368 : vector<4x4xi1>, vector<4x4xf32>
    %370 = arith.addf %308, %369 : vector<4x4xf32>
    %cst_109 = arith.constant dense<0.000000e+00> : vector<8x8xf32>
    %371 = tpu.matmul %281, %318, %cst_109 {dimension_numbers = #tpu.dot_dimension_numbers<[1], [1], [0], [0], [0, 0, 1, 0], [], []>} : vector<8x128xf32>, vector<8x128xf32>, vector<8x8xf32> -> vector<8x8xf32>
    %372 = vector.broadcast %321 : vector<1x8xf32> to vector<8x8xf32>
    %373 = arith.addf %371, %372 : vector<8x8xf32>
    %cst_110 = arith.constant dense<0xFF800000> : vector<8xf32>
    %374 = vector.multi_reduction <maximumf>, %373, %cst_110 [1] : vector<8x8xf32> to vector<8xf32>
    %375 = vector.shape_cast %374 : vector<8xf32> to vector<8x1xf32>
    %376 = vector.broadcast %375 : vector<8x1xf32> to vector<8x8xf32>
    %377 = arith.subf %373, %376 : vector<8x8xf32>
    %378 = math.exp %377 : vector<8x8xf32>
    %cst_111 = arith.constant dense<0.000000e+00> : vector<8xf32>
    %379 = vector.multi_reduction <add>, %378, %cst_111 [1] : vector<8x8xf32> to vector<8xf32>
    %380 = vector.shape_cast %379 : vector<8xf32> to vector<8x1xf32>
    %381 = vector.broadcast %380 : vector<8x1xf32> to vector<8x8xf32>
    %382 = arith.divf %378, %381 : vector<8x8xf32>
    %383 = arith.subf %382, %283 : vector<8x8xf32>
    %cst_112 = arith.constant 8.000000e+00 : f32
    %384 = vector.broadcast %cst_112 : f32 to vector<8x8xf32>
    %385 = arith.divf %383, %384 : vector<8x8xf32>
    %cst_113 = arith.constant dense<0.000000e+00> : vector<8x128xf32>
    %386 = tpu.matmul %385, %281, %cst_113 {dimension_numbers = #tpu.dot_dimension_numbers<[0], [0], [1], [1], [0, 1, 1, 1], [], []>} : vector<8x8xf32>, vector<8x128xf32>, vector<8x128xf32> -> vector<8x128xf32>
    %cst_114 = arith.constant dense<0.000000e+00> : vector<8xf32>
    %387 = vector.multi_reduction <add>, %385, %cst_114 [0] : vector<8x8xf32> to vector<8xf32>
    %388 = vector.shape_cast %387 : vector<8xf32> to vector<1x8xf32>
    %cst_115 = arith.constant 4.000000e-01 : f32
    %389 = vector.broadcast %cst_115 : f32 to vector<8x128xf32>
    %390 = arith.mulf %389, %386 : vector<8x128xf32>
    %391 = arith.subf %318, %390 : vector<8x128xf32>
    %cst_116 = arith.constant 4.000000e-01 : f32
    %392 = vector.broadcast %cst_116 : f32 to vector<1x8xf32>
    %393 = arith.mulf %392, %388 : vector<1x8xf32>
    %394 = arith.subf %321, %393 : vector<1x8xf32>
    %cst_117 = arith.constant dense<0.000000e+00> : vector<16x8xf32>
    %395 = tpu.matmul %282, %391, %cst_117 {dimension_numbers = #tpu.dot_dimension_numbers<[1], [1], [0], [0], [0, 0, 1, 0], [], []>} : vector<16x128xf32>, vector<8x128xf32>, vector<16x8xf32> -> vector<16x8xf32>
    %396 = vector.broadcast %394 : vector<1x8xf32> to vector<16x8xf32>
    %397 = arith.addf %395, %396 : vector<16x8xf32>
    %cst_118 = arith.constant dense<0xFF800000> : vector<16xf32>
    %398 = vector.multi_reduction <maximumf>, %397, %cst_118 [1] : vector<16x8xf32> to vector<16xf32>
    %399 = vector.shape_cast %398 : vector<16xf32> to vector<16x1xf32>
    %400 = vector.broadcast %399 : vector<16x1xf32> to vector<16x8xf32>
    %401 = arith.subf %397, %400 : vector<16x8xf32>
    %402 = math.exp %401 : vector<16x8xf32>
    %cst_119 = arith.constant dense<0.000000e+00> : vector<16xf32>
    %403 = vector.multi_reduction <add>, %402, %cst_119 [1] : vector<16x8xf32> to vector<16xf32>
    %404 = vector.shape_cast %403 : vector<16xf32> to vector<16x1xf32>
    %405 = math.log %404 : vector<16x1xf32>
    %406 = arith.addf %399, %405 : vector<16x1xf32>
    %407 = arith.mulf %397, %284 : vector<16x8xf32>
    %cst_120 = arith.constant dense<0.000000e+00> : vector<16xf32>
    %408 = vector.multi_reduction <add>, %407, %cst_120 [1] : vector<16x8xf32> to vector<16xf32>
    %409 = vector.shape_cast %408 : vector<16xf32> to vector<16x1xf32>
    %410 = arith.subf %406, %409 : vector<16x1xf32>
    %411 = vector.shape_cast %410 : vector<16x1xf32> to vector<1x16x1xf32>
    %cst_121 = arith.constant dense<0.000000e+00> : vector<1xf32>
    %412 = vector.multi_reduction <add>, %411, %cst_121 [1, 2] : vector<1x16x1xf32> to vector<1xf32>
    %413 = vector.shape_cast %412 : vector<1xf32> to vector<1x1x1xf32>
    %414 = vector.extract %413[0, 0, 0] : f32 from vector<1x1x1xf32>
    %cst_122 = arith.constant 1.600000e+01 : f32
    %415 = arith.divf %414, %cst_122 : f32
    %416 = tpu.iota {dimensions = array<i32: 1>} : vector<16x8xi32>
    %417 = vector.broadcast %399 : vector<16x1xf32> to vector<16x8xf32>
    %418 = arith.cmpf oge, %397, %417 : vector<16x8xf32>
    %c8_i32_123 = arith.constant 8 : i32
    %419 = vector.broadcast %c8_i32_123 : i32 to vector<16x8xi32>
    %420 = arith.select %418, %416, %419 : vector<16x8xi1>, vector<16x8xi32>
    %cst_124 = arith.constant dense<2147483647> : vector<16xi32>
    %421 = vector.multi_reduction <minsi>, %420, %cst_124 [1] : vector<16x8xi32> to vector<16xi32>
    %422 = vector.shape_cast %421 : vector<16xi32> to vector<16x1xi32>
    %423 = vector.broadcast %422 : vector<16x1xi32> to vector<16x8xi32>
    %424 = arith.cmpi eq, %416, %423 : vector<16x8xi32>
    %cst_125 = arith.constant 0.000000e+00 : f32
    %425 = vector.broadcast %cst_125 : f32 to vector<16x8xf32>
    %426 = arith.select %424, %284, %425 : vector<16x8xi1>, vector<16x8xf32>
    %427 = vector.shape_cast %426 : vector<16x8xf32> to vector<1x16x8xf32>
    %cst_126 = arith.constant dense<0.000000e+00> : vector<1xf32>
    %428 = vector.multi_reduction <add>, %427, %cst_126 [1, 2] : vector<1x16x8xf32> to vector<1xf32>
    %429 = vector.shape_cast %428 : vector<1xf32> to vector<1x1x1xf32>
    %430 = vector.extract %429[0, 0, 0] : f32 from vector<1x1x1xf32>
    %c1_i32_127 = arith.constant 1 : i32
    %431 = vector.broadcast %c1_i32_127 : i32 to vector<4x4xi32>
    %432 = arith.cmpi eq, %41, %431 : vector<4x4xi32>
    %c2_i32_128 = arith.constant 2 : i32
    %433 = vector.broadcast %c2_i32_128 : i32 to vector<4x4xi32>
    %434 = arith.cmpi eq, %42, %433 : vector<4x4xi32>
    %435 = arith.andi %432, %434 : vector<4x4xi1>
    %cst_129 = arith.constant 0.000000e+00 : f32
    %436 = vector.broadcast %430 : f32 to vector<4x4xf32>
    %437 = vector.broadcast %cst_129 : f32 to vector<4x4xf32>
    %438 = arith.select %435, %436, %437 : vector<4x4xi1>, vector<4x4xf32>
    %439 = arith.addf %366, %438 : vector<4x4xf32>
    %cst_130 = arith.constant 0.000000e+00 : f32
    %440 = vector.broadcast %415 : f32 to vector<4x4xf32>
    %441 = vector.broadcast %cst_130 : f32 to vector<4x4xf32>
    %442 = arith.select %435, %440, %441 : vector<4x4xi1>, vector<4x4xf32>
    %443 = arith.addf %370, %442 : vector<4x4xf32>
    %cst_131 = arith.constant dense<0.000000e+00> : vector<8x8xf32>
    %444 = tpu.matmul %281, %391, %cst_131 {dimension_numbers = #tpu.dot_dimension_numbers<[1], [1], [0], [0], [0, 0, 1, 0], [], []>} : vector<8x128xf32>, vector<8x128xf32>, vector<8x8xf32> -> vector<8x8xf32>
    %445 = vector.broadcast %394 : vector<1x8xf32> to vector<8x8xf32>
    %446 = arith.addf %444, %445 : vector<8x8xf32>
    %cst_132 = arith.constant dense<0xFF800000> : vector<8xf32>
    %447 = vector.multi_reduction <maximumf>, %446, %cst_132 [1] : vector<8x8xf32> to vector<8xf32>
    %448 = vector.shape_cast %447 : vector<8xf32> to vector<8x1xf32>
    %449 = vector.broadcast %448 : vector<8x1xf32> to vector<8x8xf32>
    %450 = arith.subf %446, %449 : vector<8x8xf32>
    %451 = math.exp %450 : vector<8x8xf32>
    %cst_133 = arith.constant dense<0.000000e+00> : vector<8xf32>
    %452 = vector.multi_reduction <add>, %451, %cst_133 [1] : vector<8x8xf32> to vector<8xf32>
    %453 = vector.shape_cast %452 : vector<8xf32> to vector<8x1xf32>
    %454 = vector.broadcast %453 : vector<8x1xf32> to vector<8x8xf32>
    %455 = arith.divf %451, %454 : vector<8x8xf32>
    %456 = arith.subf %455, %283 : vector<8x8xf32>
    %cst_134 = arith.constant 8.000000e+00 : f32
    %457 = vector.broadcast %cst_134 : f32 to vector<8x8xf32>
    %458 = arith.divf %456, %457 : vector<8x8xf32>
    %cst_135 = arith.constant dense<0.000000e+00> : vector<8x128xf32>
    %459 = tpu.matmul %458, %281, %cst_135 {dimension_numbers = #tpu.dot_dimension_numbers<[0], [0], [1], [1], [0, 1, 1, 1], [], []>} : vector<8x8xf32>, vector<8x128xf32>, vector<8x128xf32> -> vector<8x128xf32>
    %cst_136 = arith.constant dense<0.000000e+00> : vector<8xf32>
    %460 = vector.multi_reduction <add>, %458, %cst_136 [0] : vector<8x8xf32> to vector<8xf32>
    %461 = vector.shape_cast %460 : vector<8xf32> to vector<1x8xf32>
    %cst_137 = arith.constant 4.000000e-01 : f32
    %462 = vector.broadcast %cst_137 : f32 to vector<8x128xf32>
    %463 = arith.mulf %462, %459 : vector<8x128xf32>
    %464 = arith.subf %391, %463 : vector<8x128xf32>
    %cst_138 = arith.constant 4.000000e-01 : f32
    %465 = vector.broadcast %cst_138 : f32 to vector<1x8xf32>
    %466 = arith.mulf %465, %461 : vector<1x8xf32>
    %467 = arith.subf %394, %466 : vector<1x8xf32>
    %cst_139 = arith.constant dense<0.000000e+00> : vector<16x8xf32>
    %468 = tpu.matmul %282, %464, %cst_139 {dimension_numbers = #tpu.dot_dimension_numbers<[1], [1], [0], [0], [0, 0, 1, 0], [], []>} : vector<16x128xf32>, vector<8x128xf32>, vector<16x8xf32> -> vector<16x8xf32>
    %469 = vector.broadcast %467 : vector<1x8xf32> to vector<16x8xf32>
    %470 = arith.addf %468, %469 : vector<16x8xf32>
    %cst_140 = arith.constant dense<0xFF800000> : vector<16xf32>
    %471 = vector.multi_reduction <maximumf>, %470, %cst_140 [1] : vector<16x8xf32> to vector<16xf32>
    %472 = vector.shape_cast %471 : vector<16xf32> to vector<16x1xf32>
    %473 = vector.broadcast %472 : vector<16x1xf32> to vector<16x8xf32>
    %474 = arith.subf %470, %473 : vector<16x8xf32>
    %475 = math.exp %474 : vector<16x8xf32>
    %cst_141 = arith.constant dense<0.000000e+00> : vector<16xf32>
    %476 = vector.multi_reduction <add>, %475, %cst_141 [1] : vector<16x8xf32> to vector<16xf32>
    %477 = vector.shape_cast %476 : vector<16xf32> to vector<16x1xf32>
    %478 = math.log %477 : vector<16x1xf32>
    %479 = arith.addf %472, %478 : vector<16x1xf32>
    %480 = arith.mulf %470, %284 : vector<16x8xf32>
    %cst_142 = arith.constant dense<0.000000e+00> : vector<16xf32>
    %481 = vector.multi_reduction <add>, %480, %cst_142 [1] : vector<16x8xf32> to vector<16xf32>
    %482 = vector.shape_cast %481 : vector<16xf32> to vector<16x1xf32>
    %483 = arith.subf %479, %482 : vector<16x1xf32>
    %484 = vector.shape_cast %483 : vector<16x1xf32> to vector<1x16x1xf32>
    %cst_143 = arith.constant dense<0.000000e+00> : vector<1xf32>
    %485 = vector.multi_reduction <add>, %484, %cst_143 [1, 2] : vector<1x16x1xf32> to vector<1xf32>
    %486 = vector.shape_cast %485 : vector<1xf32> to vector<1x1x1xf32>
    %487 = vector.extract %486[0, 0, 0] : f32 from vector<1x1x1xf32>
    %cst_144 = arith.constant 1.600000e+01 : f32
    %488 = arith.divf %487, %cst_144 : f32
    %489 = tpu.iota {dimensions = array<i32: 1>} : vector<16x8xi32>
    %490 = vector.broadcast %472 : vector<16x1xf32> to vector<16x8xf32>
    %491 = arith.cmpf oge, %470, %490 : vector<16x8xf32>
    %c8_i32_145 = arith.constant 8 : i32
    %492 = vector.broadcast %c8_i32_145 : i32 to vector<16x8xi32>
    %493 = arith.select %491, %489, %492 : vector<16x8xi1>, vector<16x8xi32>
    %cst_146 = arith.constant dense<2147483647> : vector<16xi32>
    %494 = vector.multi_reduction <minsi>, %493, %cst_146 [1] : vector<16x8xi32> to vector<16xi32>
    %495 = vector.shape_cast %494 : vector<16xi32> to vector<16x1xi32>
    %496 = vector.broadcast %495 : vector<16x1xi32> to vector<16x8xi32>
    %497 = arith.cmpi eq, %489, %496 : vector<16x8xi32>
    %cst_147 = arith.constant 0.000000e+00 : f32
    %498 = vector.broadcast %cst_147 : f32 to vector<16x8xf32>
    %499 = arith.select %497, %284, %498 : vector<16x8xi1>, vector<16x8xf32>
    %500 = vector.shape_cast %499 : vector<16x8xf32> to vector<1x16x8xf32>
    %cst_148 = arith.constant dense<0.000000e+00> : vector<1xf32>
    %501 = vector.multi_reduction <add>, %500, %cst_148 [1, 2] : vector<1x16x8xf32> to vector<1xf32>
    %502 = vector.shape_cast %501 : vector<1xf32> to vector<1x1x1xf32>
    %503 = vector.extract %502[0, 0, 0] : f32 from vector<1x1x1xf32>
    %c1_i32_149 = arith.constant 1 : i32
    %504 = vector.broadcast %c1_i32_149 : i32 to vector<4x4xi32>
    %505 = arith.cmpi eq, %41, %504 : vector<4x4xi32>
    %c3_i32_150 = arith.constant 3 : i32
    %506 = vector.broadcast %c3_i32_150 : i32 to vector<4x4xi32>
    %507 = arith.cmpi eq, %42, %506 : vector<4x4xi32>
    %508 = arith.andi %505, %507 : vector<4x4xi1>
    %cst_151 = arith.constant 0.000000e+00 : f32
    %509 = vector.broadcast %503 : f32 to vector<4x4xf32>
    %510 = vector.broadcast %cst_151 : f32 to vector<4x4xf32>
    %511 = arith.select %508, %509, %510 : vector<4x4xi1>, vector<4x4xf32>
    %512 = arith.addf %439, %511 : vector<4x4xf32>
    %cst_152 = arith.constant 0.000000e+00 : f32
    %513 = vector.broadcast %488 : f32 to vector<4x4xf32>
    %514 = vector.broadcast %cst_152 : f32 to vector<4x4xf32>
    %515 = arith.select %508, %513, %514 : vector<4x4xi1>, vector<4x4xf32>
    %516 = arith.addf %443, %515 : vector<4x4xf32>
    %517 = vector.extract_strided_slice %1 {offsets = [48, 0], sizes = [8, 128], strides = [1, 1]} : vector<96x128xf32> to vector<8x128xf32>
    %518 = vector.extract_strided_slice %1 {offsets = [56, 0], sizes = [16, 128], strides = [1, 1]} : vector<96x128xf32> to vector<16x128xf32>
    %519 = vector.extract_strided_slice %10 {offsets = [48, 0], sizes = [8, 8], strides = [1, 1]} : vector<96x8xf32> to vector<8x8xf32>
    %520 = vector.extract_strided_slice %10 {offsets = [56, 0], sizes = [16, 8], strides = [1, 1]} : vector<96x8xf32> to vector<16x8xf32>
    %521 = vector.extract_strided_slice %40 {offsets = [56, 0], sizes = [16, 1], strides = [1, 1]} : vector<96x1xf32> to vector<16x1xf32>
    %522 = vector.shape_cast %521 : vector<16x1xf32> to vector<1x16x1xf32>
    %cst_153 = arith.constant dense<0.000000e+00> : vector<1xf32>
    %523 = vector.multi_reduction <add>, %522, %cst_153 [1, 2] : vector<1x16x1xf32> to vector<1xf32>
    %524 = vector.shape_cast %523 : vector<1xf32> to vector<1x1x1xf32>
    %525 = vector.extract %524[0, 0, 0] : f32 from vector<1x1x1xf32>
    %526 = vector.extract_strided_slice %28 {offsets = [56, 0], sizes = [16, 1], strides = [1, 1]} : vector<96x1xf32> to vector<16x1xf32>
    %527 = vector.shape_cast %526 : vector<16x1xf32> to vector<1x16x1xf32>
    %cst_154 = arith.constant dense<0.000000e+00> : vector<1xf32>
    %528 = vector.multi_reduction <add>, %527, %cst_154 [1, 2] : vector<1x16x1xf32> to vector<1xf32>
    %529 = vector.shape_cast %528 : vector<1xf32> to vector<1x1x1xf32>
    %530 = vector.extract %529[0, 0, 0] : f32 from vector<1x1x1xf32>
    %cst_155 = arith.constant 1.600000e+01 : f32
    %531 = arith.divf %530, %cst_155 : f32
    %c2_i32_156 = arith.constant 2 : i32
    %532 = vector.broadcast %c2_i32_156 : i32 to vector<4x4xi32>
    %533 = arith.cmpi eq, %41, %532 : vector<4x4xi32>
    %c0_i32_157 = arith.constant 0 : i32
    %534 = vector.broadcast %c0_i32_157 : i32 to vector<4x4xi32>
    %535 = arith.cmpi eq, %42, %534 : vector<4x4xi32>
    %536 = arith.andi %533, %535 : vector<4x4xi1>
    %cst_158 = arith.constant 0.000000e+00 : f32
    %537 = vector.broadcast %525 : f32 to vector<4x4xf32>
    %538 = vector.broadcast %cst_158 : f32 to vector<4x4xf32>
    %539 = arith.select %536, %537, %538 : vector<4x4xi1>, vector<4x4xf32>
    %540 = arith.addf %512, %539 : vector<4x4xf32>
    %cst_159 = arith.constant 0.000000e+00 : f32
    %541 = vector.broadcast %531 : f32 to vector<4x4xf32>
    %542 = vector.broadcast %cst_159 : f32 to vector<4x4xf32>
    %543 = arith.select %536, %541, %542 : vector<4x4xi1>, vector<4x4xf32>
    %544 = arith.addf %516, %543 : vector<4x4xf32>
    %545 = vector.extract_strided_slice %22 {offsets = [48, 0], sizes = [8, 8], strides = [1, 1]} : vector<96x8xf32> to vector<8x8xf32>
    %546 = arith.subf %545, %519 : vector<8x8xf32>
    %cst_160 = arith.constant 8.000000e+00 : f32
    %547 = vector.broadcast %cst_160 : f32 to vector<8x8xf32>
    %548 = arith.divf %546, %547 : vector<8x8xf32>
    %cst_161 = arith.constant dense<0.000000e+00> : vector<8x128xf32>
    %549 = tpu.matmul %548, %517, %cst_161 {dimension_numbers = #tpu.dot_dimension_numbers<[0], [0], [1], [1], [0, 1, 1, 1], [], []>} : vector<8x8xf32>, vector<8x128xf32>, vector<8x128xf32> -> vector<8x128xf32>
    %cst_162 = arith.constant dense<0.000000e+00> : vector<8xf32>
    %550 = vector.multi_reduction <add>, %548, %cst_162 [0] : vector<8x8xf32> to vector<8xf32>
    %551 = vector.shape_cast %550 : vector<8xf32> to vector<1x8xf32>
    %cst_163 = arith.constant 4.000000e-01 : f32
    %552 = vector.broadcast %cst_163 : f32 to vector<8x128xf32>
    %553 = arith.mulf %552, %549 : vector<8x128xf32>
    %554 = arith.subf %4, %553 : vector<8x128xf32>
    %cst_164 = arith.constant 4.000000e-01 : f32
    %555 = vector.broadcast %cst_164 : f32 to vector<1x8xf32>
    %556 = arith.mulf %555, %551 : vector<1x8xf32>
    %557 = arith.subf %5, %556 : vector<1x8xf32>
    %cst_165 = arith.constant dense<0.000000e+00> : vector<16x8xf32>
    %558 = tpu.matmul %518, %554, %cst_165 {dimension_numbers = #tpu.dot_dimension_numbers<[1], [1], [0], [0], [0, 0, 1, 0], [], []>} : vector<16x128xf32>, vector<8x128xf32>, vector<16x8xf32> -> vector<16x8xf32>
    %559 = vector.broadcast %557 : vector<1x8xf32> to vector<16x8xf32>
    %560 = arith.addf %558, %559 : vector<16x8xf32>
    %cst_166 = arith.constant dense<0xFF800000> : vector<16xf32>
    %561 = vector.multi_reduction <maximumf>, %560, %cst_166 [1] : vector<16x8xf32> to vector<16xf32>
    %562 = vector.shape_cast %561 : vector<16xf32> to vector<16x1xf32>
    %563 = vector.broadcast %562 : vector<16x1xf32> to vector<16x8xf32>
    %564 = arith.subf %560, %563 : vector<16x8xf32>
    %565 = math.exp %564 : vector<16x8xf32>
    %cst_167 = arith.constant dense<0.000000e+00> : vector<16xf32>
    %566 = vector.multi_reduction <add>, %565, %cst_167 [1] : vector<16x8xf32> to vector<16xf32>
    %567 = vector.shape_cast %566 : vector<16xf32> to vector<16x1xf32>
    %568 = math.log %567 : vector<16x1xf32>
    %569 = arith.addf %562, %568 : vector<16x1xf32>
    %570 = arith.mulf %560, %520 : vector<16x8xf32>
    %cst_168 = arith.constant dense<0.000000e+00> : vector<16xf32>
    %571 = vector.multi_reduction <add>, %570, %cst_168 [1] : vector<16x8xf32> to vector<16xf32>
    %572 = vector.shape_cast %571 : vector<16xf32> to vector<16x1xf32>
    %573 = arith.subf %569, %572 : vector<16x1xf32>
    %574 = vector.shape_cast %573 : vector<16x1xf32> to vector<1x16x1xf32>
    %cst_169 = arith.constant dense<0.000000e+00> : vector<1xf32>
    %575 = vector.multi_reduction <add>, %574, %cst_169 [1, 2] : vector<1x16x1xf32> to vector<1xf32>
    %576 = vector.shape_cast %575 : vector<1xf32> to vector<1x1x1xf32>
    %577 = vector.extract %576[0, 0, 0] : f32 from vector<1x1x1xf32>
    %cst_170 = arith.constant 1.600000e+01 : f32
    %578 = arith.divf %577, %cst_170 : f32
    %579 = tpu.iota {dimensions = array<i32: 1>} : vector<16x8xi32>
    %580 = vector.broadcast %562 : vector<16x1xf32> to vector<16x8xf32>
    %581 = arith.cmpf oge, %560, %580 : vector<16x8xf32>
    %c8_i32_171 = arith.constant 8 : i32
    %582 = vector.broadcast %c8_i32_171 : i32 to vector<16x8xi32>
    %583 = arith.select %581, %579, %582 : vector<16x8xi1>, vector<16x8xi32>
    %cst_172 = arith.constant dense<2147483647> : vector<16xi32>
    %584 = vector.multi_reduction <minsi>, %583, %cst_172 [1] : vector<16x8xi32> to vector<16xi32>
    %585 = vector.shape_cast %584 : vector<16xi32> to vector<16x1xi32>
    %586 = vector.broadcast %585 : vector<16x1xi32> to vector<16x8xi32>
    %587 = arith.cmpi eq, %579, %586 : vector<16x8xi32>
    %cst_173 = arith.constant 0.000000e+00 : f32
    %588 = vector.broadcast %cst_173 : f32 to vector<16x8xf32>
    %589 = arith.select %587, %520, %588 : vector<16x8xi1>, vector<16x8xf32>
    %590 = vector.shape_cast %589 : vector<16x8xf32> to vector<1x16x8xf32>
    %cst_174 = arith.constant dense<0.000000e+00> : vector<1xf32>
    %591 = vector.multi_reduction <add>, %590, %cst_174 [1, 2] : vector<1x16x8xf32> to vector<1xf32>
    %592 = vector.shape_cast %591 : vector<1xf32> to vector<1x1x1xf32>
    %593 = vector.extract %592[0, 0, 0] : f32 from vector<1x1x1xf32>
    %c2_i32_175 = arith.constant 2 : i32
    %594 = vector.broadcast %c2_i32_175 : i32 to vector<4x4xi32>
    %595 = arith.cmpi eq, %41, %594 : vector<4x4xi32>
    %c1_i32_176 = arith.constant 1 : i32
    %596 = vector.broadcast %c1_i32_176 : i32 to vector<4x4xi32>
    %597 = arith.cmpi eq, %42, %596 : vector<4x4xi32>
    %598 = arith.andi %595, %597 : vector<4x4xi1>
    %cst_177 = arith.constant 0.000000e+00 : f32
    %599 = vector.broadcast %593 : f32 to vector<4x4xf32>
    %600 = vector.broadcast %cst_177 : f32 to vector<4x4xf32>
    %601 = arith.select %598, %599, %600 : vector<4x4xi1>, vector<4x4xf32>
    %602 = arith.addf %540, %601 : vector<4x4xf32>
    %cst_178 = arith.constant 0.000000e+00 : f32
    %603 = vector.broadcast %578 : f32 to vector<4x4xf32>
    %604 = vector.broadcast %cst_178 : f32 to vector<4x4xf32>
    %605 = arith.select %598, %603, %604 : vector<4x4xi1>, vector<4x4xf32>
    %606 = arith.addf %544, %605 : vector<4x4xf32>
    %cst_179 = arith.constant dense<0.000000e+00> : vector<8x8xf32>
    %607 = tpu.matmul %517, %554, %cst_179 {dimension_numbers = #tpu.dot_dimension_numbers<[1], [1], [0], [0], [0, 0, 1, 0], [], []>} : vector<8x128xf32>, vector<8x128xf32>, vector<8x8xf32> -> vector<8x8xf32>
    %608 = vector.broadcast %557 : vector<1x8xf32> to vector<8x8xf32>
    %609 = arith.addf %607, %608 : vector<8x8xf32>
    %cst_180 = arith.constant dense<0xFF800000> : vector<8xf32>
    %610 = vector.multi_reduction <maximumf>, %609, %cst_180 [1] : vector<8x8xf32> to vector<8xf32>
    %611 = vector.shape_cast %610 : vector<8xf32> to vector<8x1xf32>
    %612 = vector.broadcast %611 : vector<8x1xf32> to vector<8x8xf32>
    %613 = arith.subf %609, %612 : vector<8x8xf32>
    %614 = math.exp %613 : vector<8x8xf32>
    %cst_181 = arith.constant dense<0.000000e+00> : vector<8xf32>
    %615 = vector.multi_reduction <add>, %614, %cst_181 [1] : vector<8x8xf32> to vector<8xf32>
    %616 = vector.shape_cast %615 : vector<8xf32> to vector<8x1xf32>
    %617 = vector.broadcast %616 : vector<8x1xf32> to vector<8x8xf32>
    %618 = arith.divf %614, %617 : vector<8x8xf32>
    %619 = arith.subf %618, %519 : vector<8x8xf32>
    %cst_182 = arith.constant 8.000000e+00 : f32
    %620 = vector.broadcast %cst_182 : f32 to vector<8x8xf32>
    %621 = arith.divf %619, %620 : vector<8x8xf32>
    %cst_183 = arith.constant dense<0.000000e+00> : vector<8x128xf32>
    %622 = tpu.matmul %621, %517, %cst_183 {dimension_numbers = #tpu.dot_dimension_numbers<[0], [0], [1], [1], [0, 1, 1, 1], [], []>} : vector<8x8xf32>, vector<8x128xf32>, vector<8x128xf32> -> vector<8x128xf32>
    %cst_184 = arith.constant dense<0.000000e+00> : vector<8xf32>
    %623 = vector.multi_reduction <add>, %621, %cst_184 [0] : vector<8x8xf32> to vector<8xf32>
    %624 = vector.shape_cast %623 : vector<8xf32> to vector<1x8xf32>
    %cst_185 = arith.constant 4.000000e-01 : f32
    %625 = vector.broadcast %cst_185 : f32 to vector<8x128xf32>
    %626 = arith.mulf %625, %622 : vector<8x128xf32>
    %627 = arith.subf %554, %626 : vector<8x128xf32>
    %cst_186 = arith.constant 4.000000e-01 : f32
    %628 = vector.broadcast %cst_186 : f32 to vector<1x8xf32>
    %629 = arith.mulf %628, %624 : vector<1x8xf32>
    %630 = arith.subf %557, %629 : vector<1x8xf32>
    %cst_187 = arith.constant dense<0.000000e+00> : vector<16x8xf32>
    %631 = tpu.matmul %518, %627, %cst_187 {dimension_numbers = #tpu.dot_dimension_numbers<[1], [1], [0], [0], [0, 0, 1, 0], [], []>} : vector<16x128xf32>, vector<8x128xf32>, vector<16x8xf32> -> vector<16x8xf32>
    %632 = vector.broadcast %630 : vector<1x8xf32> to vector<16x8xf32>
    %633 = arith.addf %631, %632 : vector<16x8xf32>
    %cst_188 = arith.constant dense<0xFF800000> : vector<16xf32>
    %634 = vector.multi_reduction <maximumf>, %633, %cst_188 [1] : vector<16x8xf32> to vector<16xf32>
    %635 = vector.shape_cast %634 : vector<16xf32> to vector<16x1xf32>
    %636 = vector.broadcast %635 : vector<16x1xf32> to vector<16x8xf32>
    %637 = arith.subf %633, %636 : vector<16x8xf32>
    %638 = math.exp %637 : vector<16x8xf32>
    %cst_189 = arith.constant dense<0.000000e+00> : vector<16xf32>
    %639 = vector.multi_reduction <add>, %638, %cst_189 [1] : vector<16x8xf32> to vector<16xf32>
    %640 = vector.shape_cast %639 : vector<16xf32> to vector<16x1xf32>
    %641 = math.log %640 : vector<16x1xf32>
    %642 = arith.addf %635, %641 : vector<16x1xf32>
    %643 = arith.mulf %633, %520 : vector<16x8xf32>
    %cst_190 = arith.constant dense<0.000000e+00> : vector<16xf32>
    %644 = vector.multi_reduction <add>, %643, %cst_190 [1] : vector<16x8xf32> to vector<16xf32>
    %645 = vector.shape_cast %644 : vector<16xf32> to vector<16x1xf32>
    %646 = arith.subf %642, %645 : vector<16x1xf32>
    %647 = vector.shape_cast %646 : vector<16x1xf32> to vector<1x16x1xf32>
    %cst_191 = arith.constant dense<0.000000e+00> : vector<1xf32>
    %648 = vector.multi_reduction <add>, %647, %cst_191 [1, 2] : vector<1x16x1xf32> to vector<1xf32>
    %649 = vector.shape_cast %648 : vector<1xf32> to vector<1x1x1xf32>
    %650 = vector.extract %649[0, 0, 0] : f32 from vector<1x1x1xf32>
    %cst_192 = arith.constant 1.600000e+01 : f32
    %651 = arith.divf %650, %cst_192 : f32
    %652 = tpu.iota {dimensions = array<i32: 1>} : vector<16x8xi32>
    %653 = vector.broadcast %635 : vector<16x1xf32> to vector<16x8xf32>
    %654 = arith.cmpf oge, %633, %653 : vector<16x8xf32>
    %c8_i32_193 = arith.constant 8 : i32
    %655 = vector.broadcast %c8_i32_193 : i32 to vector<16x8xi32>
    %656 = arith.select %654, %652, %655 : vector<16x8xi1>, vector<16x8xi32>
    %cst_194 = arith.constant dense<2147483647> : vector<16xi32>
    %657 = vector.multi_reduction <minsi>, %656, %cst_194 [1] : vector<16x8xi32> to vector<16xi32>
    %658 = vector.shape_cast %657 : vector<16xi32> to vector<16x1xi32>
    %659 = vector.broadcast %658 : vector<16x1xi32> to vector<16x8xi32>
    %660 = arith.cmpi eq, %652, %659 : vector<16x8xi32>
    %cst_195 = arith.constant 0.000000e+00 : f32
    %661 = vector.broadcast %cst_195 : f32 to vector<16x8xf32>
    %662 = arith.select %660, %520, %661 : vector<16x8xi1>, vector<16x8xf32>
    %663 = vector.shape_cast %662 : vector<16x8xf32> to vector<1x16x8xf32>
    %cst_196 = arith.constant dense<0.000000e+00> : vector<1xf32>
    %664 = vector.multi_reduction <add>, %663, %cst_196 [1, 2] : vector<1x16x8xf32> to vector<1xf32>
    %665 = vector.shape_cast %664 : vector<1xf32> to vector<1x1x1xf32>
    %666 = vector.extract %665[0, 0, 0] : f32 from vector<1x1x1xf32>
    %c2_i32_197 = arith.constant 2 : i32
    %667 = vector.broadcast %c2_i32_197 : i32 to vector<4x4xi32>
    %668 = arith.cmpi eq, %41, %667 : vector<4x4xi32>
    %c2_i32_198 = arith.constant 2 : i32
    %669 = vector.broadcast %c2_i32_198 : i32 to vector<4x4xi32>
    %670 = arith.cmpi eq, %42, %669 : vector<4x4xi32>
    %671 = arith.andi %668, %670 : vector<4x4xi1>
    %cst_199 = arith.constant 0.000000e+00 : f32
    %672 = vector.broadcast %666 : f32 to vector<4x4xf32>
    %673 = vector.broadcast %cst_199 : f32 to vector<4x4xf32>
    %674 = arith.select %671, %672, %673 : vector<4x4xi1>, vector<4x4xf32>
    %675 = arith.addf %602, %674 : vector<4x4xf32>
    %cst_200 = arith.constant 0.000000e+00 : f32
    %676 = vector.broadcast %651 : f32 to vector<4x4xf32>
    %677 = vector.broadcast %cst_200 : f32 to vector<4x4xf32>
    %678 = arith.select %671, %676, %677 : vector<4x4xi1>, vector<4x4xf32>
    %679 = arith.addf %606, %678 : vector<4x4xf32>
    %cst_201 = arith.constant dense<0.000000e+00> : vector<8x8xf32>
    %680 = tpu.matmul %517, %627, %cst_201 {dimension_numbers = #tpu.dot_dimension_numbers<[1], [1], [0], [0], [0, 0, 1, 0], [], []>} : vector<8x128xf32>, vector<8x128xf32>, vector<8x8xf32> -> vector<8x8xf32>
    %681 = vector.broadcast %630 : vector<1x8xf32> to vector<8x8xf32>
    %682 = arith.addf %680, %681 : vector<8x8xf32>
    %cst_202 = arith.constant dense<0xFF800000> : vector<8xf32>
    %683 = vector.multi_reduction <maximumf>, %682, %cst_202 [1] : vector<8x8xf32> to vector<8xf32>
    %684 = vector.shape_cast %683 : vector<8xf32> to vector<8x1xf32>
    %685 = vector.broadcast %684 : vector<8x1xf32> to vector<8x8xf32>
    %686 = arith.subf %682, %685 : vector<8x8xf32>
    %687 = math.exp %686 : vector<8x8xf32>
    %cst_203 = arith.constant dense<0.000000e+00> : vector<8xf32>
    %688 = vector.multi_reduction <add>, %687, %cst_203 [1] : vector<8x8xf32> to vector<8xf32>
    %689 = vector.shape_cast %688 : vector<8xf32> to vector<8x1xf32>
    %690 = vector.broadcast %689 : vector<8x1xf32> to vector<8x8xf32>
    %691 = arith.divf %687, %690 : vector<8x8xf32>
    %692 = arith.subf %691, %519 : vector<8x8xf32>
    %cst_204 = arith.constant 8.000000e+00 : f32
    %693 = vector.broadcast %cst_204 : f32 to vector<8x8xf32>
    %694 = arith.divf %692, %693 : vector<8x8xf32>
    %cst_205 = arith.constant dense<0.000000e+00> : vector<8x128xf32>
    %695 = tpu.matmul %694, %517, %cst_205 {dimension_numbers = #tpu.dot_dimension_numbers<[0], [0], [1], [1], [0, 1, 1, 1], [], []>} : vector<8x8xf32>, vector<8x128xf32>, vector<8x128xf32> -> vector<8x128xf32>
    %cst_206 = arith.constant dense<0.000000e+00> : vector<8xf32>
    %696 = vector.multi_reduction <add>, %694, %cst_206 [0] : vector<8x8xf32> to vector<8xf32>
    %697 = vector.shape_cast %696 : vector<8xf32> to vector<1x8xf32>
    %cst_207 = arith.constant 4.000000e-01 : f32
    %698 = vector.broadcast %cst_207 : f32 to vector<8x128xf32>
    %699 = arith.mulf %698, %695 : vector<8x128xf32>
    %700 = arith.subf %627, %699 : vector<8x128xf32>
    %cst_208 = arith.constant 4.000000e-01 : f32
    %701 = vector.broadcast %cst_208 : f32 to vector<1x8xf32>
    %702 = arith.mulf %701, %697 : vector<1x8xf32>
    %703 = arith.subf %630, %702 : vector<1x8xf32>
    %cst_209 = arith.constant dense<0.000000e+00> : vector<16x8xf32>
    %704 = tpu.matmul %518, %700, %cst_209 {dimension_numbers = #tpu.dot_dimension_numbers<[1], [1], [0], [0], [0, 0, 1, 0], [], []>} : vector<16x128xf32>, vector<8x128xf32>, vector<16x8xf32> -> vector<16x8xf32>
    %705 = vector.broadcast %703 : vector<1x8xf32> to vector<16x8xf32>
    %706 = arith.addf %704, %705 : vector<16x8xf32>
    %cst_210 = arith.constant dense<0xFF800000> : vector<16xf32>
    %707 = vector.multi_reduction <maximumf>, %706, %cst_210 [1] : vector<16x8xf32> to vector<16xf32>
    %708 = vector.shape_cast %707 : vector<16xf32> to vector<16x1xf32>
    %709 = vector.broadcast %708 : vector<16x1xf32> to vector<16x8xf32>
    %710 = arith.subf %706, %709 : vector<16x8xf32>
    %711 = math.exp %710 : vector<16x8xf32>
    %cst_211 = arith.constant dense<0.000000e+00> : vector<16xf32>
    %712 = vector.multi_reduction <add>, %711, %cst_211 [1] : vector<16x8xf32> to vector<16xf32>
    %713 = vector.shape_cast %712 : vector<16xf32> to vector<16x1xf32>
    %714 = math.log %713 : vector<16x1xf32>
    %715 = arith.addf %708, %714 : vector<16x1xf32>
    %716 = arith.mulf %706, %520 : vector<16x8xf32>
    %cst_212 = arith.constant dense<0.000000e+00> : vector<16xf32>
    %717 = vector.multi_reduction <add>, %716, %cst_212 [1] : vector<16x8xf32> to vector<16xf32>
    %718 = vector.shape_cast %717 : vector<16xf32> to vector<16x1xf32>
    %719 = arith.subf %715, %718 : vector<16x1xf32>
    %720 = vector.shape_cast %719 : vector<16x1xf32> to vector<1x16x1xf32>
    %cst_213 = arith.constant dense<0.000000e+00> : vector<1xf32>
    %721 = vector.multi_reduction <add>, %720, %cst_213 [1, 2] : vector<1x16x1xf32> to vector<1xf32>
    %722 = vector.shape_cast %721 : vector<1xf32> to vector<1x1x1xf32>
    %723 = vector.extract %722[0, 0, 0] : f32 from vector<1x1x1xf32>
    %cst_214 = arith.constant 1.600000e+01 : f32
    %724 = arith.divf %723, %cst_214 : f32
    %725 = tpu.iota {dimensions = array<i32: 1>} : vector<16x8xi32>
    %726 = vector.broadcast %708 : vector<16x1xf32> to vector<16x8xf32>
    %727 = arith.cmpf oge, %706, %726 : vector<16x8xf32>
    %c8_i32_215 = arith.constant 8 : i32
    %728 = vector.broadcast %c8_i32_215 : i32 to vector<16x8xi32>
    %729 = arith.select %727, %725, %728 : vector<16x8xi1>, vector<16x8xi32>
    %cst_216 = arith.constant dense<2147483647> : vector<16xi32>
    %730 = vector.multi_reduction <minsi>, %729, %cst_216 [1] : vector<16x8xi32> to vector<16xi32>
    %731 = vector.shape_cast %730 : vector<16xi32> to vector<16x1xi32>
    %732 = vector.broadcast %731 : vector<16x1xi32> to vector<16x8xi32>
    %733 = arith.cmpi eq, %725, %732 : vector<16x8xi32>
    %cst_217 = arith.constant 0.000000e+00 : f32
    %734 = vector.broadcast %cst_217 : f32 to vector<16x8xf32>
    %735 = arith.select %733, %520, %734 : vector<16x8xi1>, vector<16x8xf32>
    %736 = vector.shape_cast %735 : vector<16x8xf32> to vector<1x16x8xf32>
    %cst_218 = arith.constant dense<0.000000e+00> : vector<1xf32>
    %737 = vector.multi_reduction <add>, %736, %cst_218 [1, 2] : vector<1x16x8xf32> to vector<1xf32>
    %738 = vector.shape_cast %737 : vector<1xf32> to vector<1x1x1xf32>
    %739 = vector.extract %738[0, 0, 0] : f32 from vector<1x1x1xf32>
    %c2_i32_219 = arith.constant 2 : i32
    %740 = vector.broadcast %c2_i32_219 : i32 to vector<4x4xi32>
    %741 = arith.cmpi eq, %41, %740 : vector<4x4xi32>
    %c3_i32_220 = arith.constant 3 : i32
    %742 = vector.broadcast %c3_i32_220 : i32 to vector<4x4xi32>
    %743 = arith.cmpi eq, %42, %742 : vector<4x4xi32>
    %744 = arith.andi %741, %743 : vector<4x4xi1>
    %cst_221 = arith.constant 0.000000e+00 : f32
    %745 = vector.broadcast %739 : f32 to vector<4x4xf32>
    %746 = vector.broadcast %cst_221 : f32 to vector<4x4xf32>
    %747 = arith.select %744, %745, %746 : vector<4x4xi1>, vector<4x4xf32>
    %748 = arith.addf %675, %747 : vector<4x4xf32>
    %cst_222 = arith.constant 0.000000e+00 : f32
    %749 = vector.broadcast %724 : f32 to vector<4x4xf32>
    %750 = vector.broadcast %cst_222 : f32 to vector<4x4xf32>
    %751 = arith.select %744, %749, %750 : vector<4x4xi1>, vector<4x4xf32>
    %752 = arith.addf %679, %751 : vector<4x4xf32>
    %753 = vector.extract_strided_slice %1 {offsets = [72, 0], sizes = [8, 128], strides = [1, 1]} : vector<96x128xf32> to vector<8x128xf32>
    %754 = vector.extract_strided_slice %1 {offsets = [80, 0], sizes = [16, 128], strides = [1, 1]} : vector<96x128xf32> to vector<16x128xf32>
    %755 = vector.extract_strided_slice %10 {offsets = [72, 0], sizes = [8, 8], strides = [1, 1]} : vector<96x8xf32> to vector<8x8xf32>
    %756 = vector.extract_strided_slice %10 {offsets = [80, 0], sizes = [16, 8], strides = [1, 1]} : vector<96x8xf32> to vector<16x8xf32>
    %757 = vector.extract_strided_slice %40 {offsets = [80, 0], sizes = [16, 1], strides = [1, 1]} : vector<96x1xf32> to vector<16x1xf32>
    %758 = vector.shape_cast %757 : vector<16x1xf32> to vector<1x16x1xf32>
    %cst_223 = arith.constant dense<0.000000e+00> : vector<1xf32>
    %759 = vector.multi_reduction <add>, %758, %cst_223 [1, 2] : vector<1x16x1xf32> to vector<1xf32>
    %760 = vector.shape_cast %759 : vector<1xf32> to vector<1x1x1xf32>
    %761 = vector.extract %760[0, 0, 0] : f32 from vector<1x1x1xf32>
    %762 = vector.extract_strided_slice %28 {offsets = [80, 0], sizes = [16, 1], strides = [1, 1]} : vector<96x1xf32> to vector<16x1xf32>
    %763 = vector.shape_cast %762 : vector<16x1xf32> to vector<1x16x1xf32>
    %cst_224 = arith.constant dense<0.000000e+00> : vector<1xf32>
    %764 = vector.multi_reduction <add>, %763, %cst_224 [1, 2] : vector<1x16x1xf32> to vector<1xf32>
    %765 = vector.shape_cast %764 : vector<1xf32> to vector<1x1x1xf32>
    %766 = vector.extract %765[0, 0, 0] : f32 from vector<1x1x1xf32>
    %cst_225 = arith.constant 1.600000e+01 : f32
    %767 = arith.divf %766, %cst_225 : f32
    %c3_i32_226 = arith.constant 3 : i32
    %768 = vector.broadcast %c3_i32_226 : i32 to vector<4x4xi32>
    %769 = arith.cmpi eq, %41, %768 : vector<4x4xi32>
    %c0_i32_227 = arith.constant 0 : i32
    %770 = vector.broadcast %c0_i32_227 : i32 to vector<4x4xi32>
    %771 = arith.cmpi eq, %42, %770 : vector<4x4xi32>
    %772 = arith.andi %769, %771 : vector<4x4xi1>
    %cst_228 = arith.constant 0.000000e+00 : f32
    %773 = vector.broadcast %761 : f32 to vector<4x4xf32>
    %774 = vector.broadcast %cst_228 : f32 to vector<4x4xf32>
    %775 = arith.select %772, %773, %774 : vector<4x4xi1>, vector<4x4xf32>
    %776 = arith.addf %748, %775 : vector<4x4xf32>
    %cst_229 = arith.constant 0.000000e+00 : f32
    %777 = vector.broadcast %767 : f32 to vector<4x4xf32>
    %778 = vector.broadcast %cst_229 : f32 to vector<4x4xf32>
    %779 = arith.select %772, %777, %778 : vector<4x4xi1>, vector<4x4xf32>
    %780 = arith.addf %752, %779 : vector<4x4xf32>
    %781 = vector.extract_strided_slice %22 {offsets = [72, 0], sizes = [8, 8], strides = [1, 1]} : vector<96x8xf32> to vector<8x8xf32>
    %782 = arith.subf %781, %755 : vector<8x8xf32>
    %cst_230 = arith.constant 8.000000e+00 : f32
    %783 = vector.broadcast %cst_230 : f32 to vector<8x8xf32>
    %784 = arith.divf %782, %783 : vector<8x8xf32>
    %cst_231 = arith.constant dense<0.000000e+00> : vector<8x128xf32>
    %785 = tpu.matmul %784, %753, %cst_231 {dimension_numbers = #tpu.dot_dimension_numbers<[0], [0], [1], [1], [0, 1, 1, 1], [], []>} : vector<8x8xf32>, vector<8x128xf32>, vector<8x128xf32> -> vector<8x128xf32>
    %cst_232 = arith.constant dense<0.000000e+00> : vector<8xf32>
    %786 = vector.multi_reduction <add>, %784, %cst_232 [0] : vector<8x8xf32> to vector<8xf32>
    %787 = vector.shape_cast %786 : vector<8xf32> to vector<1x8xf32>
    %cst_233 = arith.constant 4.000000e-01 : f32
    %788 = vector.broadcast %cst_233 : f32 to vector<8x128xf32>
    %789 = arith.mulf %788, %785 : vector<8x128xf32>
    %790 = arith.subf %4, %789 : vector<8x128xf32>
    %cst_234 = arith.constant 4.000000e-01 : f32
    %791 = vector.broadcast %cst_234 : f32 to vector<1x8xf32>
    %792 = arith.mulf %791, %787 : vector<1x8xf32>
    %793 = arith.subf %5, %792 : vector<1x8xf32>
    %cst_235 = arith.constant dense<0.000000e+00> : vector<16x8xf32>
    %794 = tpu.matmul %754, %790, %cst_235 {dimension_numbers = #tpu.dot_dimension_numbers<[1], [1], [0], [0], [0, 0, 1, 0], [], []>} : vector<16x128xf32>, vector<8x128xf32>, vector<16x8xf32> -> vector<16x8xf32>
    %795 = vector.broadcast %793 : vector<1x8xf32> to vector<16x8xf32>
    %796 = arith.addf %794, %795 : vector<16x8xf32>
    %cst_236 = arith.constant dense<0xFF800000> : vector<16xf32>
    %797 = vector.multi_reduction <maximumf>, %796, %cst_236 [1] : vector<16x8xf32> to vector<16xf32>
    %798 = vector.shape_cast %797 : vector<16xf32> to vector<16x1xf32>
    %799 = vector.broadcast %798 : vector<16x1xf32> to vector<16x8xf32>
    %800 = arith.subf %796, %799 : vector<16x8xf32>
    %801 = math.exp %800 : vector<16x8xf32>
    %cst_237 = arith.constant dense<0.000000e+00> : vector<16xf32>
    %802 = vector.multi_reduction <add>, %801, %cst_237 [1] : vector<16x8xf32> to vector<16xf32>
    %803 = vector.shape_cast %802 : vector<16xf32> to vector<16x1xf32>
    %804 = math.log %803 : vector<16x1xf32>
    %805 = arith.addf %798, %804 : vector<16x1xf32>
    %806 = arith.mulf %796, %756 : vector<16x8xf32>
    %cst_238 = arith.constant dense<0.000000e+00> : vector<16xf32>
    %807 = vector.multi_reduction <add>, %806, %cst_238 [1] : vector<16x8xf32> to vector<16xf32>
    %808 = vector.shape_cast %807 : vector<16xf32> to vector<16x1xf32>
    %809 = arith.subf %805, %808 : vector<16x1xf32>
    %810 = vector.shape_cast %809 : vector<16x1xf32> to vector<1x16x1xf32>
    %cst_239 = arith.constant dense<0.000000e+00> : vector<1xf32>
    %811 = vector.multi_reduction <add>, %810, %cst_239 [1, 2] : vector<1x16x1xf32> to vector<1xf32>
    %812 = vector.shape_cast %811 : vector<1xf32> to vector<1x1x1xf32>
    %813 = vector.extract %812[0, 0, 0] : f32 from vector<1x1x1xf32>
    %cst_240 = arith.constant 1.600000e+01 : f32
    %814 = arith.divf %813, %cst_240 : f32
    %815 = tpu.iota {dimensions = array<i32: 1>} : vector<16x8xi32>
    %816 = vector.broadcast %798 : vector<16x1xf32> to vector<16x8xf32>
    %817 = arith.cmpf oge, %796, %816 : vector<16x8xf32>
    %c8_i32_241 = arith.constant 8 : i32
    %818 = vector.broadcast %c8_i32_241 : i32 to vector<16x8xi32>
    %819 = arith.select %817, %815, %818 : vector<16x8xi1>, vector<16x8xi32>
    %cst_242 = arith.constant dense<2147483647> : vector<16xi32>
    %820 = vector.multi_reduction <minsi>, %819, %cst_242 [1] : vector<16x8xi32> to vector<16xi32>
    %821 = vector.shape_cast %820 : vector<16xi32> to vector<16x1xi32>
    %822 = vector.broadcast %821 : vector<16x1xi32> to vector<16x8xi32>
    %823 = arith.cmpi eq, %815, %822 : vector<16x8xi32>
    %cst_243 = arith.constant 0.000000e+00 : f32
    %824 = vector.broadcast %cst_243 : f32 to vector<16x8xf32>
    %825 = arith.select %823, %756, %824 : vector<16x8xi1>, vector<16x8xf32>
    %826 = vector.shape_cast %825 : vector<16x8xf32> to vector<1x16x8xf32>
    %cst_244 = arith.constant dense<0.000000e+00> : vector<1xf32>
    %827 = vector.multi_reduction <add>, %826, %cst_244 [1, 2] : vector<1x16x8xf32> to vector<1xf32>
    %828 = vector.shape_cast %827 : vector<1xf32> to vector<1x1x1xf32>
    %829 = vector.extract %828[0, 0, 0] : f32 from vector<1x1x1xf32>
    %c3_i32_245 = arith.constant 3 : i32
    %830 = vector.broadcast %c3_i32_245 : i32 to vector<4x4xi32>
    %831 = arith.cmpi eq, %41, %830 : vector<4x4xi32>
    %c1_i32_246 = arith.constant 1 : i32
    %832 = vector.broadcast %c1_i32_246 : i32 to vector<4x4xi32>
    %833 = arith.cmpi eq, %42, %832 : vector<4x4xi32>
    %834 = arith.andi %831, %833 : vector<4x4xi1>
    %cst_247 = arith.constant 0.000000e+00 : f32
    %835 = vector.broadcast %829 : f32 to vector<4x4xf32>
    %836 = vector.broadcast %cst_247 : f32 to vector<4x4xf32>
    %837 = arith.select %834, %835, %836 : vector<4x4xi1>, vector<4x4xf32>
    %838 = arith.addf %776, %837 : vector<4x4xf32>
    %cst_248 = arith.constant 0.000000e+00 : f32
    %839 = vector.broadcast %814 : f32 to vector<4x4xf32>
    %840 = vector.broadcast %cst_248 : f32 to vector<4x4xf32>
    %841 = arith.select %834, %839, %840 : vector<4x4xi1>, vector<4x4xf32>
    %842 = arith.addf %780, %841 : vector<4x4xf32>
    %cst_249 = arith.constant dense<0.000000e+00> : vector<8x8xf32>
    %843 = tpu.matmul %753, %790, %cst_249 {dimension_numbers = #tpu.dot_dimension_numbers<[1], [1], [0], [0], [0, 0, 1, 0], [], []>} : vector<8x128xf32>, vector<8x128xf32>, vector<8x8xf32> -> vector<8x8xf32>
    %844 = vector.broadcast %793 : vector<1x8xf32> to vector<8x8xf32>
    %845 = arith.addf %843, %844 : vector<8x8xf32>
    %cst_250 = arith.constant dense<0xFF800000> : vector<8xf32>
    %846 = vector.multi_reduction <maximumf>, %845, %cst_250 [1] : vector<8x8xf32> to vector<8xf32>
    %847 = vector.shape_cast %846 : vector<8xf32> to vector<8x1xf32>
    %848 = vector.broadcast %847 : vector<8x1xf32> to vector<8x8xf32>
    %849 = arith.subf %845, %848 : vector<8x8xf32>
    %850 = math.exp %849 : vector<8x8xf32>
    %cst_251 = arith.constant dense<0.000000e+00> : vector<8xf32>
    %851 = vector.multi_reduction <add>, %850, %cst_251 [1] : vector<8x8xf32> to vector<8xf32>
    %852 = vector.shape_cast %851 : vector<8xf32> to vector<8x1xf32>
    %853 = vector.broadcast %852 : vector<8x1xf32> to vector<8x8xf32>
    %854 = arith.divf %850, %853 : vector<8x8xf32>
    %855 = arith.subf %854, %755 : vector<8x8xf32>
    %cst_252 = arith.constant 8.000000e+00 : f32
    %856 = vector.broadcast %cst_252 : f32 to vector<8x8xf32>
    %857 = arith.divf %855, %856 : vector<8x8xf32>
    %cst_253 = arith.constant dense<0.000000e+00> : vector<8x128xf32>
    %858 = tpu.matmul %857, %753, %cst_253 {dimension_numbers = #tpu.dot_dimension_numbers<[0], [0], [1], [1], [0, 1, 1, 1], [], []>} : vector<8x8xf32>, vector<8x128xf32>, vector<8x128xf32> -> vector<8x128xf32>
    %cst_254 = arith.constant dense<0.000000e+00> : vector<8xf32>
    %859 = vector.multi_reduction <add>, %857, %cst_254 [0] : vector<8x8xf32> to vector<8xf32>
    %860 = vector.shape_cast %859 : vector<8xf32> to vector<1x8xf32>
    %cst_255 = arith.constant 4.000000e-01 : f32
    %861 = vector.broadcast %cst_255 : f32 to vector<8x128xf32>
    %862 = arith.mulf %861, %858 : vector<8x128xf32>
    %863 = arith.subf %790, %862 : vector<8x128xf32>
    %cst_256 = arith.constant 4.000000e-01 : f32
    %864 = vector.broadcast %cst_256 : f32 to vector<1x8xf32>
    %865 = arith.mulf %864, %860 : vector<1x8xf32>
    %866 = arith.subf %793, %865 : vector<1x8xf32>
    %cst_257 = arith.constant dense<0.000000e+00> : vector<16x8xf32>
    %867 = tpu.matmul %754, %863, %cst_257 {dimension_numbers = #tpu.dot_dimension_numbers<[1], [1], [0], [0], [0, 0, 1, 0], [], []>} : vector<16x128xf32>, vector<8x128xf32>, vector<16x8xf32> -> vector<16x8xf32>
    %868 = vector.broadcast %866 : vector<1x8xf32> to vector<16x8xf32>
    %869 = arith.addf %867, %868 : vector<16x8xf32>
    %cst_258 = arith.constant dense<0xFF800000> : vector<16xf32>
    %870 = vector.multi_reduction <maximumf>, %869, %cst_258 [1] : vector<16x8xf32> to vector<16xf32>
    %871 = vector.shape_cast %870 : vector<16xf32> to vector<16x1xf32>
    %872 = vector.broadcast %871 : vector<16x1xf32> to vector<16x8xf32>
    %873 = arith.subf %869, %872 : vector<16x8xf32>
    %874 = math.exp %873 : vector<16x8xf32>
    %cst_259 = arith.constant dense<0.000000e+00> : vector<16xf32>
    %875 = vector.multi_reduction <add>, %874, %cst_259 [1] : vector<16x8xf32> to vector<16xf32>
    %876 = vector.shape_cast %875 : vector<16xf32> to vector<16x1xf32>
    %877 = math.log %876 : vector<16x1xf32>
    %878 = arith.addf %871, %877 : vector<16x1xf32>
    %879 = arith.mulf %869, %756 : vector<16x8xf32>
    %cst_260 = arith.constant dense<0.000000e+00> : vector<16xf32>
    %880 = vector.multi_reduction <add>, %879, %cst_260 [1] : vector<16x8xf32> to vector<16xf32>
    %881 = vector.shape_cast %880 : vector<16xf32> to vector<16x1xf32>
    %882 = arith.subf %878, %881 : vector<16x1xf32>
    %883 = vector.shape_cast %882 : vector<16x1xf32> to vector<1x16x1xf32>
    %cst_261 = arith.constant dense<0.000000e+00> : vector<1xf32>
    %884 = vector.multi_reduction <add>, %883, %cst_261 [1, 2] : vector<1x16x1xf32> to vector<1xf32>
    %885 = vector.shape_cast %884 : vector<1xf32> to vector<1x1x1xf32>
    %886 = vector.extract %885[0, 0, 0] : f32 from vector<1x1x1xf32>
    %cst_262 = arith.constant 1.600000e+01 : f32
    %887 = arith.divf %886, %cst_262 : f32
    %888 = tpu.iota {dimensions = array<i32: 1>} : vector<16x8xi32>
    %889 = vector.broadcast %871 : vector<16x1xf32> to vector<16x8xf32>
    %890 = arith.cmpf oge, %869, %889 : vector<16x8xf32>
    %c8_i32_263 = arith.constant 8 : i32
    %891 = vector.broadcast %c8_i32_263 : i32 to vector<16x8xi32>
    %892 = arith.select %890, %888, %891 : vector<16x8xi1>, vector<16x8xi32>
    %cst_264 = arith.constant dense<2147483647> : vector<16xi32>
    %893 = vector.multi_reduction <minsi>, %892, %cst_264 [1] : vector<16x8xi32> to vector<16xi32>
    %894 = vector.shape_cast %893 : vector<16xi32> to vector<16x1xi32>
    %895 = vector.broadcast %894 : vector<16x1xi32> to vector<16x8xi32>
    %896 = arith.cmpi eq, %888, %895 : vector<16x8xi32>
    %cst_265 = arith.constant 0.000000e+00 : f32
    %897 = vector.broadcast %cst_265 : f32 to vector<16x8xf32>
    %898 = arith.select %896, %756, %897 : vector<16x8xi1>, vector<16x8xf32>
    %899 = vector.shape_cast %898 : vector<16x8xf32> to vector<1x16x8xf32>
    %cst_266 = arith.constant dense<0.000000e+00> : vector<1xf32>
    %900 = vector.multi_reduction <add>, %899, %cst_266 [1, 2] : vector<1x16x8xf32> to vector<1xf32>
    %901 = vector.shape_cast %900 : vector<1xf32> to vector<1x1x1xf32>
    %902 = vector.extract %901[0, 0, 0] : f32 from vector<1x1x1xf32>
    %c3_i32_267 = arith.constant 3 : i32
    %903 = vector.broadcast %c3_i32_267 : i32 to vector<4x4xi32>
    %904 = arith.cmpi eq, %41, %903 : vector<4x4xi32>
    %c2_i32_268 = arith.constant 2 : i32
    %905 = vector.broadcast %c2_i32_268 : i32 to vector<4x4xi32>
    %906 = arith.cmpi eq, %42, %905 : vector<4x4xi32>
    %907 = arith.andi %904, %906 : vector<4x4xi1>
    %cst_269 = arith.constant 0.000000e+00 : f32
    %908 = vector.broadcast %902 : f32 to vector<4x4xf32>
    %909 = vector.broadcast %cst_269 : f32 to vector<4x4xf32>
    %910 = arith.select %907, %908, %909 : vector<4x4xi1>, vector<4x4xf32>
    %911 = arith.addf %838, %910 : vector<4x4xf32>
    %cst_270 = arith.constant 0.000000e+00 : f32
    %912 = vector.broadcast %887 : f32 to vector<4x4xf32>
    %913 = vector.broadcast %cst_270 : f32 to vector<4x4xf32>
    %914 = arith.select %907, %912, %913 : vector<4x4xi1>, vector<4x4xf32>
    %915 = arith.addf %842, %914 : vector<4x4xf32>
    %cst_271 = arith.constant dense<0.000000e+00> : vector<8x8xf32>
    %916 = tpu.matmul %753, %863, %cst_271 {dimension_numbers = #tpu.dot_dimension_numbers<[1], [1], [0], [0], [0, 0, 1, 0], [], []>} : vector<8x128xf32>, vector<8x128xf32>, vector<8x8xf32> -> vector<8x8xf32>
    %917 = vector.broadcast %866 : vector<1x8xf32> to vector<8x8xf32>
    %918 = arith.addf %916, %917 : vector<8x8xf32>
    %cst_272 = arith.constant dense<0xFF800000> : vector<8xf32>
    %919 = vector.multi_reduction <maximumf>, %918, %cst_272 [1] : vector<8x8xf32> to vector<8xf32>
    %920 = vector.shape_cast %919 : vector<8xf32> to vector<8x1xf32>
    %921 = vector.broadcast %920 : vector<8x1xf32> to vector<8x8xf32>
    %922 = arith.subf %918, %921 : vector<8x8xf32>
    %923 = math.exp %922 : vector<8x8xf32>
    %cst_273 = arith.constant dense<0.000000e+00> : vector<8xf32>
    %924 = vector.multi_reduction <add>, %923, %cst_273 [1] : vector<8x8xf32> to vector<8xf32>
    %925 = vector.shape_cast %924 : vector<8xf32> to vector<8x1xf32>
    %926 = vector.broadcast %925 : vector<8x1xf32> to vector<8x8xf32>
    %927 = arith.divf %923, %926 : vector<8x8xf32>
    %928 = arith.subf %927, %755 : vector<8x8xf32>
    %cst_274 = arith.constant 8.000000e+00 : f32
    %929 = vector.broadcast %cst_274 : f32 to vector<8x8xf32>
    %930 = arith.divf %928, %929 : vector<8x8xf32>
    %cst_275 = arith.constant dense<0.000000e+00> : vector<8x128xf32>
    %931 = tpu.matmul %930, %753, %cst_275 {dimension_numbers = #tpu.dot_dimension_numbers<[0], [0], [1], [1], [0, 1, 1, 1], [], []>} : vector<8x8xf32>, vector<8x128xf32>, vector<8x128xf32> -> vector<8x128xf32>
    %cst_276 = arith.constant dense<0.000000e+00> : vector<8xf32>
    %932 = vector.multi_reduction <add>, %930, %cst_276 [0] : vector<8x8xf32> to vector<8xf32>
    %933 = vector.shape_cast %932 : vector<8xf32> to vector<1x8xf32>
    %cst_277 = arith.constant 4.000000e-01 : f32
    %934 = vector.broadcast %cst_277 : f32 to vector<8x128xf32>
    %935 = arith.mulf %934, %931 : vector<8x128xf32>
    %936 = arith.subf %863, %935 : vector<8x128xf32>
    %cst_278 = arith.constant 4.000000e-01 : f32
    %937 = vector.broadcast %cst_278 : f32 to vector<1x8xf32>
    %938 = arith.mulf %937, %933 : vector<1x8xf32>
    %939 = arith.subf %866, %938 : vector<1x8xf32>
    %cst_279 = arith.constant dense<0.000000e+00> : vector<16x8xf32>
    %940 = tpu.matmul %754, %936, %cst_279 {dimension_numbers = #tpu.dot_dimension_numbers<[1], [1], [0], [0], [0, 0, 1, 0], [], []>} : vector<16x128xf32>, vector<8x128xf32>, vector<16x8xf32> -> vector<16x8xf32>
    %941 = vector.broadcast %939 : vector<1x8xf32> to vector<16x8xf32>
    %942 = arith.addf %940, %941 : vector<16x8xf32>
    %cst_280 = arith.constant dense<0xFF800000> : vector<16xf32>
    %943 = vector.multi_reduction <maximumf>, %942, %cst_280 [1] : vector<16x8xf32> to vector<16xf32>
    %944 = vector.shape_cast %943 : vector<16xf32> to vector<16x1xf32>
    %945 = vector.broadcast %944 : vector<16x1xf32> to vector<16x8xf32>
    %946 = arith.subf %942, %945 : vector<16x8xf32>
    %947 = math.exp %946 : vector<16x8xf32>
    %cst_281 = arith.constant dense<0.000000e+00> : vector<16xf32>
    %948 = vector.multi_reduction <add>, %947, %cst_281 [1] : vector<16x8xf32> to vector<16xf32>
    %949 = vector.shape_cast %948 : vector<16xf32> to vector<16x1xf32>
    %950 = math.log %949 : vector<16x1xf32>
    %951 = arith.addf %944, %950 : vector<16x1xf32>
    %952 = arith.mulf %942, %756 : vector<16x8xf32>
    %cst_282 = arith.constant dense<0.000000e+00> : vector<16xf32>
    %953 = vector.multi_reduction <add>, %952, %cst_282 [1] : vector<16x8xf32> to vector<16xf32>
    %954 = vector.shape_cast %953 : vector<16xf32> to vector<16x1xf32>
    %955 = arith.subf %951, %954 : vector<16x1xf32>
    %956 = vector.shape_cast %955 : vector<16x1xf32> to vector<1x16x1xf32>
    %cst_283 = arith.constant dense<0.000000e+00> : vector<1xf32>
    %957 = vector.multi_reduction <add>, %956, %cst_283 [1, 2] : vector<1x16x1xf32> to vector<1xf32>
    %958 = vector.shape_cast %957 : vector<1xf32> to vector<1x1x1xf32>
    %959 = vector.extract %958[0, 0, 0] : f32 from vector<1x1x1xf32>
    %cst_284 = arith.constant 1.600000e+01 : f32
    %960 = arith.divf %959, %cst_284 : f32
    %961 = tpu.iota {dimensions = array<i32: 1>} : vector<16x8xi32>
    %962 = vector.broadcast %944 : vector<16x1xf32> to vector<16x8xf32>
    %963 = arith.cmpf oge, %942, %962 : vector<16x8xf32>
    %c8_i32_285 = arith.constant 8 : i32
    %964 = vector.broadcast %c8_i32_285 : i32 to vector<16x8xi32>
    %965 = arith.select %963, %961, %964 : vector<16x8xi1>, vector<16x8xi32>
    %cst_286 = arith.constant dense<2147483647> : vector<16xi32>
    %966 = vector.multi_reduction <minsi>, %965, %cst_286 [1] : vector<16x8xi32> to vector<16xi32>
    %967 = vector.shape_cast %966 : vector<16xi32> to vector<16x1xi32>
    %968 = vector.broadcast %967 : vector<16x1xi32> to vector<16x8xi32>
    %969 = arith.cmpi eq, %961, %968 : vector<16x8xi32>
    %cst_287 = arith.constant 0.000000e+00 : f32
    %970 = vector.broadcast %cst_287 : f32 to vector<16x8xf32>
    %971 = arith.select %969, %756, %970 : vector<16x8xi1>, vector<16x8xf32>
    %972 = vector.shape_cast %971 : vector<16x8xf32> to vector<1x16x8xf32>
    %cst_288 = arith.constant dense<0.000000e+00> : vector<1xf32>
    %973 = vector.multi_reduction <add>, %972, %cst_288 [1, 2] : vector<1x16x8xf32> to vector<1xf32>
    %974 = vector.shape_cast %973 : vector<1xf32> to vector<1x1x1xf32>
    %975 = vector.extract %974[0, 0, 0] : f32 from vector<1x1x1xf32>
    %c3_i32_289 = arith.constant 3 : i32
    %976 = vector.broadcast %c3_i32_289 : i32 to vector<4x4xi32>
    %977 = arith.cmpi eq, %41, %976 : vector<4x4xi32>
    %c3_i32_290 = arith.constant 3 : i32
    %978 = vector.broadcast %c3_i32_290 : i32 to vector<4x4xi32>
    %979 = arith.cmpi eq, %42, %978 : vector<4x4xi32>
    %980 = arith.andi %977, %979 : vector<4x4xi1>
    %cst_291 = arith.constant 0.000000e+00 : f32
    %981 = vector.broadcast %975 : f32 to vector<4x4xf32>
    %982 = vector.broadcast %cst_291 : f32 to vector<4x4xf32>
    %983 = arith.select %980, %981, %982 : vector<4x4xi1>, vector<4x4xf32>
    %984 = arith.addf %911, %983 : vector<4x4xf32>
    %cst_292 = arith.constant 0.000000e+00 : f32
    %985 = vector.broadcast %960 : f32 to vector<4x4xf32>
    %986 = vector.broadcast %cst_292 : f32 to vector<4x4xf32>
    %987 = arith.select %980, %985, %986 : vector<4x4xi1>, vector<4x4xf32>
    %988 = arith.addf %915, %987 : vector<4x4xf32>
    %c0_293 = arith.constant 0 : index
    %c0_294 = arith.constant 0 : index
    %c0_295 = arith.constant 0 : index
    %989 = vector.load %arg5[%c0_293, %c0_294, %c0_295] : memref<1x4x4xf32, #tpu.memory_space<vmem>>, vector<1x4x4xf32>
    %990 = vector.shape_cast %989 : vector<1x4x4xf32> to vector<4x4xf32>
    %991 = vector.shape_cast %984 : vector<4x4xf32> to vector<1x4x4xf32>
    tpu.vector_store %arg5[%c0_293, %c0_294, %c0_295], %991 {strides = array<i32>} : memref<1x4x4xf32, #tpu.memory_space<vmem>>, vector<1x4x4xf32>,
    %c0_296 = arith.constant 0 : index
    %c0_297 = arith.constant 0 : index
    %c0_298 = arith.constant 0 : index
    %992 = vector.load %arg6[%c0_296, %c0_297, %c0_298] : memref<1x4x4xf32, #tpu.memory_space<vmem>>, vector<1x4x4xf32>
    %993 = vector.shape_cast %992 : vector<1x4x4xf32> to vector<4x4xf32>
    %994 = vector.shape_cast %988 : vector<4x4xf32> to vector<1x4x4xf32>
    tpu.vector_store %arg6[%c0_296, %c0_297, %c0_298], %994 {strides = array<i32>} : memref<1x4x4xf32, #tpu.memory_space<vmem>>, vector<1x4x4xf32>,
    return
  }
  func.func @transform_0(%arg0: i32) -> (i32, i32, i32) {
    %c0_i32 = arith.constant 0 : i32
    %c0_i32_0 = arith.constant 0 : i32
    %c0_i32_1 = arith.constant 0 : i32
    return %arg0, %c0_i32, %c0_i32_0 : i32, i32, i32
  }
  func.func @transform_1(%arg0: i32) -> (i32, i32, i32) {
    %c0_i32 = arith.constant 0 : i32
    %c0_i32_0 = arith.constant 0 : i32
    %c0_i32_1 = arith.constant 0 : i32
    return %arg0, %c0_i32, %c0_i32_0 : i32, i32, i32
  }
  func.func @transform_2(%arg0: i32) -> (i32, i32) {
    %c0_i32 = arith.constant 0 : i32
    %c0_i32_0 = arith.constant 0 : i32
    %c0_i32_1 = arith.constant 0 : i32
    return %c0_i32, %c0_i32_0 : i32, i32
  }
  func.func @transform_3(%arg0: i32) -> (i32, i32) {
    %c0_i32 = arith.constant 0 : i32
    %c0_i32_0 = arith.constant 0 : i32
    %c0_i32_1 = arith.constant 0 : i32
    return %c0_i32, %c0_i32_0 : i32, i32
  }
  func.func @transform_4(%arg0: i32) -> (i32, i32, i32) {
    %c0_i32 = arith.constant 0 : i32
    %c0_i32_0 = arith.constant 0 : i32
    %c0_i32_1 = arith.constant 0 : i32
    return %arg0, %c0_i32, %c0_i32_0 : i32, i32, i32
  }
  func.func @transform_5(%arg0: i32) -> (i32, i32, i32) {
    %c0_i32 = arith.constant 0 : i32
    %c0_i32_0 = arith.constant 0 : i32
    %c0_i32_1 = arith.constant 0 : i32
    return %arg0, %c0_i32, %c0_i32_0 : i32, i32, i32
  }
}

</mosaic_0001>

<llo_original>
// kernel: tpu_custom_call.1
$region0: #{tpu_custom_call.1}
  #allocation0 [shape = 'u32[]', space=smem, size = 0x4, offset = 0x4, fixed_abs, tag = 'smem constant byte address 0x4 - core index']
  #allocation1 [shape = 'u32[72,128]{1,0:T(1,128)}', space=vmem, size = 0x9000, scoped, tag = 'internal scratch']
  %s0 = inlined_call_operand.vmem [shape: f32[2,96,128], index: 0, kind: input, shape index: {}]
  %s1 = inlined_call_operand.vmem [shape: s32[2,96,1], index: 1, kind: input, shape index: {}]
  %s2 = inlined_call_operand.hbm [shape: f32[8,128], index: 2, kind: input, shape index: {}]
  %s3 = inlined_call_operand.vmem [shape: f32[1,8], index: 3, kind: input, shape index: {}]
  %s4 = inlined_call_operand.hbm [shape: f32[2,4,4], index: 4, kind: output, shape index: {0}]
  %s5 = inlined_call_operand.hbm [shape: f32[2,4,4], index: 5, kind: output, shape index: {1}]
  %6 = xla_tuple %s4, %s5
  %s7 = sld [smem:[#allocation0]]
  $region61: #{tpu_custom_call.1} parent=0
    _
  %s9 = ssub.s32 1, %s7
  %s10 = scalar_select 0, %s9, %s7
  $region1: #{tpu_custom_call.1} parent=0
    #allocation2 [shape = 'u8[4096]{0}', space=vmem, size = 0x1000, scoped, tag = 'input window, operand 2, single buffered']
    #allocation3 [shape = 's32[2]{0}', space=sflag, size = 0x8, scoped, tag = 'scoped memory for tpu_custom_call.1']
    #allocation4 [shape = 's32[2]{0}', space=sflag, size = 0x8, scoped, tag = 'scoped memory for tpu_custom_call.1']
    #allocation5 [shape = 'u8[4096]{0}', space=vmem, size = 0x1000, scoped, tag = 'output window, operand 0']
    #allocation6 [shape = 'u8[4096]{0}', space=vmem, size = 0x1000, scoped, tag = 'output window, operand 1']
    #allocation7 [shape = 's32[2]{0}', space=sflag, size = 0x8, scoped, tag = 'scoped memory for tpu_custom_call.1']
    %11 = vsyncpa [#allocation3], 0
    %12 = vsyncpa [#allocation4], 0
    %s13 = scalar_lea.sflag [#allocation4], 1
    %14 = vsyncpa %s13, 0
    %15 = vsyncpa [#allocation7], 0
    %s16 = scalar_lea.sflag [#allocation7], 1
    %17 = vsyncpa %s16, 0
    loop: start=0, step=1, limit=4
    $region2: #{tpu_custom_call.1} parent=1 // loop_pre_header
      _
    $region3: #{tpu_custom_call.1} parent=1 // loop_header
      %s19 = sphi 0, %s23
      %p20 = scmp.ge.s32.totalorder %s19, 4
      %s29 = sphi 0, %s31
      %s32 = sphi 0, %s29
      %s33 = sphi 0, %s32
      %s49 = sphi 0, %s33
      %s55 = sphi 0, %s57
      %s58 = sphi 0, %s55
      %s59 = sphi 0, %s58
      %s75 = sphi 0, %s59
      %s79 = sphi 0, %s79
      %s81 = sphi 0, %s79
      %s82 = sphi 0, %s81
      %s96 = sphi 0, %s82
      %s100 = sphi 0, %s100
      %s102 = sphi 0, %s100
      %s103 = sphi 0, %s102
      %s117 = sphi 0, %s103
      %s123 = sphi 0, %s125
      %s126 = sphi 0, %s123
      %s127 = sphi 0, %s126
      %s143 = sphi 0, %s127
      %s149 = sphi 0, %s151
      %s152 = sphi 0, %s149
      %s153 = sphi 0, %s152
      %s169 = sphi 0, %s153
    $region4: #{tpu_custom_call.1} parent=1 // loop_header_branch
      %22 = sbr.rel (%p20) target = $region8
    $region5: #{tpu_custom_call.1} parent=1 // loop_body
      %s24 = ssub.s32 %s19, 1
      %s25 = ssub.s32 %s19, 2
      %s26 = sadd.s32 %s19, 1
      %s27 = ssub.s32 %s19, %s26
      %p28 = scmp.eq.s32.totalorder %s27, 0
      %s30 = sadd.s32 %s29, 1
      %s31 = scalar_select %p28, %s29, %s30
      %p34 = pneg %p28
      %p35 = scmp.eq.s32.totalorder %s19, 1
      %p36 = por %p34, %p35
      %p37 = scmp.ne.s32.totalorder %s29, %s32
      %p38 = scmp.eq.s32.totalorder %s19, 0
      %p39 = por %p37, %p38
      %p40 = scmp.ne.s32.totalorder %s29, %s32
      %p41 = scmp.eq.s32.totalorder %s24, 1
      %p42 = por %p40, %p41
      %p43 = scmp.ne.s32.totalorder %s32, %s33
      %p44 = scmp.eq.s32.totalorder %s24, 0
      %p45 = por %p43, %p44
      %p46 = scmp.ne.s32.totalorder %s32, %s33
      %p47 = scmp.eq.s32.totalorder %s25, 1
      %p48 = por %p46, %p47
      %p50 = scmp.ne.s32.totalorder %s33, %s49
      %p51 = scmp.eq.s32.totalorder %s25, 0
      %p52 = por %p50, %p51
      %s53 = ssub.s32 %s19, %s26
      %p54 = scmp.eq.s32.totalorder %s53, 0
      %s56 = sadd.s32 %s55, 1
      %s57 = scalar_select %p54, %s55, %s56
      %p60 = pneg %p54
      %p61 = scmp.eq.s32.totalorder %s19, 1
      %p62 = por %p60, %p61
      %p63 = scmp.ne.s32.totalorder %s55, %s58
      %p64 = scmp.eq.s32.totalorder %s19, 0
      %p65 = por %p63, %p64
      %p66 = scmp.ne.s32.totalorder %s55, %s58
      %p67 = scmp.eq.s32.totalorder %s24, 1
      %p68 = por %p66, %p67
      %p69 = scmp.ne.s32.totalorder %s58, %s59
      %p70 = scmp.eq.s32.totalorder %s24, 0
      %p71 = por %p69, %p70
      %p72 = scmp.ne.s32.totalorder %s58, %s59
      %p73 = scmp.eq.s32.totalorder %s25, 1
      %p74 = por %p72, %p73
      %p76 = scmp.ne.s32.totalorder %s59, %s75
      %p77 = scmp.eq.s32.totalorder %s25, 0
      %p78 = por %p76, %p77
      %s80 = sadd.s32 %s79, 1
      %p83 = scmp.eq.s32.totalorder %s19, 1
      %p84 = scmp.ne.s32.totalorder %s79, %s81
      %p85 = scmp.eq.s32.totalorder %s19, 0
      %p86 = por %p84, %p85
      %p87 = scmp.ne.s32.totalorder %s79, %s81
      %p88 = scmp.eq.s32.totalorder %s24, 1
      %p89 = por %p87, %p88
      %p90 = scmp.ne.s32.totalorder %s81, %s82
      %p91 = scmp.eq.s32.totalorder %s24, 0
      %p92 = por %p90, %p91
      %p93 = scmp.ne.s32.totalorder %s81, %s82
      %p94 = scmp.eq.s32.totalorder %s25, 1
      %p95 = por %p93, %p94
      %p97 = scmp.ne.s32.totalorder %s82, %s96
      %p98 = scmp.eq.s32.totalorder %s25, 0
      %p99 = por %p97, %p98
      %s101 = sadd.s32 %s100, 1
      %p104 = scmp.eq.s32.totalorder %s19, 1
      %p105 = scmp.ne.s32.totalorder %s100, %s102
      %p106 = scmp.eq.s32.totalorder %s19, 0
      %p107 = por %p105, %p106
      %p108 = scmp.ne.s32.totalorder %s100, %s102
      %p109 = scmp.eq.s32.totalorder %s24, 1
      %p110 = por %p108, %p109
      %p111 = scmp.ne.s32.totalorder %s102, %s103
      %p112 = scmp.eq.s32.totalorder %s24, 0
      %p113 = por %p111, %p112
      %p114 = scmp.ne.s32.totalorder %s102, %s103
      %p115 = scmp.eq.s32.totalorder %s25, 1
      %p116 = por %p114, %p115
      %p118 = scmp.ne.s32.totalorder %s103, %s117
      %p119 = scmp.eq.s32.totalorder %s25, 0
      %p120 = por %p118, %p119
      %s121 = ssub.s32 %s19, %s26
      %p122 = scmp.eq.s32.totalorder %s121, 0
      %s124 = sadd.s32 %s123, 1
      %s125 = scalar_select %p122, %s123, %s124
      %p128 = pneg %p122
      %p129 = scmp.eq.s32.totalorder %s19, 1
      %p130 = por %p128, %p129
      %p131 = scmp.ne.s32.totalorder %s123, %s126
      %p132 = scmp.eq.s32.totalorder %s19, 0
      %p133 = por %p131, %p132
      %p134 = scmp.ne.s32.totalorder %s123, %s126
      %p135 = scmp.eq.s32.totalorder %s24, 1
      %p136 = por %p134, %p135
      %p137 = scmp.ne.s32.totalorder %s126, %s127
      %p138 = scmp.eq.s32.totalorder %s24, 0
      %p139 = por %p137, %p138
      %p140 = scmp.ne.s32.totalorder %s126, %s127
      %p141 = scmp.eq.s32.totalorder %s25, 1
      %p142 = por %p140, %p141
      %p144 = scmp.ne.s32.totalorder %s127, %s143
      %p145 = scmp.eq.s32.totalorder %s25, 0
      %p146 = por %p144, %p145
      %s147 = ssub.s32 %s19, %s26
      %p148 = scmp.eq.s32.totalorder %s147, 0
      %s150 = sadd.s32 %s149, 1
      %s151 = scalar_select %p148, %s149, %s150
      %p154 = pneg %p148
      %p155 = scmp.eq.s32.totalorder %s19, 1
      %p156 = por %p154, %p155
      %p157 = scmp.ne.s32.totalorder %s149, %s152
      %p158 = scmp.eq.s32.totalorder %s19, 0
      %p159 = por %p157, %p158
      %p160 = scmp.ne.s32.totalorder %s149, %s152
      %p161 = scmp.eq.s32.totalorder %s24, 1
      %p162 = por %p160, %p161
      %p163 = scmp.ne.s32.totalorder %s152, %s153
      %p164 = scmp.eq.s32.totalorder %s24, 0
      %p165 = por %p163, %p164
      %p166 = scmp.ne.s32.totalorder %s152, %s153
      %p167 = scmp.eq.s32.totalorder %s25, 1
      %p168 = por %p166, %p167
      %p170 = scmp.ne.s32.totalorder %s153, %s169
      %p171 = scmp.eq.s32.totalorder %s25, 0
      %p172 = por %p170, %p171
      %p173 = scmp.le.s32.totalorder 1, %s19
      %p174 = scmp.lt.s32.totalorder %s19, 3
      %p175 = pnand %p173, %p174
      %p176 = pneg %p175
      // Predicated region
      $region9: #{tpu_custom_call.1} parent=5 // pred_check
        _
      $region10: #{tpu_custom_call.1} parent=5 // pred_check_branch
        %178 = sbr.rel (%p175) target = $region12
      $region11: #{tpu_custom_call.1} parent=5 // pred_region
        %s179 = ssub.s32 %s19, 1
        // Predicated region
        $region13: #{tpu_custom_call.1} parent=11 // pred_check
          %p180 = pneg %p92
        $region14: #{tpu_custom_call.1} parent=11 // pred_check_branch
          %182 = sbr.rel (%p180) target = $region16
        $region15: #{tpu_custom_call.1} parent=11 // pred_region
          %184 = vsyncadd [#allocation3], 0
          %s186 = sshll.u32 %s2, 4
          %s187 = int_to_ptr.hbm [resolvable:$true] %s186
          %s188 = sshll.u32 [#allocation2], 4
          %s189 = int_to_ptr.vmem [resolvable:$true] %s188
          %191 = dma.hbm_to_vmem [thread:$0]  %s187, 128, %s189, [#allocation3]
        $region16: #{tpu_custom_call.1} parent=11 // pred_fallthru
          _
        // Predicated region
        $region17: #{tpu_custom_call.1} parent=11 // pred_check
          %p192 = pneg %p113
        $region18: #{tpu_custom_call.1} parent=11 // pred_check_branch
          %194 = sbr.rel (%p192) target = $region20
        $region19: #{tpu_custom_call.1} parent=11 // pred_region
          _
        $region20: #{tpu_custom_call.1} parent=11 // pred_fallthru
          _
      $region12: #{tpu_custom_call.1} parent=5 // pred_fallthru
        _
      %p195 = scmp.lt.s32.totalorder %s19, 2
      // Predicated region
      $region21: #{tpu_custom_call.1} parent=5 // pred_check
        %p196 = pneg %p195
      $region22: #{tpu_custom_call.1} parent=5 // pred_check_branch
        %198 = sbr.rel (%p196) target = $region24
      $region23: #{tpu_custom_call.1} parent=5 // pred_region
        // Predicated region
        $region25: #{tpu_custom_call.1} parent=23 // pred_check
          %p199 = pneg %p39
        $region26: #{tpu_custom_call.1} parent=23 // pred_check_branch
          %201 = sbr.rel (%p199) target = $region28
        $region27: #{tpu_custom_call.1} parent=23 // pred_region
          %p202 = scmp.lt.s32.totalorder %s19, 1
          %s203 = scalar_select %p202, %s19, 1
          %s204 = smul.addr %s203, 12
          %s205 = smul.addr %s204, 8
          %s206 = scalar_lea.vmem %s0, %s205
        $region28: #{tpu_custom_call.1} parent=23 // pred_fallthru
          _
        // Predicated region
        $region29: #{tpu_custom_call.1} parent=23 // pred_check
          %p207 = pneg %p65
        $region30: #{tpu_custom_call.1} parent=23 // pred_check_branch
          %209 = sbr.rel (%p207) target = $region32
        $region31: #{tpu_custom_call.1} parent=23 // pred_region
          %p210 = scmp.lt.s32.totalorder %s19, 1
          %s211 = scalar_select %p210, %s19, 1
          %s212 = smul.addr %s211, 12
          %s213 = smul.addr %s212, 8
          %s214 = scalar_lea.vmem %s1, %s213
        $region32: #{tpu_custom_call.1} parent=23 // pred_fallthru
          _
      $region24: #{tpu_custom_call.1} parent=5 // pred_fallthru
        _
      %p215 = scmp.le.s32.totalorder 1, %s19
      %p216 = scmp.lt.s32.totalorder %s19, 3
      %p217 = pnand %p215, %p216
      %p218 = pneg %p217
      // Predicated region
      $region33: #{tpu_custom_call.1} parent=5 // pred_check
        _
      $region34: #{tpu_custom_call.1} parent=5 // pred_check_branch
        %220 = sbr.rel (%p217) target = $region36
      $region35: #{tpu_custom_call.1} parent=5 // pred_region
        %s221 = ssub.s32 %s19, 1
        // Predicated region
        $region37: #{tpu_custom_call.1} parent=35 // pred_check
          %p222 = pneg %p92
        $region38: #{tpu_custom_call.1} parent=35 // pred_check_branch
          %224 = sbr.rel (%p222) target = $region40
        $region39: #{tpu_custom_call.1} parent=35 // pred_region
          %226 = dma.done [#allocation3], 128
        $region40: #{tpu_custom_call.1} parent=35 // pred_fallthru
          _
        %p227 = scmp.lt.s32.totalorder %s24, 1
        %s228 = scalar_select %p227, %s24, 1
        %s229 = smul.addr %s228, 12
        %s230 = smul.addr %s229, 8
        %s231 = scalar_lea.vmem %s0, %s230
        %p232 = pneg %p45
        %p233 = pneg %p42
        %p234 = scmp.lt.s32.totalorder %s24, 1
        %s235 = scalar_select %p234, %s24, 1
        %s236 = smul.addr %s235, 12
        %s237 = smul.addr %s236, 8
        %s238 = scalar_lea.vmem %s1, %s237
        %p239 = pneg %p71
        %p240 = pneg %p68
        %p241 = pneg %p92
        %p242 = pneg %p89
        %p243 = pneg %p113
        %p244 = pneg %p110
        %p245 = pneg %p139
        %p246 = pneg %p136
        %s247 = sand.u32 %s126, 1
        %s248 = scalar_lea.sflag [#allocation4], %s247
        %s249 = sand.u32 %s126, 1
        %s250 = smul.addr %s249, 4
        %s251 = scalar_lea.vmem [#allocation5], %s250
        %p252 = pneg %p165
        %p253 = pneg %p162
        %s254 = sand.u32 %s152, 1
        %s255 = scalar_lea.sflag [#allocation7], %s254
        %s256 = sand.u32 %s152, 1
        %s257 = smul.addr %s256, 4
        %s258 = scalar_lea.vmem [#allocation6], %s257
        %p259 = scmp.lt.s32.totalorder %s24, 1
        %s260 = scalar_select %p259, %s24, 1
        %s261 = smul.addr %s260, 12
        %s262 = smul.addr %s261, 8
        %s263 = scalar_lea.vmem %s0, %s262
        %p264 = scmp.lt.s32.totalorder %s24, 1
        %s265 = scalar_select %p264, %s24, 1
        %s266 = smul.addr %s265, 12
        %s267 = smul.addr %s266, 8
        %s268 = scalar_lea.vmem %s1, %s267
        %v269 = vld [vmem:[%s263] sm:$0xff]
        %v270 = vld [vmem:[%s263 + $0x8] sm:$0xff]
        %v271 = vld [vmem:[%s263 + $0x10] sm:$0xff]
        %v272 = vld [vmem:[%s263 + $0x18] sm:$0xff]
        %v273 = vld [vmem:[%s263 + $0x20] sm:$0xff]
        %v274 = vld [vmem:[%s263 + $0x28] sm:$0xff]
        %v275 = vld [vmem:[%s263 + $0x30] sm:$0xff]
        %v276 = vld [vmem:[%s263 + $0x38] sm:$0xff]
        %v277 = vld [vmem:[%s263 + $0x40] sm:$0xff]
        %v278 = vld [vmem:[%s263 + $0x48] sm:$0xff]
        %v279 = vld [vmem:[%s263 + $0x50] sm:$0xff]
        %v280 = vld [vmem:[%s263 + $0x58] sm:$0xff]
        %v281 = vld [vmem:[%s268] sm:$0xff]
        %v282 = vld [vmem:[%s268 + $0x8] sm:$0xff]
        %v283 = vld [vmem:[%s268 + $0x10] sm:$0xff]
        %v284 = vld [vmem:[%s268 + $0x18] sm:$0xff]
        %v285 = vld [vmem:[%s268 + $0x20] sm:$0xff]
        %v286 = vld [vmem:[%s268 + $0x28] sm:$0xff]
        %v287 = vld [vmem:[%s268 + $0x30] sm:$0xff]
        %v288 = vld [vmem:[%s268 + $0x38] sm:$0xff]
        %v289 = vld [vmem:[%s268 + $0x40] sm:$0xff]
        %v290 = vld [vmem:[%s268 + $0x48] sm:$0xff]
        %v291 = vld [vmem:[%s268 + $0x50] sm:$0xff]
        %v292 = vld [vmem:[%s268 + $0x58] sm:$0xff]
        %v293 = vld [vmem:[#allocation2] sm:$0xff]
        %v294 = vld [vmem:[%s3] sm:$0x1]
        %v295 = vlaneseq
        %v296 = vand.u32 %v295, 127
        %297 = vset.pattern.permute.xlu0 0
        %298 = vperm.xlu0 %297, %v281
        %v299 = vpop.permute.xlu0 %298
        %300 = vset.pattern.permute.xlu0 0
        %301 = vperm.xlu0 %300, %v282
        %v302 = vpop.permute.xlu0 %301
        %303 = vset.pattern.permute.xlu0 0
        %304 = vperm.xlu0 %303, %v283
        %v305 = vpop.permute.xlu0 %304
        %306 = vset.pattern.permute.xlu0 0
        %307 = vperm.xlu0 %306, %v284
        %v308 = vpop.permute.xlu0 %307
        %309 = vset.pattern.permute.xlu0 0
        %310 = vperm.xlu0 %309, %v285
        %v311 = vpop.permute.xlu0 %310
        %312 = vset.pattern.permute.xlu0 0
        %313 = vperm.xlu0 %312, %v286
        %v314 = vpop.permute.xlu0 %313
        %315 = vset.pattern.permute.xlu0 0
        %316 = vperm.xlu0 %315, %v287
        %v317 = vpop.permute.xlu0 %316
        %318 = vset.pattern.permute.xlu0 0
        %319 = vperm.xlu0 %318, %v288
        %v320 = vpop.permute.xlu0 %319
        %321 = vset.pattern.permute.xlu0 0
        %322 = vperm.xlu0 %321, %v289
        %v323 = vpop.permute.xlu0 %322
        %324 = vset.pattern.permute.xlu0 0
        %325 = vperm.xlu0 %324, %v290
        %v326 = vpop.permute.xlu0 %325
        %327 = vset.pattern.permute.xlu0 0
        %328 = vperm.xlu0 %327, %v291
        %v329 = vpop.permute.xlu0 %328
        %330 = vset.pattern.permute.xlu0 0
        %331 = vperm.xlu0 %330, %v292
        %v332 = vpop.permute.xlu0 %331
        %vm333 = vcmp.eq.s32.totalorder %v299, %v296
        %vm334 = vcmp.eq.s32.totalorder %v302, %v296
        %vm335 = vcmp.eq.s32.totalorder %v305, %v296
        %vm336 = vcmp.eq.s32.totalorder %v308, %v296
        %vm337 = vcmp.eq.s32.totalorder %v311, %v296
        %vm338 = vcmp.eq.s32.totalorder %v314, %v296
        %vm339 = vcmp.eq.s32.totalorder %v317, %v296
        %vm340 = vcmp.eq.s32.totalorder %v320, %v296
        %vm341 = vcmp.eq.s32.totalorder %v323, %v296
        %vm342 = vcmp.eq.s32.totalorder %v326, %v296
        %vm343 = vcmp.eq.s32.totalorder %v329, %v296
        %vm344 = vcmp.eq.s32.totalorder %v332, %v296
        %v345 = vsel %vm333, 1, 0
        %v346 = vsel %vm334, 1, 0
        %v347 = vsel %vm335, 1, 0
        %v348 = vsel %vm336, 1, 0
        %v349 = vsel %vm337, 1, 0
        %v350 = vsel %vm338, 1, 0
        %v351 = vsel %vm339, 1, 0
        %v352 = vsel %vm340, 1, 0
        %v353 = vsel %vm341, 1, 0
        %v354 = vsel %vm342, 1, 0
        %v355 = vsel %vm343, 1, 0
        %v356 = vsel %vm344, 1, 0
        %v357 = vcvt.s32.f32 %v345
        %v358 = vcvt.s32.f32 %v346
        %v359 = vcvt.s32.f32 %v347
        %v360 = vcvt.s32.f32 %v348
        %v361 = vcvt.s32.f32 %v349
        %v362 = vcvt.s32.f32 %v350
        %v363 = vcvt.s32.f32 %v351
        %v364 = vcvt.s32.f32 %v352
        %v365 = vcvt.s32.f32 %v353
        %v366 = vcvt.s32.f32 %v354
        %v367 = vcvt.s32.f32 %v355
        %v368 = vcvt.s32.f32 %v356
        %v370 = vperm.slane %v294, 0
        %372 = vmatpush.xpose.msra.mxu0 0.0
        %373 = vmatpush.xpose.msra.mxu0 0.0
        %374 = vmatpush.xpose.msra.mxu0 0.0
        %375 = vmatpush.xpose.msra.mxu0 0.0
        %376 = vmatpush.xpose.msra.mxu0 0.0
        %377 = vmatpush.xpose.msra.mxu0 0.0
        %378 = vmatpush.xpose.msra.mxu0 0.0
        %379 = vmatpush.xpose.msra.mxu0 0.0
        %380 = vmatpush.xpose.msra.mxu0 0.0
        %381 = vmatpush.xpose.msra.mxu0 0.0
        %382 = vmatpush.xpose.msra.mxu0 0.0
        %383 = vmatpush.xpose.msra.mxu0 0.0
        %384 = vmatpush.xpose.msra.mxu0 0.0
        %385 = vmatpush.xpose.msra.mxu0 0.0
        %386 = vmatpush.xpose.msra.mxu0 0.0
        %387 = vmatpush.xpose.msra.mxu0 %v293
        %388 = vmatmul.f32.gmra.mxu0 %v269
        %v389 = vpop.f32.mrf.mxu0
        %v390 = vadd.f32 %v370, %v389
        %391 = vmatmul.f32.gmra.mxu0 %v270
        %v392 = vpop.f32.mrf.mxu0
        %v393 = vadd.f32 %v370, %v392
        %394 = vmatmul.f32.gmra.mxu0 %v271
        %v395 = vpop.f32.mrf.mxu0
        %v396 = vadd.f32 %v370, %v395
        %397 = vmatmul.f32.gmra.mxu0 %v272
        %v398 = vpop.f32.mrf.mxu0
        %v399 = vadd.f32 %v370, %v398
        %400 = vmatmul.f32.gmra.mxu0 %v273
        %v401 = vpop.f32.mrf.mxu0
        %v402 = vadd.f32 %v370, %v401
        %403 = vmatmul.f32.gmra.mxu0 %v274
        %v404 = vpop.f32.mrf.mxu0
        %v405 = vadd.f32 %v370, %v404
        %406 = vmatmul.f32.gmra.mxu0 %v275
        %v407 = vpop.f32.mrf.mxu0
        %v408 = vadd.f32 %v370, %v407
        %409 = vmatmul.f32.gmra.mxu0 %v276
        %v410 = vpop.f32.mrf.mxu0
        %v411 = vadd.f32 %v370, %v410
        %412 = vmatmul.f32.gmra.mxu0 %v277
        %v413 = vpop.f32.mrf.mxu0
        %v414 = vadd.f32 %v370, %v413
        %415 = vmatmul.f32.gmra.mxu0 %v278
        %v416 = vpop.f32.mrf.mxu0
        %v417 = vadd.f32 %v370, %v416
        %418 = vmatmul.f32.gmra.mxu0 %v279
        %v419 = vpop.f32.mrf.mxu0
        %v420 = vadd.f32 %v370, %v419
        %421 = vmatmul.f32.gmra.mxu0 %v280
        %v422 = vpop.f32.mrf.mxu0
        %v423 = vadd.f32 %v370, %v422
        %424 = vdwg.mxu0
        %vm425 = vcmask 64512
        %v426 = vsel %vm425, %v390, -inf
        %427 = vmax.xlane.f32.xlu0 %v426
        %v428 = vpop.xlane.xlu0 %427
        %v429 = vsel %vm425, %v393, -inf
        %430 = vmax.xlane.f32.xlu0 %v429
        %v431 = vpop.xlane.xlu0 %430
        %v432 = vsel %vm425, %v396, -inf
        %433 = vmax.xlane.f32.xlu0 %v432
        %v434 = vpop.xlane.xlu0 %433
        %v435 = vsel %vm425, %v399, -inf
        %436 = vmax.xlane.f32.xlu0 %v435
        %v437 = vpop.xlane.xlu0 %436
        %v438 = vsel %vm425, %v402, -inf
        %439 = vmax.xlane.f32.xlu0 %v438
        %v440 = vpop.xlane.xlu0 %439
        %v441 = vsel %vm425, %v405, -inf
        %442 = vmax.xlane.f32.xlu0 %v441
        %v443 = vpop.xlane.xlu0 %442
        %v444 = vsel %vm425, %v408, -inf
        %445 = vmax.xlane.f32.xlu0 %v444
        %v446 = vpop.xlane.xlu0 %445
        %v447 = vsel %vm425, %v411, -inf
        %448 = vmax.xlane.f32.xlu0 %v447
        %v449 = vpop.xlane.xlu0 %448
        %v450 = vsel %vm425, %v414, -inf
        %451 = vmax.xlane.f32.xlu0 %v450
        %v452 = vpop.xlane.xlu0 %451
        %v453 = vsel %vm425, %v417, -inf
        %454 = vmax.xlane.f32.xlu0 %v453
        %v455 = vpop.xlane.xlu0 %454
        %v456 = vsel %vm425, %v420, -inf
        %457 = vmax.xlane.f32.xlu0 %v456
        %v458 = vpop.xlane.xlu0 %457
        %v459 = vsel %vm425, %v423, -inf
        %460 = vmax.xlane.f32.xlu0 %v459
        %v461 = vpop.xlane.xlu0 %460
        %v462 = vsub.f32 %v390, %v428
        %v463 = vsub.f32 %v393, %v431
        %v464 = vsub.f32 %v396, %v434
        %v465 = vsub.f32 %v399, %v437
        %v466 = vsub.f32 %v402, %v440
        %v467 = vsub.f32 %v405, %v443
        %v468 = vsub.f32 %v408, %v446
        %v469 = vsub.f32 %v411, %v449
        %v470 = vsub.f32 %v414, %v452
        %v471 = vsub.f32 %v417, %v455
        %v472 = vsub.f32 %v420, %v458
        %v473 = vsub.f32 %v423, %v461
        %v474 = vmul.f32 %v462, 1.442695
        %v475 = vpow.pop %v474
        %v476 = vmul.f32 %v463, 1.442695
        %v477 = vpow.pop %v476
        %v478 = vmul.f32 %v464, 1.442695
        %v479 = vpow.pop %v478
        %v480 = vmul.f32 %v465, 1.442695
        %v481 = vpow.pop %v480
        %v482 = vmul.f32 %v466, 1.442695
        %v483 = vpow.pop %v482
        %v484 = vmul.f32 %v467, 1.442695
        %v485 = vpow.pop %v484
        %v486 = vmul.f32 %v468, 1.442695
        %v487 = vpow.pop %v486
        %v488 = vmul.f32 %v469, 1.442695
        %v489 = vpow.pop %v488
        %v490 = vmul.f32 %v470, 1.442695
        %v491 = vpow.pop %v490
        %v492 = vmul.f32 %v471, 1.442695
        %v493 = vpow.pop %v492
        %v494 = vmul.f32 %v472, 1.442695
        %v495 = vpow.pop %v494
        %v496 = vmul.f32 %v473, 1.442695
        %v497 = vpow.pop %v496
        %v498 = vsel %vm425, %v475, 0.0
        %499 = vadd.xlane.f32.xlu0 %v498
        %v500 = vpop.xlane.xlu0 %499
        %v501 = vsel %vm425, %v477, 0.0
        %502 = vadd.xlane.f32.xlu0 %v501
        %v503 = vpop.xlane.xlu0 %502
        %v504 = vsel %vm425, %v479, 0.0
        %505 = vadd.xlane.f32.xlu0 %v504
        %v506 = vpop.xlane.xlu0 %505
        %v507 = vsel %vm425, %v481, 0.0
        %508 = vadd.xlane.f32.xlu0 %v507
        %v509 = vpop.xlane.xlu0 %508
        %v510 = vsel %vm425, %v483, 0.0
        %511 = vadd.xlane.f32.xlu0 %v510
        %v512 = vpop.xlane.xlu0 %511
        %v513 = vsel %vm425, %v485, 0.0
        %514 = vadd.xlane.f32.xlu0 %v513
        %v515 = vpop.xlane.xlu0 %514
        %v516 = vsel %vm425, %v487, 0.0
        %517 = vadd.xlane.f32.xlu0 %v516
        %v518 = vpop.xlane.xlu0 %517
        %v519 = vsel %vm425, %v489, 0.0
        %520 = vadd.xlane.f32.xlu0 %v519
        %v521 = vpop.xlane.xlu0 %520
        %v522 = vsel %vm425, %v491, 0.0
        %523 = vadd.xlane.f32.xlu0 %v522
        %v524 = vpop.xlane.xlu0 %523
        %v525 = vsel %vm425, %v493, 0.0
        %526 = vadd.xlane.f32.xlu0 %v525
        %v527 = vpop.xlane.xlu0 %526
        %v528 = vsel %vm425, %v495, 0.0
        %529 = vadd.xlane.f32.xlu0 %v528
        %v530 = vpop.xlane.xlu0 %529
        %v531 = vsel %vm425, %v497, 0.0
        %532 = vadd.xlane.f32.xlu0 %v531
        %v533 = vpop.xlane.xlu0 %532
        %v534 = vrcp.pop %v500
        %v535 = vmul.f32 %v500, %v534
        %v536 = vsub.f32 1.0, %v535
        %v537 = vmul.f32 %v534, %v536
        %v538 = vadd.f32 %v534, %v537
        %vm539 = vweird.f32 %v500
        %vm540 = vweird.f32 %v534
        %vm541 = vmor %vm539, %vm540
        %v542 = vsel %vm541, %v534, %v538
        %v543 = vand.u32 2147483647, %v500
        %vm544 = vcmp.eq.f32.partialorder %v543, 8.507059e+37
        %v545 = vand.u32 %v500, 2147483648
        %v546 = vor.u32 1.1754944e-38, %v545
        %v547 = vsel %vm544, %v546, %v542
        %v548 = vmul.f32 %v475, %v547
        %v549 = vrcp.pop %v509
        %v550 = vmul.f32 %v509, %v549
        %v551 = vsub.f32 1.0, %v550
        %v552 = vmul.f32 %v549, %v551
        %v553 = vadd.f32 %v549, %v552
        %vm554 = vweird.f32 %v509
        %vm555 = vweird.f32 %v549
        %vm556 = vmor %vm554, %vm555
        %v557 = vsel %vm556, %v549, %v553
        %v558 = vand.u32 2147483647, %v509
        %vm559 = vcmp.eq.f32.partialorder %v558, 8.507059e+37
        %v560 = vand.u32 %v509, 2147483648
        %v561 = vor.u32 1.1754944e-38, %v560
        %v562 = vsel %vm559, %v561, %v557
        %v563 = vmul.f32 %v481, %v562
        %v564 = vrcp.pop %v518
        %v565 = vmul.f32 %v518, %v564
        %v566 = vsub.f32 1.0, %v565
        %v567 = vmul.f32 %v564, %v566
        %v568 = vadd.f32 %v564, %v567
        %vm569 = vweird.f32 %v518
        %vm570 = vweird.f32 %v564
        %vm571 = vmor %vm569, %vm570
        %v572 = vsel %vm571, %v564, %v568
        %v573 = vand.u32 2147483647, %v518
        %vm574 = vcmp.eq.f32.partialorder %v573, 8.507059e+37
        %v575 = vand.u32 %v518, 2147483648
        %v576 = vor.u32 1.1754944e-38, %v575
        %v577 = vsel %vm574, %v576, %v572
        %v578 = vmul.f32 %v487, %v577
        %v579 = vrcp.pop %v527
        %v580 = vmul.f32 %v527, %v579
        %v581 = vsub.f32 1.0, %v580
        %v582 = vmul.f32 %v579, %v581
        %v583 = vadd.f32 %v579, %v582
        %vm584 = vweird.f32 %v527
        %vm585 = vweird.f32 %v579
        %vm586 = vmor %vm584, %vm585
        %v587 = vsel %vm586, %v579, %v583
        %v588 = vand.u32 2147483647, %v527
        %vm589 = vcmp.eq.f32.partialorder %v588, 8.507059e+37
        %v590 = vand.u32 %v527, 2147483648
        %v591 = vor.u32 1.1754944e-38, %v590
        %v592 = vsel %vm589, %v591, %v587
        %v593 = vmul.f32 %v493, %v592
        %v594 = vlog2.pop %v503
        %v595 = vmul.f32 %v594, 0.6931472
        %v596 = vlog2.pop %v506
        %v597 = vmul.f32 %v596, 0.6931472
        %v598 = vlog2.pop %v512
        %v599 = vmul.f32 %v598, 0.6931472
        %v600 = vlog2.pop %v515
        %v601 = vmul.f32 %v600, 0.6931472
        %v602 = vlog2.pop %v521
        %v603 = vmul.f32 %v602, 0.6931472
        %v604 = vlog2.pop %v524
        %v605 = vmul.f32 %v604, 0.6931472
        %v606 = vlog2.pop %v530
        %v607 = vmul.f32 %v606, 0.6931472
        %v608 = vlog2.pop %v533
        %v609 = vmul.f32 %v608, 0.6931472
        %v610 = vadd.f32 %v431, %v595
        %v611 = vadd.f32 %v434, %v597
        %v612 = vadd.f32 %v440, %v599
        %v613 = vadd.f32 %v443, %v601
        %v614 = vadd.f32 %v449, %v603
        %v615 = vadd.f32 %v452, %v605
        %v616 = vadd.f32 %v458, %v607
        %v617 = vadd.f32 %v461, %v609
        %v618 = vmul.f32 %v393, %v358
        %v619 = vmul.f32 %v396, %v359
        %v620 = vmul.f32 %v402, %v361
        %v621 = vmul.f32 %v405, %v362
        %v622 = vmul.f32 %v411, %v364
        %v623 = vmul.f32 %v414, %v365
        %v624 = vmul.f32 %v420, %v367
        %v625 = vmul.f32 %v423, %v368
        %v626 = vsel %vm425, %v618, 0.0
        %627 = vadd.xlane.f32.xlu0 %v626
        %v628 = vpop.xlane.xlu0 %627
        %v629 = vsel %vm425, %v619, 0.0
        %630 = vadd.xlane.f32.xlu0 %v629
        %v631 = vpop.xlane.xlu0 %630
        %v632 = vsel %vm425, %v620, 0.0
        %633 = vadd.xlane.f32.xlu0 %v632
        %v634 = vpop.xlane.xlu0 %633
        %v635 = vsel %vm425, %v621, 0.0
        %636 = vadd.xlane.f32.xlu0 %v635
        %v637 = vpop.xlane.xlu0 %636
        %v638 = vsel %vm425, %v622, 0.0
        %639 = vadd.xlane.f32.xlu0 %v638
        %v640 = vpop.xlane.xlu0 %639
        %v641 = vsel %vm425, %v623, 0.0
        %642 = vadd.xlane.f32.xlu0 %v641
        %v643 = vpop.xlane.xlu0 %642
        %v644 = vsel %vm425, %v624, 0.0
        %645 = vadd.xlane.f32.xlu0 %v644
        %v646 = vpop.xlane.xlu0 %645
        %v647 = vsel %vm425, %v625, 0.0
        %648 = vadd.xlane.f32.xlu0 %v647
        %v649 = vpop.xlane.xlu0 %648
        %v650 = vsub.f32 %v610, %v628
        %v651 = vsub.f32 %v611, %v631
        %v652 = vsub.f32 %v612, %v634
        %v653 = vsub.f32 %v613, %v637
        %v654 = vsub.f32 %v614, %v640
        %v655 = vsub.f32 %v615, %v643
        %v656 = vsub.f32 %v616, %v646
        %v657 = vsub.f32 %v617, %v649
        %vm658 = vcmp.ge.f32.partialorder %v393, %v431
        %vm659 = vcmp.ge.f32.partialorder %v396, %v434
        %vm660 = vcmp.ge.f32.partialorder %v402, %v440
        %vm661 = vcmp.ge.f32.partialorder %v405, %v443
        %vm662 = vcmp.ge.f32.partialorder %v411, %v449
        %vm663 = vcmp.ge.f32.partialorder %v414, %v452
        %vm664 = vcmp.ge.f32.partialorder %v420, %v458
        %vm665 = vcmp.ge.f32.partialorder %v423, %v461
        %v666 = vsel %vm658, %v296, 8
        %v667 = vsel %vm659, %v296, 8
        %v668 = vsel %vm660, %v296, 8
        %v669 = vsel %vm661, %v296, 8
        %v670 = vsel %vm662, %v296, 8
        %v671 = vsel %vm663, %v296, 8
        %v672 = vsel %vm664, %v296, 8
        %v673 = vsel %vm665, %v296, 8
        %v674 = vsel %vm425, %v666, 2147483647
        %v675 = vand.u32 %v674, 65535
        %v676 = vshra.s32 %v674, 16
        %v677 = vcvt.s32.f32 %v675
        %v678 = vcvt.s32.f32 %v676
        %679 = vmin.xlane.f32.xlu0 %v678
        %v680 = vpop.xlane.xlu0 %679
        %vm681 = vcmp.eq.f32.partialorder %v678, %v680
        %v682 = vsel %vm681, %v677, inf
        %683 = vmin.xlane.f32.xlu0 %v682
        %v684 = vpop.xlane.xlu0 %683
        %v685 = vcvt.f32.s32 %v684
        %v686 = vcvt.f32.s32 %v680
        %v687 = vshll.u32 %v686, 16
        %v688 = vadd.s32 %v687, %v685
        %v689 = vsel %vm425, %v667, 2147483647
        %v690 = vand.u32 %v689, 65535
        %v691 = vshra.s32 %v689, 16
        %v692 = vcvt.s32.f32 %v690
        %v693 = vcvt.s32.f32 %v691
        %694 = vmin.xlane.f32.xlu0 %v693
        %v695 = vpop.xlane.xlu0 %694
        %vm696 = vcmp.eq.f32.partialorder %v693, %v695
        %v697 = vsel %vm696, %v692, inf
        %698 = vmin.xlane.f32.xlu0 %v697
        %v699 = vpop.xlane.xlu0 %698
        %v700 = vcvt.f32.s32 %v699
        %v701 = vcvt.f32.s32 %v695
        %v702 = vshll.u32 %v701, 16
        %v703 = vadd.s32 %v702, %v700
        %v704 = vsel %vm425, %v668, 2147483647
        %v705 = vand.u32 %v704, 65535
        %v706 = vshra.s32 %v704, 16
        %v707 = vcvt.s32.f32 %v705
        %v708 = vcvt.s32.f32 %v706
        %709 = vmin.xlane.f32.xlu0 %v708
        %v710 = vpop.xlane.xlu0 %709
        %vm711 = vcmp.eq.f32.partialorder %v708, %v710
        %v712 = vsel %vm711, %v707, inf
        %713 = vmin.xlane.f32.xlu0 %v712
        %v714 = vpop.xlane.xlu0 %713
        %v715 = vcvt.f32.s32 %v714
        %v716 = vcvt.f32.s32 %v710
        %v717 = vshll.u32 %v716, 16
        %v718 = vadd.s32 %v717, %v715
        %v719 = vsel %vm425, %v669, 2147483647
        %v720 = vand.u32 %v719, 65535
        %v721 = vshra.s32 %v719, 16
        %v722 = vcvt.s32.f32 %v720
        %v723 = vcvt.s32.f32 %v721
        %724 = vmin.xlane.f32.xlu0 %v723
        %v725 = vpop.xlane.xlu0 %724
        %vm726 = vcmp.eq.f32.partialorder %v723, %v725
        %v727 = vsel %vm726, %v722, inf
        %728 = vmin.xlane.f32.xlu0 %v727
        %v729 = vpop.xlane.xlu0 %728
        %v730 = vcvt.f32.s32 %v729
        %v731 = vcvt.f32.s32 %v725
        %v732 = vshll.u32 %v731, 16
        %v733 = vadd.s32 %v732, %v730
        %v734 = vsel %vm425, %v670, 2147483647
        %v735 = vand.u32 %v734, 65535
        %v736 = vshra.s32 %v734, 16
        %v737 = vcvt.s32.f32 %v735
        %v738 = vcvt.s32.f32 %v736
        %739 = vmin.xlane.f32.xlu0 %v738
        %v740 = vpop.xlane.xlu0 %739
        %vm741 = vcmp.eq.f32.partialorder %v738, %v740
        %v742 = vsel %vm741, %v737, inf
        %743 = vmin.xlane.f32.xlu0 %v742
        %v744 = vpop.xlane.xlu0 %743
        %v745 = vcvt.f32.s32 %v744
        %v746 = vcvt.f32.s32 %v740
        %v747 = vshll.u32 %v746, 16
        %v748 = vadd.s32 %v747, %v745
        %v749 = vsel %vm425, %v671, 2147483647
        %v750 = vand.u32 %v749, 65535
        %v751 = vshra.s32 %v749, 16
        %v752 = vcvt.s32.f32 %v750
        %v753 = vcvt.s32.f32 %v751
        %754 = vmin.xlane.f32.xlu0 %v753
        %v755 = vpop.xlane.xlu0 %754
        %vm756 = vcmp.eq.f32.partialorder %v753, %v755
        %v757 = vsel %vm756, %v752, inf
        %758 = vmin.xlane.f32.xlu0 %v757
        %v759 = vpop.xlane.xlu0 %758
        %v760 = vcvt.f32.s32 %v759
        %v761 = vcvt.f32.s32 %v755
        %v762 = vshll.u32 %v761, 16
        %v763 = vadd.s32 %v762, %v760
        %v764 = vsel %vm425, %v672, 2147483647
        %v765 = vand.u32 %v764, 65535
        %v766 = vshra.s32 %v764, 16
        %v767 = vcvt.s32.f32 %v765
        %v768 = vcvt.s32.f32 %v766
        %769 = vmin.xlane.f32.xlu0 %v768
        %v770 = vpop.xlane.xlu0 %769
        %vm771 = vcmp.eq.f32.partialorder %v768, %v770
        %v772 = vsel %vm771, %v767, inf
        %773 = vmin.xlane.f32.xlu0 %v772
        %v774 = vpop.xlane.xlu0 %773
        %v775 = vcvt.f32.s32 %v774
        %v776 = vcvt.f32.s32 %v770
        %v777 = vshll.u32 %v776, 16
        %v778 = vadd.s32 %v777, %v775
        %v779 = vsel %vm425, %v673, 2147483647
        %v780 = vand.u32 %v779, 65535
        %v781 = vshra.s32 %v779, 16
        %v782 = vcvt.s32.f32 %v780
        %v783 = vcvt.s32.f32 %v781
        %784 = vmin.xlane.f32.xlu0 %v783
        %v785 = vpop.xlane.xlu0 %784
        %vm786 = vcmp.eq.f32.partialorder %v783, %v785
        %v787 = vsel %vm786, %v782, inf
        %788 = vmin.xlane.f32.xlu0 %v787
        %v789 = vpop.xlane.xlu0 %788
        %v790 = vcvt.f32.s32 %v789
        %v791 = vcvt.f32.s32 %v785
        %v792 = vshll.u32 %v791, 16
        %v793 = vadd.s32 %v792, %v790
        %vm794 = vcmp.eq.s32.totalorder %v296, %v688
        %vm795 = vcmp.eq.s32.totalorder %v296, %v703
        %vm796 = vcmp.eq.s32.totalorder %v296, %v718
        %vm797 = vcmp.eq.s32.totalorder %v296, %v733
        %vm798 = vcmp.eq.s32.totalorder %v296, %v748
        %vm799 = vcmp.eq.s32.totalorder %v296, %v763
        %vm800 = vcmp.eq.s32.totalorder %v296, %v778
        %vm801 = vcmp.eq.s32.totalorder %v296, %v793
        %v802 = vsel %vm794, %v358, 0.0
        %v803 = vsel %vm795, %v359, 0.0
        %v804 = vsel %vm796, %v361, 0.0
        %v805 = vsel %vm797, %v362, 0.0
        %v806 = vsel %vm798, %v364, 0.0
        %v807 = vsel %vm799, %v365, 0.0
        %v808 = vsel %vm800, %v367, 0.0
        %v809 = vsel %vm801, %v368, 0.0
        %v810 = vsel %vm425, %v802, 0.0
        %811 = vadd.xlane.f32.xlu0 %v810
        %v812 = vpop.xlane.xlu0 %811
        %v813 = vsel %vm425, %v803, 0.0
        %814 = vadd.xlane.f32.xlu0 %v813
        %v815 = vpop.xlane.xlu0 %814
        %v816 = vsel %vm425, %v804, 0.0
        %817 = vadd.xlane.f32.xlu0 %v816
        %v818 = vpop.xlane.xlu0 %817
        %v819 = vsel %vm425, %v805, 0.0
        %820 = vadd.xlane.f32.xlu0 %v819
        %v821 = vpop.xlane.xlu0 %820
        %v822 = vsel %vm425, %v806, 0.0
        %823 = vadd.xlane.f32.xlu0 %v822
        %v824 = vpop.xlane.xlu0 %823
        %v825 = vsel %vm425, %v807, 0.0
        %826 = vadd.xlane.f32.xlu0 %v825
        %v827 = vpop.xlane.xlu0 %826
        %v828 = vsel %vm425, %v808, 0.0
        %829 = vadd.xlane.f32.xlu0 %v828
        %v830 = vpop.xlane.xlu0 %829
        %v831 = vsel %vm425, %v809, 0.0
        %832 = vadd.xlane.f32.xlu0 %v831
        %v833 = vpop.xlane.xlu0 %832
        %v834 = vlaneseq
        %v835 = vshrl.u32 %v834, 7
        %vm836 = vcmask 7168
        %v837 = vsel %vm836, %v812, 0.0
        %v838 = vsel %vm836, %v815, 0.0
        %v839 = vadd.f32 %v837, %v838
        %840 = vadd.xlane.f32.xlu0 %v839
        %v841 = vpop.xlane.xlu0 %840
        %v842 = vrot.slane %v841, 4
        %v843 = vadd.f32 %v841, %v842
        %v844 = vrot.slane %v843, 2
        %v845 = vadd.f32 %v843, %v844
        %v846 = vrot.slane %v845, 1
        %v847 = vadd.f32 %v845, %v846
        %s848 = vtos %v847
        %v849 = vsel %vm836, %v650, 0.0
        %v850 = vsel %vm836, %v651, 0.0
        %v851 = vadd.f32 %v849, %v850
        %852 = vadd.xlane.f32.xlu0 %v851
        %v853 = vpop.xlane.xlu0 %852
        %v854 = vrot.slane %v853, 4
        %v855 = vadd.f32 %v853, %v854
        %v856 = vrot.slane %v855, 2
        %v857 = vadd.f32 %v855, %v856
        %v858 = vrot.slane %v857, 1
        %v859 = vadd.f32 %v857, %v858
        %s860 = vtos %v859
        %v861 = vrcp.pop 16.0
        %v862 = vmul.f32 16.0, %v861
        %v863 = vsub.f32 1.0, %v862
        %v864 = vmul.f32 %v861, %v863
        %v865 = vadd.f32 %v861, %v864
        %vm866 = vweird.f32 %v861
        %v867 = vsel %vm866, %v861, %v865
        %s868 = vtos %v867
        %s869 = smul.f32 %s860, %s868
        %vm870 = vcmp.eq.s32.totalorder %v835, 0
        %vm871 = vcmp.eq.s32.totalorder %v296, 0
        %vm872 = vmand %vm870, %vm871
        %v873 = vstv %s848
        %v874 = vsel %vm872, %v873, 0.0
        %v875 = vadd.f32 %v874, 0.0
        %v876 = vstv %s869
        %v877 = vsel %vm872, %v876, 0.0
        %v878 = vadd.f32 %v877, 0.0
        %v879 = vsub.f32 %v548, %v357
        %v880 = vrcp.pop 8.0
        %v881 = vmul.f32 8.0, %v880
        %v882 = vsub.f32 1.0, %v881
        %v883 = vmul.f32 %v880, %v882
        %v884 = vadd.f32 %v880, %v883
        %vm885 = vweird.f32 %v880
        %v886 = vsel %vm885, %v880, %v884
        %v887 = vmul.f32 %v879, %v886
        %888 = vxpose.xlu0.b32.start [1/16] %v887, 128
        %889 = vxpose.xlu0.b32.cont [2/16] 0.0, 128
        %890 = vxpose.xlu0.b32.cont [3/16] 0.0, 128
        %891 = vxpose.xlu0.b32.cont [4/16] 0.0, 128
        %892 = vxpose.xlu0.b32.cont [5/16] 0.0, 128
        %893 = vxpose.xlu0.b32.cont [6/16] 0.0, 128
        %894 = vxpose.xlu0.b32.cont [7/16] 0.0, 128
        %895 = vxpose.xlu0.b32.cont [8/16] 0.0, 128
        %896 = vxpose.xlu0.b32.cont [9/16] 0.0, 128
        %897 = vxpose.xlu0.b32.cont [10/16] 0.0, 128
        %898 = vxpose.xlu0.b32.cont [11/16] 0.0, 128
        %899 = vxpose.xlu0.b32.cont [12/16] 0.0, 128
        %900 = vxpose.xlu0.b32.cont [13/16] 0.0, 128
        %901 = vxpose.xlu0.b32.cont [14/16] 0.0, 128
        %902 = vxpose.xlu0.b32.cont [15/16] 0.0, 128
        %903 = vxpose.xlu0.b32.end [16/16] 0.0, 128
        %v904 = vpop.trf.xlu0
        %v905 = vpop.trf.xlu0
        %v906 = vpop.trf.xlu0
        %v907 = vpop.trf.xlu0
        %v908 = vpop.trf.xlu0
        %v909 = vpop.trf.xlu0
        %v910 = vpop.trf.xlu0
        %v911 = vpop.trf.xlu0
        %v912 = vpop.trf.xlu0
        %v913 = vpop.trf.xlu0
        %v914 = vpop.trf.xlu0
        %v915 = vpop.trf.xlu0
        %v916 = vpop.trf.xlu0
        %v917 = vpop.trf.xlu0
        %v918 = vpop.trf.xlu0
        %v919 = vpop.trf.xlu0
        %v921 = vsel %vm425, %v904, 0
        %923 = vmatpush.msra.mxu0 0.0
        %924 = vmatpush.msra.mxu0 0.0
        %925 = vmatpush.msra.mxu0 0.0
        %926 = vmatpush.msra.mxu0 0.0
        %927 = vmatpush.msra.mxu0 0.0
        %928 = vmatpush.msra.mxu0 0.0
        %929 = vmatpush.msra.mxu0 0.0
        %930 = vmatpush.msra.mxu0 0.0
        %931 = vmatpush.msra.mxu0 0.0
        %932 = vmatpush.msra.mxu0 0.0
        %933 = vmatpush.msra.mxu0 0.0
        %934 = vmatpush.msra.mxu0 0.0
        %935 = vmatpush.msra.mxu0 0.0
        %936 = vmatpush.msra.mxu0 0.0
        %937 = vmatpush.msra.mxu0 0.0
        %938 = vmatpush.msra.mxu0 %v269
        %939 = vmatmul.f32.gmra.mxu0 %v921
        %v940 = vpop.f32.mrf.mxu0
        %v941 = vadd.f32 0.0, %v940
        %942 = vdwg.mxu0
        %v943 = vsel %vm425, %v887, 0.0
        %v944 = vrot.slane %v943, 4
        %v945 = vadd.f32 %v943, %v944
        %v946 = vrot.slane %v945, 2
        %v947 = vadd.f32 %v945, %v946
        %v948 = vrot.slane %v947, 1
        %v949 = vadd.f32 %v947, %v948
        %v950 = vmul.f32 %v941, 0.4
        %v951 = vsub.f32 %v293, %v950
        %v952 = vmul.f32 %v949, 0.4
        %v953 = vsub.f32 %v294, %v952
        %v955 = vperm.slane %v953, 0
        %957 = vmatpush.xpose.msra.mxu0 0.0
        %958 = vmatpush.xpose.msra.mxu0 0.0
        %959 = vmatpush.xpose.msra.mxu0 0.0
        %960 = vmatpush.xpose.msra.mxu0 0.0
        %961 = vmatpush.xpose.msra.mxu0 0.0
        %962 = vmatpush.xpose.msra.mxu0 0.0
        %963 = vmatpush.xpose.msra.mxu0 0.0
        %964 = vmatpush.xpose.msra.mxu0 0.0
        %965 = vmatpush.xpose.msra.mxu0 0.0
        %966 = vmatpush.xpose.msra.mxu0 0.0
        %967 = vmatpush.xpose.msra.mxu0 0.0
        %968 = vmatpush.xpose.msra.mxu0 0.0
        %969 = vmatpush.xpose.msra.mxu0 0.0
        %970 = vmatpush.xpose.msra.mxu0 0.0
        %971 = vmatpush.xpose.msra.mxu0 0.0
        %972 = vmatpush.xpose.msra.mxu0 %v951
        %973 = vmatmul.f32.gmra.mxu0 %v270
        %v974 = vpop.f32.mrf.mxu0
        %v975 = vadd.f32 %v955, %v974
        %976 = vmatmul.f32.gmra.mxu0 %v271
        %v977 = vpop.f32.mrf.mxu0
        %v978 = vadd.f32 %v955, %v977
        %979 = vdwg.mxu0
        %v980 = vsel %vm425, %v975, -inf
        %981 = vmax.xlane.f32.xlu0 %v980
        %v982 = vpop.xlane.xlu0 %981
        %v983 = vsel %vm425, %v978, -inf
        %984 = vmax.xlane.f32.xlu0 %v983
        %v985 = vpop.xlane.xlu0 %984
        %v986 = vsub.f32 %v975, %v982
        %v987 = vsub.f32 %v978, %v985
        %v988 = vmul.f32 %v986, 1.442695
        %v989 = vpow.pop %v988
        %v990 = vmul.f32 %v987, 1.442695
        %v991 = vpow.pop %v990
        %v992 = vsel %vm425, %v989, 0.0
        %993 = vadd.xlane.f32.xlu0 %v992
        %v994 = vpop.xlane.xlu0 %993
        %v995 = vsel %vm425, %v991, 0.0
        %996 = vadd.xlane.f32.xlu0 %v995
        %v997 = vpop.xlane.xlu0 %996
        %v998 = vlog2.pop %v994
        %v999 = vmul.f32 %v998, 0.6931472
        %v1000 = vlog2.pop %v997
        %v1001 = vmul.f32 %v1000, 0.6931472
        %v1002 = vadd.f32 %v982, %v999
        %v1003 = vadd.f32 %v985, %v1001
        %v1004 = vmul.f32 %v975, %v358
        %v1005 = vmul.f32 %v978, %v359
        %v1006 = vsel %vm425, %v1004, 0.0
        %1007 = vadd.xlane.f32.xlu0 %v1006
        %v1008 = vpop.xlane.xlu0 %1007
        %v1009 = vsel %vm425, %v1005, 0.0
        %1010 = vadd.xlane.f32.xlu0 %v1009
        %v1011 = vpop.xlane.xlu0 %1010
        %v1012 = vsub.f32 %v1002, %v1008
        %v1013 = vsub.f32 %v1003, %v1011
        %v1014 = vsel %vm836, %v1012, 0.0
        %v1015 = vsel %vm836, %v1013, 0.0
        %v1016 = vadd.f32 %v1014, %v1015
        %1017 = vadd.xlane.f32.xlu0 %v1016
        %v1018 = vpop.xlane.xlu0 %1017
        %v1019 = vrot.slane %v1018, 4
        %v1020 = vadd.f32 %v1018, %v1019
        %v1021 = vrot.slane %v1020, 2
        %v1022 = vadd.f32 %v1020, %v1021
        %v1023 = vrot.slane %v1022, 1
        %v1024 = vadd.f32 %v1022, %v1023
        %s1025 = vtos %v1024
        %v1026 = vrcp.pop 16.0
        %v1027 = vmul.f32 16.0, %v1026
        %v1028 = vsub.f32 1.0, %v1027
        %v1029 = vmul.f32 %v1026, %v1028
        %v1030 = vadd.f32 %v1026, %v1029
        %vm1031 = vweird.f32 %v1026
        %v1032 = vsel %vm1031, %v1026, %v1030
        %s1033 = vtos %v1032
        %s1034 = smul.f32 %s1025, %s1033
        %vm1035 = vcmp.ge.f32.partialorder %v975, %v982
        %vm1036 = vcmp.ge.f32.partialorder %v978, %v985
        %v1037 = vsel %vm1035, %v296, 8
        %v1038 = vsel %vm1036, %v296, 8
        %v1039 = vsel %vm425, %v1037, 2147483647
        %v1040 = vand.u32 %v1039, 65535
        %v1041 = vshra.s32 %v1039, 16
        %v1042 = vcvt.s32.f32 %v1040
        %v1043 = vcvt.s32.f32 %v1041
        %1044 = vmin.xlane.f32.xlu0 %v1043
        %v1045 = vpop.xlane.xlu0 %1044
        %vm1046 = vcmp.eq.f32.partialorder %v1043, %v1045
        %v1047 = vsel %vm1046, %v1042, inf
        %1048 = vmin.xlane.f32.xlu0 %v1047
        %v1049 = vpop.xlane.xlu0 %1048
        %v1050 = vcvt.f32.s32 %v1049
        %v1051 = vcvt.f32.s32 %v1045
        %v1052 = vshll.u32 %v1051, 16
        %v1053 = vadd.s32 %v1052, %v1050
        %v1054 = vsel %vm425, %v1038, 2147483647
        %v1055 = vand.u32 %v1054, 65535
        %v1056 = vshra.s32 %v1054, 16
        %v1057 = vcvt.s32.f32 %v1055
        %v1058 = vcvt.s32.f32 %v1056
        %1059 = vmin.xlane.f32.xlu0 %v1058
        %v1060 = vpop.xlane.xlu0 %1059
        %vm1061 = vcmp.eq.f32.partialorder %v1058, %v1060
        %v1062 = vsel %vm1061, %v1057, inf
        %1063 = vmin.xlane.f32.xlu0 %v1062
        %v1064 = vpop.xlane.xlu0 %1063
        %v1065 = vcvt.f32.s32 %v1064
        %v1066 = vcvt.f32.s32 %v1060
        %v1067 = vshll.u32 %v1066, 16
        %v1068 = vadd.s32 %v1067, %v1065
        %vm1069 = vcmp.eq.s32.totalorder %v296, %v1053
        %vm1070 = vcmp.eq.s32.totalorder %v296, %v1068
        %v1071 = vsel %vm1069, %v358, 0.0
        %v1072 = vsel %vm1070, %v359, 0.0
        %v1073 = vsel %vm425, %v1071, 0.0
        %v1074 = vsel %vm425, %v1072, 0.0
        %v1075 = vadd.f32 %v1073, %v1074
        %1076 = vadd.xlane.f32.xlu0 %v1075
        %v1077 = vpop.xlane.xlu0 %1076
        %v1078 = vrot.slane %v1077, 4
        %v1079 = vadd.f32 %v1077, %v1078
        %v1080 = vrot.slane %v1079, 2
        %v1081 = vadd.f32 %v1079, %v1080
        %v1082 = vrot.slane %v1081, 1
        %v1083 = vadd.f32 %v1081, %v1082
        %s1084 = vtos %v1083
        %vm1085 = vcmp.eq.s32.totalorder %v296, 1
        %vm1086 = vmand %vm870, %vm1085
        %v1087 = vstv %s1084
        %v1088 = vsel %vm1086, %v1087, 0.0
        %v1089 = vadd.f32 %v875, %v1088
        %v1090 = vstv %s1034
        %v1091 = vsel %vm1086, %v1090, 0.0
        %v1092 = vadd.f32 %v878, %v1091
        %1093 = vmatpush.xpose.msra.mxu0 0.0
        %1094 = vmatpush.xpose.msra.mxu0 0.0
        %1095 = vmatpush.xpose.msra.mxu0 0.0
        %1096 = vmatpush.xpose.msra.mxu0 0.0
        %1097 = vmatpush.xpose.msra.mxu0 0.0
        %1098 = vmatpush.xpose.msra.mxu0 0.0
        %1099 = vmatpush.xpose.msra.mxu0 0.0
        %1100 = vmatpush.xpose.msra.mxu0 0.0
        %1101 = vmatpush.xpose.msra.mxu0 0.0
        %1102 = vmatpush.xpose.msra.mxu0 0.0
        %1103 = vmatpush.xpose.msra.mxu0 0.0
        %1104 = vmatpush.xpose.msra.mxu0 0.0
        %1105 = vmatpush.xpose.msra.mxu0 0.0
        %1106 = vmatpush.xpose.msra.mxu0 0.0
        %1107 = vmatpush.xpose.msra.mxu0 0.0
        %1108 = vmatpush.xpose.msra.mxu0 %v951
        %1109 = vmatmul.f32.gmra.mxu0 %v269
        %v1110 = vpop.f32.mrf.mxu0
        %v1111 = vadd.f32 %v955, %v1110
        %1112 = vdwg.mxu0
        %v1113 = vsel %vm425, %v1111, -inf
        %1114 = vmax.xlane.f32.xlu0 %v1113
        %v1115 = vpop.xlane.xlu0 %1114
        %v1116 = vsub.f32 %v1111, %v1115
        %v1117 = vmul.f32 %v1116, 1.442695
        %v1118 = vpow.pop %v1117
        %v1119 = vsel %vm425, %v1118, 0.0
        %1120 = vadd.xlane.f32.xlu0 %v1119
        %v1121 = vpop.xlane.xlu0 %1120
        %v1122 = vrcp.pop %v1121
        %v1123 = vmul.f32 %v1121, %v1122
        %v1124 = vsub.f32 1.0, %v1123
        %v1125 = vmul.f32 %v1122, %v1124
        %v1126 = vadd.f32 %v1122, %v1125
        %vm1127 = vweird.f32 %v1121
        %vm1128 = vweird.f32 %v1122
        %vm1129 = vmor %vm1127, %vm1128
        %v1130 = vsel %vm1129, %v1122, %v1126
        %v1131 = vand.u32 2147483647, %v1121
        %vm1132 = vcmp.eq.f32.partialorder %v1131, 8.507059e+37
        %v1133 = vand.u32 %v1121, 2147483648
        %v1134 = vor.u32 1.1754944e-38, %v1133
        %v1135 = vsel %vm1132, %v1134, %v1130
        %v1136 = vmul.f32 %v1118, %v1135
        %v1137 = vsub.f32 %v1136, %v357
        %v1138 = vmul.f32 %v1137, %v886
        %1139 = vxpose.xlu0.b32.start [1/16] %v1138, 128
        %1140 = vxpose.xlu0.b32.cont [2/16] 0.0, 128
        %1141 = vxpose.xlu0.b32.cont [3/16] 0.0, 128
        %1142 = vxpose.xlu0.b32.cont [4/16] 0.0, 128
        %1143 = vxpose.xlu0.b32.cont [5/16] 0.0, 128
        %1144 = vxpose.xlu0.b32.cont [6/16] 0.0, 128
        %1145 = vxpose.xlu0.b32.cont [7/16] 0.0, 128
        %1146 = vxpose.xlu0.b32.cont [8/16] 0.0, 128
        %1147 = vxpose.xlu0.b32.cont [9/16] 0.0, 128
        %1148 = vxpose.xlu0.b32.cont [10/16] 0.0, 128
        %1149 = vxpose.xlu0.b32.cont [11/16] 0.0, 128
        %1150 = vxpose.xlu0.b32.cont [12/16] 0.0, 128
        %1151 = vxpose.xlu0.b32.cont [13/16] 0.0, 128
        %1152 = vxpose.xlu0.b32.cont [14/16] 0.0, 128
        %1153 = vxpose.xlu0.b32.cont [15/16] 0.0, 128
        %1154 = vxpose.xlu0.b32.end [16/16] 0.0, 128
        %v1155 = vpop.trf.xlu0
        %v1156 = vpop.trf.xlu0
        %v1157 = vpop.trf.xlu0
        %v1158 = vpop.trf.xlu0
        %v1159 = vpop.trf.xlu0
        %v1160 = vpop.trf.xlu0
        %v1161 = vpop.trf.xlu0
        %v1162 = vpop.trf.xlu0
        %v1163 = vpop.trf.xlu0
        %v1164 = vpop.trf.xlu0
        %v1165 = vpop.trf.xlu0
        %v1166 = vpop.trf.xlu0
        %v1167 = vpop.trf.xlu0
        %v1168 = vpop.trf.xlu0
        %v1169 = vpop.trf.xlu0
        %v1170 = vpop.trf.xlu0
        %v1172 = vsel %vm425, %v1155, 0
        %1174 = vmatpush.msra.mxu0 0.0
        %1175 = vmatpush.msra.mxu0 0.0
        %1176 = vmatpush.msra.mxu0 0.0
        %1177 = vmatpush.msra.mxu0 0.0
        %1178 = vmatpush.msra.mxu0 0.0
        %1179 = vmatpush.msra.mxu0 0.0
        %1180 = vmatpush.msra.mxu0 0.0
        %1181 = vmatpush.msra.mxu0 0.0
        %1182 = vmatpush.msra.mxu0 0.0
        %1183 = vmatpush.msra.mxu0 0.0
        %1184 = vmatpush.msra.mxu0 0.0
        %1185 = vmatpush.msra.mxu0 0.0
        %1186 = vmatpush.msra.mxu0 0.0
        %1187 = vmatpush.msra.mxu0 0.0
        %1188 = vmatpush.msra.mxu0 0.0
        %1189 = vmatpush.msra.mxu0 %v269
        %1190 = vmatmul.f32.gmra.mxu0 %v1172
        %v1191 = vpop.f32.mrf.mxu0
        %v1192 = vadd.f32 0.0, %v1191
        %1193 = vdwg.mxu0
        %v1194 = vsel %vm425, %v1138, 0.0
        %v1195 = vrot.slane %v1194, 4
        %v1196 = vadd.f32 %v1194, %v1195
        %v1197 = vrot.slane %v1196, 2
        %v1198 = vadd.f32 %v1196, %v1197
        %v1199 = vrot.slane %v1198, 1
        %v1200 = vadd.f32 %v1198, %v1199
        %v1201 = vmul.f32 %v1192, 0.4
        %v1202 = vsub.f32 %v951, %v1201
        %v1203 = vmul.f32 %v1200, 0.4
        %v1204 = vsub.f32 %v953, %v1203
        %v1206 = vperm.slane %v1204, 0
        %1208 = vmatpush.xpose.msra.mxu0 0.0
        %1209 = vmatpush.xpose.msra.mxu0 0.0
        %1210 = vmatpush.xpose.msra.mxu0 0.0
        %1211 = vmatpush.xpose.msra.mxu0 0.0
        %1212 = vmatpush.xpose.msra.mxu0 0.0
        %1213 = vmatpush.xpose.msra.mxu0 0.0
        %1214 = vmatpush.xpose.msra.mxu0 0.0
        %1215 = vmatpush.xpose.msra.mxu0 0.0
        %1216 = vmatpush.xpose.msra.mxu0 0.0
        %1217 = vmatpush.xpose.msra.mxu0 0.0
        %1218 = vmatpush.xpose.msra.mxu0 0.0
        %1219 = vmatpush.xpose.msra.mxu0 0.0
        %1220 = vmatpush.xpose.msra.mxu0 0.0
        %1221 = vmatpush.xpose.msra.mxu0 0.0
        %1222 = vmatpush.xpose.msra.mxu0 0.0
        %1223 = vmatpush.xpose.msra.mxu0 %v1202
        %1224 = vmatmul.f32.gmra.mxu0 %v270
        %v1225 = vpop.f32.mrf.mxu0
        %v1226 = vadd.f32 %v1206, %v1225
        %1227 = vmatmul.f32.gmra.mxu0 %v271
        %v1228 = vpop.f32.mrf.mxu0
        %v1229 = vadd.f32 %v1206, %v1228
        %1230 = vdwg.mxu0
        %v1231 = vsel %vm425, %v1226, -inf
        %1232 = vmax.xlane.f32.xlu0 %v1231
        %v1233 = vpop.xlane.xlu0 %1232
        %v1234 = vsel %vm425, %v1229, -inf
        %1235 = vmax.xlane.f32.xlu0 %v1234
        %v1236 = vpop.xlane.xlu0 %1235
        %v1237 = vsub.f32 %v1226, %v1233
        %v1238 = vsub.f32 %v1229, %v1236
        %v1239 = vmul.f32 %v1237, 1.442695
        %v1240 = vpow.pop %v1239
        %v1241 = vmul.f32 %v1238, 1.442695
        %v1242 = vpow.pop %v1241
        %v1243 = vsel %vm425, %v1240, 0.0
        %1244 = vadd.xlane.f32.xlu0 %v1243
        %v1245 = vpop.xlane.xlu0 %1244
        %v1246 = vsel %vm425, %v1242, 0.0
        %1247 = vadd.xlane.f32.xlu0 %v1246
        %v1248 = vpop.xlane.xlu0 %1247
        %v1249 = vlog2.pop %v1245
        %v1250 = vmul.f32 %v1249, 0.6931472
        %v1251 = vlog2.pop %v1248
        %v1252 = vmul.f32 %v1251, 0.6931472
        %v1253 = vadd.f32 %v1233, %v1250
        %v1254 = vadd.f32 %v1236, %v1252
        %v1255 = vmul.f32 %v1226, %v358
        %v1256 = vmul.f32 %v1229, %v359
        %v1257 = vsel %vm425, %v1255, 0.0
        %1258 = vadd.xlane.f32.xlu0 %v1257
        %v1259 = vpop.xlane.xlu0 %1258
        %v1260 = vsel %vm425, %v1256, 0.0
        %1261 = vadd.xlane.f32.xlu0 %v1260
        %v1262 = vpop.xlane.xlu0 %1261
        %v1263 = vsub.f32 %v1253, %v1259
        %v1264 = vsub.f32 %v1254, %v1262
        %v1265 = vsel %vm836, %v1263, 0.0
        %v1266 = vsel %vm836, %v1264, 0.0
        %v1267 = vadd.f32 %v1265, %v1266
        %1268 = vadd.xlane.f32.xlu0 %v1267
        %v1269 = vpop.xlane.xlu0 %1268
        %v1270 = vrot.slane %v1269, 4
        %v1271 = vadd.f32 %v1269, %v1270
        %v1272 = vrot.slane %v1271, 2
        %v1273 = vadd.f32 %v1271, %v1272
        %v1274 = vrot.slane %v1273, 1
        %v1275 = vadd.f32 %v1273, %v1274
        %s1276 = vtos %v1275
        %v1277 = vrcp.pop 16.0
        %v1278 = vmul.f32 16.0, %v1277
        %v1279 = vsub.f32 1.0, %v1278
        %v1280 = vmul.f32 %v1277, %v1279
        %v1281 = vadd.f32 %v1277, %v1280
        %vm1282 = vweird.f32 %v1277
        %v1283 = vsel %vm1282, %v1277, %v1281
        %s1284 = vtos %v1283
        %s1285 = smul.f32 %s1276, %s1284
        %vm1286 = vcmp.ge.f32.partialorder %v1226, %v1233
        %vm1287 = vcmp.ge.f32.partialorder %v1229, %v1236
        %v1288 = vsel %vm1286, %v296, 8
        %v1289 = vsel %vm1287, %v296, 8
        %v1290 = vsel %vm425, %v1288, 2147483647
        %v1291 = vand.u32 %v1290, 65535
        %v1292 = vshra.s32 %v1290, 16
        %v1293 = vcvt.s32.f32 %v1291
        %v1294 = vcvt.s32.f32 %v1292
        %1295 = vmin.xlane.f32.xlu0 %v1294
        %v1296 = vpop.xlane.xlu0 %1295
        %vm1297 = vcmp.eq.f32.partialorder %v1294, %v1296
        %v1298 = vsel %vm1297, %v1293, inf
        %1299 = vmin.xlane.f32.xlu0 %v1298
        %v1300 = vpop.xlane.xlu0 %1299
        %v1301 = vcvt.f32.s32 %v1300
        %v1302 = vcvt.f32.s32 %v1296
        %v1303 = vshll.u32 %v1302, 16
        %v1304 = vadd.s32 %v1303, %v1301
        %v1305 = vsel %vm425, %v1289, 2147483647
        %v1306 = vand.u32 %v1305, 65535
        %v1307 = vshra.s32 %v1305, 16
        %v1308 = vcvt.s32.f32 %v1306
        %v1309 = vcvt.s32.f32 %v1307
        %1310 = vmin.xlane.f32.xlu0 %v1309
        %v1311 = vpop.xlane.xlu0 %1310
        %vm1312 = vcmp.eq.f32.partialorder %v1309, %v1311
        %v1313 = vsel %vm1312, %v1308, inf
        %1314 = vmin.xlane.f32.xlu0 %v1313
        %v1315 = vpop.xlane.xlu0 %1314
        %v1316 = vcvt.f32.s32 %v1315
        %v1317 = vcvt.f32.s32 %v1311
        %v1318 = vshll.u32 %v1317, 16
        %v1319 = vadd.s32 %v1318, %v1316
        %vm1320 = vcmp.eq.s32.totalorder %v296, %v1304
        %vm1321 = vcmp.eq.s32.totalorder %v296, %v1319
        %v1322 = vsel %vm1320, %v358, 0.0
        %v1323 = vsel %vm1321, %v359, 0.0
        %v1324 = vsel %vm425, %v1322, 0.0
        %v1325 = vsel %vm425, %v1323, 0.0
        %v1326 = vadd.f32 %v1324, %v1325
        %1327 = vadd.xlane.f32.xlu0 %v1326
        %v1328 = vpop.xlane.xlu0 %1327
        %v1329 = vrot.slane %v1328, 4
        %v1330 = vadd.f32 %v1328, %v1329
        %v1331 = vrot.slane %v1330, 2
        %v1332 = vadd.f32 %v1330, %v1331
        %v1333 = vrot.slane %v1332, 1
        %v1334 = vadd.f32 %v1332, %v1333
        %s1335 = vtos %v1334
        %vm1336 = vcmp.eq.s32.totalorder %v296, 2
        %vm1337 = vmand %vm870, %vm1336
        %v1338 = vstv %s1335
        %v1339 = vsel %vm1337, %v1338, 0.0
        %v1340 = vadd.f32 %v1089, %v1339
        %v1341 = vstv %s1285
        %v1342 = vsel %vm1337, %v1341, 0.0
        %v1343 = vadd.f32 %v1092, %v1342
        %1344 = vmatpush.xpose.msra.mxu0 0.0
        %1345 = vmatpush.xpose.msra.mxu0 0.0
        %1346 = vmatpush.xpose.msra.mxu0 0.0
        %1347 = vmatpush.xpose.msra.mxu0 0.0
        %1348 = vmatpush.xpose.msra.mxu0 0.0
        %1349 = vmatpush.xpose.msra.mxu0 0.0
        %1350 = vmatpush.xpose.msra.mxu0 0.0
        %1351 = vmatpush.xpose.msra.mxu0 0.0
        %1352 = vmatpush.xpose.msra.mxu0 0.0
        %1353 = vmatpush.xpose.msra.mxu0 0.0
        %1354 = vmatpush.xpose.msra.mxu0 0.0
        %1355 = vmatpush.xpose.msra.mxu0 0.0
        %1356 = vmatpush.xpose.msra.mxu0 0.0
        %1357 = vmatpush.xpose.msra.mxu0 0.0
        %1358 = vmatpush.xpose.msra.mxu0 0.0
        %1359 = vmatpush.xpose.msra.mxu0 %v1202
        %1360 = vmatmul.f32.gmra.mxu0 %v269
        %v1361 = vpop.f32.mrf.mxu0
        %v1362 = vadd.f32 %v1206, %v1361
        %1363 = vdwg.mxu0
        %v1364 = vsel %vm425, %v1362, -inf
        %1365 = vmax.xlane.f32.xlu0 %v1364
        %v1366 = vpop.xlane.xlu0 %1365
        %v1367 = vsub.f32 %v1362, %v1366
        %v1368 = vmul.f32 %v1367, 1.442695
        %v1369 = vpow.pop %v1368
        %v1370 = vsel %vm425, %v1369, 0.0
        %1371 = vadd.xlane.f32.xlu0 %v1370
        %v1372 = vpop.xlane.xlu0 %1371
        %v1373 = vrcp.pop %v1372
        %v1374 = vmul.f32 %v1372, %v1373
        %v1375 = vsub.f32 1.0, %v1374
        %v1376 = vmul.f32 %v1373, %v1375
        %v1377 = vadd.f32 %v1373, %v1376
        %vm1378 = vweird.f32 %v1372
        %vm1379 = vweird.f32 %v1373
        %vm1380 = vmor %vm1378, %vm1379
        %v1381 = vsel %vm1380, %v1373, %v1377
        %v1382 = vand.u32 2147483647, %v1372
        %vm1383 = vcmp.eq.f32.partialorder %v1382, 8.507059e+37
        %v1384 = vand.u32 %v1372, 2147483648
        %v1385 = vor.u32 1.1754944e-38, %v1384
        %v1386 = vsel %vm1383, %v1385, %v1381
        %v1387 = vmul.f32 %v1369, %v1386
        %v1388 = vsub.f32 %v1387, %v357
        %v1389 = vmul.f32 %v1388, %v886
        %1390 = vxpose.xlu0.b32.start [1/16] %v1389, 128
        %1391 = vxpose.xlu0.b32.cont [2/16] 0.0, 128
        %1392 = vxpose.xlu0.b32.cont [3/16] 0.0, 128
        %1393 = vxpose.xlu0.b32.cont [4/16] 0.0, 128
        %1394 = vxpose.xlu0.b32.cont [5/16] 0.0, 128
        %1395 = vxpose.xlu0.b32.cont [6/16] 0.0, 128
        %1396 = vxpose.xlu0.b32.cont [7/16] 0.0, 128
        %1397 = vxpose.xlu0.b32.cont [8/16] 0.0, 128
        %1398 = vxpose.xlu0.b32.cont [9/16] 0.0, 128
        %1399 = vxpose.xlu0.b32.cont [10/16] 0.0, 128
        %1400 = vxpose.xlu0.b32.cont [11/16] 0.0, 128
        %1401 = vxpose.xlu0.b32.cont [12/16] 0.0, 128
        %1402 = vxpose.xlu0.b32.cont [13/16] 0.0, 128
        %1403 = vxpose.xlu0.b32.cont [14/16] 0.0, 128
        %1404 = vxpose.xlu0.b32.cont [15/16] 0.0, 128
        %1405 = vxpose.xlu0.b32.end [16/16] 0.0, 128
        %v1406 = vpop.trf.xlu0
        %v1407 = vpop.trf.xlu0
        %v1408 = vpop.trf.xlu0
        %v1409 = vpop.trf.xlu0
        %v1410 = vpop.trf.xlu0
        %v1411 = vpop.trf.xlu0
        %v1412 = vpop.trf.xlu0
        %v1413 = vpop.trf.xlu0
        %v1414 = vpop.trf.xlu0
        %v1415 = vpop.trf.xlu0
        %v1416 = vpop.trf.xlu0
        %v1417 = vpop.trf.xlu0
        %v1418 = vpop.trf.xlu0
        %v1419 = vpop.trf.xlu0
        %v1420 = vpop.trf.xlu0
        %v1421 = vpop.trf.xlu0
        %v1423 = vsel %vm425, %v1406, 0
        %1425 = vmatpush.msra.mxu0 0.0
        %1426 = vmatpush.msra.mxu0 0.0
        %1427 = vmatpush.msra.mxu0 0.0
        %1428 = vmatpush.msra.mxu0 0.0
        %1429 = vmatpush.msra.mxu0 0.0
        %1430 = vmatpush.msra.mxu0 0.0
        %1431 = vmatpush.msra.mxu0 0.0
        %1432 = vmatpush.msra.mxu0 0.0
        %1433 = vmatpush.msra.mxu0 0.0
        %1434 = vmatpush.msra.mxu0 0.0
        %1435 = vmatpush.msra.mxu0 0.0
        %1436 = vmatpush.msra.mxu0 0.0
        %1437 = vmatpush.msra.mxu0 0.0
        %1438 = vmatpush.msra.mxu0 0.0
        %1439 = vmatpush.msra.mxu0 0.0
        %1440 = vmatpush.msra.mxu0 %v269
        %1441 = vmatmul.f32.gmra.mxu0 %v1423
        %v1442 = vpop.f32.mrf.mxu0
        %v1443 = vadd.f32 0.0, %v1442
        %1444 = vdwg.mxu0
        %v1445 = vsel %vm425, %v1389, 0.0
        %v1446 = vrot.slane %v1445, 4
        %v1447 = vadd.f32 %v1445, %v1446
        %v1448 = vrot.slane %v1447, 2
        %v1449 = vadd.f32 %v1447, %v1448
        %v1450 = vrot.slane %v1449, 1
        %v1451 = vadd.f32 %v1449, %v1450
        %v1452 = vmul.f32 %v1443, 0.4
        %v1453 = vsub.f32 %v1202, %v1452
        %v1454 = vmul.f32 %v1451, 0.4
        %v1455 = vsub.f32 %v1204, %v1454
        %v1457 = vperm.slane %v1455, 0
        %1459 = vmatpush.xpose.msra.mxu0 0.0
        %1460 = vmatpush.xpose.msra.mxu0 0.0
        %1461 = vmatpush.xpose.msra.mxu0 0.0
        %1462 = vmatpush.xpose.msra.mxu0 0.0
        %1463 = vmatpush.xpose.msra.mxu0 0.0
        %1464 = vmatpush.xpose.msra.mxu0 0.0
        %1465 = vmatpush.xpose.msra.mxu0 0.0
        %1466 = vmatpush.xpose.msra.mxu0 0.0
        %1467 = vmatpush.xpose.msra.mxu0 0.0
        %1468 = vmatpush.xpose.msra.mxu0 0.0
        %1469 = vmatpush.xpose.msra.mxu0 0.0
        %1470 = vmatpush.xpose.msra.mxu0 0.0
        %1471 = vmatpush.xpose.msra.mxu0 0.0
        %1472 = vmatpush.xpose.msra.mxu0 0.0
        %1473 = vmatpush.xpose.msra.mxu0 0.0
        %1474 = vmatpush.xpose.msra.mxu0 %v1453
        %1475 = vmatmul.f32.gmra.mxu0 %v270
        %v1476 = vpop.f32.mrf.mxu0
        %v1477 = vadd.f32 %v1457, %v1476
        %1478 = vmatmul.f32.gmra.mxu0 %v271
        %v1479 = vpop.f32.mrf.mxu0
        %v1480 = vadd.f32 %v1457, %v1479
        %1481 = vdwg.mxu0
        %v1482 = vsel %vm425, %v1477, -inf
        %1483 = vmax.xlane.f32.xlu0 %v1482
        %v1484 = vpop.xlane.xlu0 %1483
        %v1485 = vsel %vm425, %v1480, -inf
        %1486 = vmax.xlane.f32.xlu0 %v1485
        %v1487 = vpop.xlane.xlu0 %1486
        %v1488 = vsub.f32 %v1477, %v1484
        %v1489 = vsub.f32 %v1480, %v1487
        %v1490 = vmul.f32 %v1488, 1.442695
        %v1491 = vpow.pop %v1490
        %v1492 = vmul.f32 %v1489, 1.442695
        %v1493 = vpow.pop %v1492
        %v1494 = vsel %vm425, %v1491, 0.0
        %1495 = vadd.xlane.f32.xlu0 %v1494
        %v1496 = vpop.xlane.xlu0 %1495
        %v1497 = vsel %vm425, %v1493, 0.0
        %1498 = vadd.xlane.f32.xlu0 %v1497
        %v1499 = vpop.xlane.xlu0 %1498
        %v1500 = vlog2.pop %v1496
        %v1501 = vmul.f32 %v1500, 0.6931472
        %v1502 = vlog2.pop %v1499
        %v1503 = vmul.f32 %v1502, 0.6931472
        %v1504 = vadd.f32 %v1484, %v1501
        %v1505 = vadd.f32 %v1487, %v1503
        %v1506 = vmul.f32 %v1477, %v358
        %v1507 = vmul.f32 %v1480, %v359
        %v1508 = vsel %vm425, %v1506, 0.0
        %1509 = vadd.xlane.f32.xlu0 %v1508
        %v1510 = vpop.xlane.xlu0 %1509
        %v1511 = vsel %vm425, %v1507, 0.0
        %1512 = vadd.xlane.f32.xlu0 %v1511
        %v1513 = vpop.xlane.xlu0 %1512
        %v1514 = vsub.f32 %v1504, %v1510
        %v1515 = vsub.f32 %v1505, %v1513
        %v1516 = vsel %vm836, %v1514, 0.0
        %v1517 = vsel %vm836, %v1515, 0.0
        %v1518 = vadd.f32 %v1516, %v1517
        %1519 = vadd.xlane.f32.xlu0 %v1518
        %v1520 = vpop.xlane.xlu0 %1519
        %v1521 = vrot.slane %v1520, 4
        %v1522 = vadd.f32 %v1520, %v1521
        %v1523 = vrot.slane %v1522, 2
        %v1524 = vadd.f32 %v1522, %v1523
        %v1525 = vrot.slane %v1524, 1
        %v1526 = vadd.f32 %v1524, %v1525
        %s1527 = vtos %v1526
        %v1528 = vrcp.pop 16.0
        %v1529 = vmul.f32 16.0, %v1528
        %v1530 = vsub.f32 1.0, %v1529
        %v1531 = vmul.f32 %v1528, %v1530
        %v1532 = vadd.f32 %v1528, %v1531
        %vm1533 = vweird.f32 %v1528
        %v1534 = vsel %vm1533, %v1528, %v1532
        %s1535 = vtos %v1534
        %s1536 = smul.f32 %s1527, %s1535
        %vm1537 = vcmp.ge.f32.partialorder %v1477, %v1484
        %vm1538 = vcmp.ge.f32.partialorder %v1480, %v1487
        %v1539 = vsel %vm1537, %v296, 8
        %v1540 = vsel %vm1538, %v296, 8
        %v1541 = vsel %vm425, %v1539, 2147483647
        %v1542 = vand.u32 %v1541, 65535
        %v1543 = vshra.s32 %v1541, 16
        %v1544 = vcvt.s32.f32 %v1542
        %v1545 = vcvt.s32.f32 %v1543
        %1546 = vmin.xlane.f32.xlu0 %v1545
        %v1547 = vpop.xlane.xlu0 %1546
        %vm1548 = vcmp.eq.f32.partialorder %v1545, %v1547
        %v1549 = vsel %vm1548, %v1544, inf
        %1550 = vmin.xlane.f32.xlu0 %v1549
        %v1551 = vpop.xlane.xlu0 %1550
        %v1552 = vcvt.f32.s32 %v1551
        %v1553 = vcvt.f32.s32 %v1547
        %v1554 = vshll.u32 %v1553, 16
        %v1555 = vadd.s32 %v1554, %v1552
        %v1556 = vsel %vm425, %v1540, 2147483647
        %v1557 = vand.u32 %v1556, 65535
        %v1558 = vshra.s32 %v1556, 16
        %v1559 = vcvt.s32.f32 %v1557
        %v1560 = vcvt.s32.f32 %v1558
        %1561 = vmin.xlane.f32.xlu0 %v1560
        %v1562 = vpop.xlane.xlu0 %1561
        %vm1563 = vcmp.eq.f32.partialorder %v1560, %v1562
        %v1564 = vsel %vm1563, %v1559, inf
        %1565 = vmin.xlane.f32.xlu0 %v1564
        %v1566 = vpop.xlane.xlu0 %1565
        %v1567 = vcvt.f32.s32 %v1566
        %v1568 = vcvt.f32.s32 %v1562
        %v1569 = vshll.u32 %v1568, 16
        %v1570 = vadd.s32 %v1569, %v1567
        %vm1571 = vcmp.eq.s32.totalorder %v296, %v1555
        %vm1572 = vcmp.eq.s32.totalorder %v296, %v1570
        %v1573 = vsel %vm1571, %v358, 0.0
        %v1574 = vsel %vm1572, %v359, 0.0
        %v1575 = vsel %vm425, %v1573, 0.0
        %v1576 = vsel %vm425, %v1574, 0.0
        %v1577 = vadd.f32 %v1575, %v1576
        %1578 = vadd.xlane.f32.xlu0 %v1577
        %v1579 = vpop.xlane.xlu0 %1578
        %v1580 = vrot.slane %v1579, 4
        %v1581 = vadd.f32 %v1579, %v1580
        %v1582 = vrot.slane %v1581, 2
        %v1583 = vadd.f32 %v1581, %v1582
        %v1584 = vrot.slane %v1583, 1
        %v1585 = vadd.f32 %v1583, %v1584
        %s1586 = vtos %v1585
        %vm1587 = vcmp.eq.s32.totalorder %v296, 3
        %vm1588 = vmand %vm870, %vm1587
        %v1589 = vstv %s1586
        %v1590 = vsel %vm1588, %v1589, 0.0
        %v1591 = vadd.f32 %v1340, %v1590
        %v1592 = vstv %s1536
        %v1593 = vsel %vm1588, %v1592, 0.0
        %v1594 = vadd.f32 %v1343, %v1593
        %v1595 = vsel %vm836, %v818, 0.0
        %v1596 = vsel %vm836, %v821, 0.0
        %v1597 = vadd.f32 %v1595, %v1596
        %1598 = vadd.xlane.f32.xlu0 %v1597
        %v1599 = vpop.xlane.xlu0 %1598
        %v1600 = vrot.slane %v1599, 4
        %v1601 = vadd.f32 %v1599, %v1600
        %v1602 = vrot.slane %v1601, 2
        %v1603 = vadd.f32 %v1601, %v1602
        %v1604 = vrot.slane %v1603, 1
        %v1605 = vadd.f32 %v1603, %v1604
        %s1606 = vtos %v1605
        %v1607 = vsel %vm836, %v652, 0.0
        %v1608 = vsel %vm836, %v653, 0.0
        %v1609 = vadd.f32 %v1607, %v1608
        %1610 = vadd.xlane.f32.xlu0 %v1609
        %v1611 = vpop.xlane.xlu0 %1610
        %v1612 = vrot.slane %v1611, 4
        %v1613 = vadd.f32 %v1611, %v1612
        %v1614 = vrot.slane %v1613, 2
        %v1615 = vadd.f32 %v1613, %v1614
        %v1616 = vrot.slane %v1615, 1
        %v1617 = vadd.f32 %v1615, %v1616
        %s1618 = vtos %v1617
        %v1619 = vrcp.pop 16.0
        %v1620 = vmul.f32 16.0, %v1619
        %v1621 = vsub.f32 1.0, %v1620
        %v1622 = vmul.f32 %v1619, %v1621
        %v1623 = vadd.f32 %v1619, %v1622
        %vm1624 = vweird.f32 %v1619
        %v1625 = vsel %vm1624, %v1619, %v1623
        %s1626 = vtos %v1625
        %s1627 = smul.f32 %s1618, %s1626
        %vm1628 = vcmp.eq.s32.totalorder %v835, 1
        %vm1629 = vmand %vm1628, %vm871
        %v1630 = vstv %s1606
        %v1631 = vsel %vm1629, %v1630, 0.0
        %v1632 = vadd.f32 %v1591, %v1631
        %v1633 = vstv %s1627
        %v1634 = vsel %vm1629, %v1633, 0.0
        %v1635 = vadd.f32 %v1594, %v1634
        %v1636 = vsub.f32 %v563, %v360
        %v1637 = vmul.f32 %v1636, %v886
        %1638 = vxpose.xlu0.b32.start [1/16] %v1637, 128
        %1639 = vxpose.xlu0.b32.cont [2/16] 0.0, 128
        %1640 = vxpose.xlu0.b32.cont [3/16] 0.0, 128
        %1641 = vxpose.xlu0.b32.cont [4/16] 0.0, 128
        %1642 = vxpose.xlu0.b32.cont [5/16] 0.0, 128
        %1643 = vxpose.xlu0.b32.cont [6/16] 0.0, 128
        %1644 = vxpose.xlu0.b32.cont [7/16] 0.0, 128
        %1645 = vxpose.xlu0.b32.cont [8/16] 0.0, 128
        %1646 = vxpose.xlu0.b32.cont [9/16] 0.0, 128
        %1647 = vxpose.xlu0.b32.cont [10/16] 0.0, 128
        %1648 = vxpose.xlu0.b32.cont [11/16] 0.0, 128
        %1649 = vxpose.xlu0.b32.cont [12/16] 0.0, 128
        %1650 = vxpose.xlu0.b32.cont [13/16] 0.0, 128
        %1651 = vxpose.xlu0.b32.cont [14/16] 0.0, 128
        %1652 = vxpose.xlu0.b32.cont [15/16] 0.0, 128
        %1653 = vxpose.xlu0.b32.end [16/16] 0.0, 128
        %v1654 = vpop.trf.xlu0
        %v1655 = vpop.trf.xlu0
        %v1656 = vpop.trf.xlu0
        %v1657 = vpop.trf.xlu0
        %v1658 = vpop.trf.xlu0
        %v1659 = vpop.trf.xlu0
        %v1660 = vpop.trf.xlu0
        %v1661 = vpop.trf.xlu0
        %v1662 = vpop.trf.xlu0
        %v1663 = vpop.trf.xlu0
        %v1664 = vpop.trf.xlu0
        %v1665 = vpop.trf.xlu0
        %v1666 = vpop.trf.xlu0
        %v1667 = vpop.trf.xlu0
        %v1668 = vpop.trf.xlu0
        %v1669 = vpop.trf.xlu0
        %v1671 = vsel %vm425, %v1654, 0
        %1673 = vmatpush.msra.mxu0 0.0
        %1674 = vmatpush.msra.mxu0 0.0
        %1675 = vmatpush.msra.mxu0 0.0
        %1676 = vmatpush.msra.mxu0 0.0
        %1677 = vmatpush.msra.mxu0 0.0
        %1678 = vmatpush.msra.mxu0 0.0
        %1679 = vmatpush.msra.mxu0 0.0
        %1680 = vmatpush.msra.mxu0 0.0
        %1681 = vmatpush.msra.mxu0 0.0
        %1682 = vmatpush.msra.mxu0 0.0
        %1683 = vmatpush.msra.mxu0 0.0
        %1684 = vmatpush.msra.mxu0 0.0
        %1685 = vmatpush.msra.mxu0 0.0
        %1686 = vmatpush.msra.mxu0 0.0
        %1687 = vmatpush.msra.mxu0 0.0
        %1688 = vmatpush.msra.mxu0 %v272
        %1689 = vmatmul.f32.gmra.mxu0 %v1671
        %v1690 = vpop.f32.mrf.mxu0
        %v1691 = vadd.f32 0.0, %v1690
        %1692 = vdwg.mxu0
        %v1693 = vsel %vm425, %v1637, 0.0
        %v1694 = vrot.slane %v1693, 4
        %v1695 = vadd.f32 %v1693, %v1694
        %v1696 = vrot.slane %v1695, 2
        %v1697 = vadd.f32 %v1695, %v1696
        %v1698 = vrot.slane %v1697, 1
        %v1699 = vadd.f32 %v1697, %v1698
        %v1700 = vmul.f32 %v1691, 0.4
        %v1701 = vsub.f32 %v293, %v1700
        %v1702 = vmul.f32 %v1699, 0.4
        %v1703 = vsub.f32 %v294, %v1702
        %v1705 = vperm.slane %v1703, 0
        %1707 = vmatpush.xpose.msra.mxu0 0.0
        %1708 = vmatpush.xpose.msra.mxu0 0.0
        %1709 = vmatpush.xpose.msra.mxu0 0.0
        %1710 = vmatpush.xpose.msra.mxu0 0.0
        %1711 = vmatpush.xpose.msra.mxu0 0.0
        %1712 = vmatpush.xpose.msra.mxu0 0.0
        %1713 = vmatpush.xpose.msra.mxu0 0.0
        %1714 = vmatpush.xpose.msra.mxu0 0.0
        %1715 = vmatpush.xpose.msra.mxu0 0.0
        %1716 = vmatpush.xpose.msra.mxu0 0.0
        %1717 = vmatpush.xpose.msra.mxu0 0.0
        %1718 = vmatpush.xpose.msra.mxu0 0.0
        %1719 = vmatpush.xpose.msra.mxu0 0.0
        %1720 = vmatpush.xpose.msra.mxu0 0.0
        %1721 = vmatpush.xpose.msra.mxu0 0.0
        %1722 = vmatpush.xpose.msra.mxu0 %v1701
        %1723 = vmatmul.f32.gmra.mxu0 %v273
        %v1724 = vpop.f32.mrf.mxu0
        %v1725 = vadd.f32 %v1705, %v1724
        %1726 = vmatmul.f32.gmra.mxu0 %v274
        %v1727 = vpop.f32.mrf.mxu0
        %v1728 = vadd.f32 %v1705, %v1727
        %1729 = vdwg.mxu0
        %v1730 = vsel %vm425, %v1725, -inf
        %1731 = vmax.xlane.f32.xlu0 %v1730
        %v1732 = vpop.xlane.xlu0 %1731
        %v1733 = vsel %vm425, %v1728, -inf
        %1734 = vmax.xlane.f32.xlu0 %v1733
        %v1735 = vpop.xlane.xlu0 %1734
        %v1736 = vsub.f32 %v1725, %v1732
        %v1737 = vsub.f32 %v1728, %v1735
        %v1738 = vmul.f32 %v1736, 1.442695
        %v1739 = vpow.pop %v1738
        %v1740 = vmul.f32 %v1737, 1.442695
        %v1741 = vpow.pop %v1740
        %v1742 = vsel %vm425, %v1739, 0.0
        %1743 = vadd.xlane.f32.xlu0 %v1742
        %v1744 = vpop.xlane.xlu0 %1743
        %v1745 = vsel %vm425, %v1741, 0.0
        %1746 = vadd.xlane.f32.xlu0 %v1745
        %v1747 = vpop.xlane.xlu0 %1746
        %v1748 = vlog2.pop %v1744
        %v1749 = vmul.f32 %v1748, 0.6931472
        %v1750 = vlog2.pop %v1747
        %v1751 = vmul.f32 %v1750, 0.6931472
        %v1752 = vadd.f32 %v1732, %v1749
        %v1753 = vadd.f32 %v1735, %v1751
        %v1754 = vmul.f32 %v1725, %v361
        %v1755 = vmul.f32 %v1728, %v362
        %v1756 = vsel %vm425, %v1754, 0.0
        %1757 = vadd.xlane.f32.xlu0 %v1756
        %v1758 = vpop.xlane.xlu0 %1757
        %v1759 = vsel %vm425, %v1755, 0.0
        %1760 = vadd.xlane.f32.xlu0 %v1759
        %v1761 = vpop.xlane.xlu0 %1760
        %v1762 = vsub.f32 %v1752, %v1758
        %v1763 = vsub.f32 %v1753, %v1761
        %v1764 = vsel %vm836, %v1762, 0.0
        %v1765 = vsel %vm836, %v1763, 0.0
        %v1766 = vadd.f32 %v1764, %v1765
        %1767 = vadd.xlane.f32.xlu0 %v1766
        %v1768 = vpop.xlane.xlu0 %1767
        %v1769 = vrot.slane %v1768, 4
        %v1770 = vadd.f32 %v1768, %v1769
        %v1771 = vrot.slane %v1770, 2
        %v1772 = vadd.f32 %v1770, %v1771
        %v1773 = vrot.slane %v1772, 1
        %v1774 = vadd.f32 %v1772, %v1773
        %s1775 = vtos %v1774
        %v1776 = vrcp.pop 16.0
        %v1777 = vmul.f32 16.0, %v1776
        %v1778 = vsub.f32 1.0, %v1777
        %v1779 = vmul.f32 %v1776, %v1778
        %v1780 = vadd.f32 %v1776, %v1779
        %vm1781 = vweird.f32 %v1776
        %v1782 = vsel %vm1781, %v1776, %v1780
        %s1783 = vtos %v1782
        %s1784 = smul.f32 %s1775, %s1783
        %vm1785 = vcmp.ge.f32.partialorder %v1725, %v1732
        %vm1786 = vcmp.ge.f32.partialorder %v1728, %v1735
        %v1787 = vsel %vm1785, %v296, 8
        %v1788 = vsel %vm1786, %v296, 8
        %v1789 = vsel %vm425, %v1787, 2147483647
        %v1790 = vand.u32 %v1789, 65535
        %v1791 = vshra.s32 %v1789, 16
        %v1792 = vcvt.s32.f32 %v1790
        %v1793 = vcvt.s32.f32 %v1791
        %1794 = vmin.xlane.f32.xlu0 %v1793
        %v1795 = vpop.xlane.xlu0 %1794
        %vm1796 = vcmp.eq.f32.partialorder %v1793, %v1795
        %v1797 = vsel %vm1796, %v1792, inf
        %1798 = vmin.xlane.f32.xlu0 %v1797
        %v1799 = vpop.xlane.xlu0 %1798
        %v1800 = vcvt.f32.s32 %v1799
        %v1801 = vcvt.f32.s32 %v1795
        %v1802 = vshll.u32 %v1801, 16
        %v1803 = vadd.s32 %v1802, %v1800
        %v1804 = vsel %vm425, %v1788, 2147483647
        %v1805 = vand.u32 %v1804, 65535
        %v1806 = vshra.s32 %v1804, 16
        %v1807 = vcvt.s32.f32 %v1805
        %v1808 = vcvt.s32.f32 %v1806
        %1809 = vmin.xlane.f32.xlu0 %v1808
        %v1810 = vpop.xlane.xlu0 %1809
        %vm1811 = vcmp.eq.f32.partialorder %v1808, %v1810
        %v1812 = vsel %vm1811, %v1807, inf
        %1813 = vmin.xlane.f32.xlu0 %v1812
        %v1814 = vpop.xlane.xlu0 %1813
        %v1815 = vcvt.f32.s32 %v1814
        %v1816 = vcvt.f32.s32 %v1810
        %v1817 = vshll.u32 %v1816, 16
        %v1818 = vadd.s32 %v1817, %v1815
        %vm1819 = vcmp.eq.s32.totalorder %v296, %v1803
        %vm1820 = vcmp.eq.s32.totalorder %v296, %v1818
        %v1821 = vsel %vm1819, %v361, 0.0
        %v1822 = vsel %vm1820, %v362, 0.0
        %v1823 = vsel %vm425, %v1821, 0.0
        %v1824 = vsel %vm425, %v1822, 0.0
        %v1825 = vadd.f32 %v1823, %v1824
        %1826 = vadd.xlane.f32.xlu0 %v1825
        %v1827 = vpop.xlane.xlu0 %1826
        %v1828 = vrot.slane %v1827, 4
        %v1829 = vadd.f32 %v1827, %v1828
        %v1830 = vrot.slane %v1829, 2
        %v1831 = vadd.f32 %v1829, %v1830
        %v1832 = vrot.slane %v1831, 1
        %v1833 = vadd.f32 %v1831, %v1832
        %s1834 = vtos %v1833
        %vm1835 = vmand %vm1628, %vm1085
        %v1836 = vstv %s1834
        %v1837 = vsel %vm1835, %v1836, 0.0
        %v1838 = vadd.f32 %v1632, %v1837
        %v1839 = vstv %s1784
        %v1840 = vsel %vm1835, %v1839, 0.0
        %v1841 = vadd.f32 %v1635, %v1840
        %1842 = vmatpush.xpose.msra.mxu0 0.0
        %1843 = vmatpush.xpose.msra.mxu0 0.0
        %1844 = vmatpush.xpose.msra.mxu0 0.0
        %1845 = vmatpush.xpose.msra.mxu0 0.0
        %1846 = vmatpush.xpose.msra.mxu0 0.0
        %1847 = vmatpush.xpose.msra.mxu0 0.0
        %1848 = vmatpush.xpose.msra.mxu0 0.0
        %1849 = vmatpush.xpose.msra.mxu0 0.0
        %1850 = vmatpush.xpose.msra.mxu0 0.0
        %1851 = vmatpush.xpose.msra.mxu0 0.0
        %1852 = vmatpush.xpose.msra.mxu0 0.0
        %1853 = vmatpush.xpose.msra.mxu0 0.0
        %1854 = vmatpush.xpose.msra.mxu0 0.0
        %1855 = vmatpush.xpose.msra.mxu0 0.0
        %1856 = vmatpush.xpose.msra.mxu0 0.0
        %1857 = vmatpush.xpose.msra.mxu0 %v1701
        %1858 = vmatmul.f32.gmra.mxu0 %v272
        %v1859 = vpop.f32.mrf.mxu0
        %v1860 = vadd.f32 %v1705, %v1859
        %1861 = vdwg.mxu0
        %v1862 = vsel %vm425, %v1860, -inf
        %1863 = vmax.xlane.f32.xlu0 %v1862
        %v1864 = vpop.xlane.xlu0 %1863
        %v1865 = vsub.f32 %v1860, %v1864
        %v1866 = vmul.f32 %v1865, 1.442695
        %v1867 = vpow.pop %v1866
        %v1868 = vsel %vm425, %v1867, 0.0
        %1869 = vadd.xlane.f32.xlu0 %v1868
        %v1870 = vpop.xlane.xlu0 %1869
        %v1871 = vrcp.pop %v1870
        %v1872 = vmul.f32 %v1870, %v1871
        %v1873 = vsub.f32 1.0, %v1872
        %v1874 = vmul.f32 %v1871, %v1873
        %v1875 = vadd.f32 %v1871, %v1874
        %vm1876 = vweird.f32 %v1870
        %vm1877 = vweird.f32 %v1871
        %vm1878 = vmor %vm1876, %vm1877
        %v1879 = vsel %vm1878, %v1871, %v1875
        %v1880 = vand.u32 2147483647, %v1870
        %vm1881 = vcmp.eq.f32.partialorder %v1880, 8.507059e+37
        %v1882 = vand.u32 %v1870, 2147483648
        %v1883 = vor.u32 1.1754944e-38, %v1882
        %v1884 = vsel %vm1881, %v1883, %v1879
        %v1885 = vmul.f32 %v1867, %v1884
        %v1886 = vsub.f32 %v1885, %v360
        %v1887 = vmul.f32 %v1886, %v886
        %1888 = vxpose.xlu0.b32.start [1/16] %v1887, 128
        %1889 = vxpose.xlu0.b32.cont [2/16] 0.0, 128
        %1890 = vxpose.xlu0.b32.cont [3/16] 0.0, 128
        %1891 = vxpose.xlu0.b32.cont [4/16] 0.0, 128
        %1892 = vxpose.xlu0.b32.cont [5/16] 0.0, 128
        %1893 = vxpose.xlu0.b32.cont [6/16] 0.0, 128
        %1894 = vxpose.xlu0.b32.cont [7/16] 0.0, 128
        %1895 = vxpose.xlu0.b32.cont [8/16] 0.0, 128
        %1896 = vxpose.xlu0.b32.cont [9/16] 0.0, 128
        %1897 = vxpose.xlu0.b32.cont [10/16] 0.0, 128
        %1898 = vxpose.xlu0.b32.cont [11/16] 0.0, 128
        %1899 = vxpose.xlu0.b32.cont [12/16] 0.0, 128
        %1900 = vxpose.xlu0.b32.cont [13/16] 0.0, 128
        %1901 = vxpose.xlu0.b32.cont [14/16] 0.0, 128
        %1902 = vxpose.xlu0.b32.cont [15/16] 0.0, 128
        %1903 = vxpose.xlu0.b32.end [16/16] 0.0, 128
        %v1904 = vpop.trf.xlu0
        %v1905 = vpop.trf.xlu0
        %v1906 = vpop.trf.xlu0
        %v1907 = vpop.trf.xlu0
        %v1908 = vpop.trf.xlu0
        %v1909 = vpop.trf.xlu0
        %v1910 = vpop.trf.xlu0
        %v1911 = vpop.trf.xlu0
        %v1912 = vpop.trf.xlu0
        %v1913 = vpop.trf.xlu0
        %v1914 = vpop.trf.xlu0
        %v1915 = vpop.trf.xlu0
        %v1916 = vpop.trf.xlu0
        %v1917 = vpop.trf.xlu0
        %v1918 = vpop.trf.xlu0
        %v1919 = vpop.trf.xlu0
        %v1921 = vsel %vm425, %v1904, 0
        %1923 = vmatpush.msra.mxu0 0.0
        %1924 = vmatpush.msra.mxu0 0.0
        %1925 = vmatpush.msra.mxu0 0.0
        %1926 = vmatpush.msra.mxu0 0.0
        %1927 = vmatpush.msra.mxu0 0.0
        %1928 = vmatpush.msra.mxu0 0.0
        %1929 = vmatpush.msra.mxu0 0.0
        %1930 = vmatpush.msra.mxu0 0.0
        %1931 = vmatpush.msra.mxu0 0.0
        %1932 = vmatpush.msra.mxu0 0.0
        %1933 = vmatpush.msra.mxu0 0.0
        %1934 = vmatpush.msra.mxu0 0.0
        %1935 = vmatpush.msra.mxu0 0.0
        %1936 = vmatpush.msra.mxu0 0.0
        %1937 = vmatpush.msra.mxu0 0.0
        %1938 = vmatpush.msra.mxu0 %v272
        %1939 = vmatmul.f32.gmra.mxu0 %v1921
        %v1940 = vpop.f32.mrf.mxu0
        %v1941 = vadd.f32 0.0, %v1940
        %1942 = vdwg.mxu0
        %v1943 = vsel %vm425, %v1887, 0.0
        %v1944 = vrot.slane %v1943, 4
        %v1945 = vadd.f32 %v1943, %v1944
        %v1946 = vrot.slane %v1945, 2
        %v1947 = vadd.f32 %v1945, %v1946
        %v1948 = vrot.slane %v1947, 1
        %v1949 = vadd.f32 %v1947, %v1948
        %v1950 = vmul.f32 %v1941, 0.4
        %v1951 = vsub.f32 %v1701, %v1950
        %v1952 = vmul.f32 %v1949, 0.4
        %v1953 = vsub.f32 %v1703, %v1952
        %v1955 = vperm.slane %v1953, 0
        %1957 = vmatpush.xpose.msra.mxu0 0.0
        %1958 = vmatpush.xpose.msra.mxu0 0.0
        %1959 = vmatpush.xpose.msra.mxu0 0.0
        %1960 = vmatpush.xpose.msra.mxu0 0.0
        %1961 = vmatpush.xpose.msra.mxu0 0.0
        %1962 = vmatpush.xpose.msra.mxu0 0.0
        %1963 = vmatpush.xpose.msra.mxu0 0.0
        %1964 = vmatpush.xpose.msra.mxu0 0.0
        %1965 = vmatpush.xpose.msra.mxu0 0.0
        %1966 = vmatpush.xpose.msra.mxu0 0.0
        %1967 = vmatpush.xpose.msra.mxu0 0.0
        %1968 = vmatpush.xpose.msra.mxu0 0.0
        %1969 = vmatpush.xpose.msra.mxu0 0.0
        %1970 = vmatpush.xpose.msra.mxu0 0.0
        %1971 = vmatpush.xpose.msra.mxu0 0.0
        %1972 = vmatpush.xpose.msra.mxu0 %v1951
        %1973 = vmatmul.f32.gmra.mxu0 %v273
        %v1974 = vpop.f32.mrf.mxu0
        %v1975 = vadd.f32 %v1955, %v1974
        %1976 = vmatmul.f32.gmra.mxu0 %v274
        %v1977 = vpop.f32.mrf.mxu0
        %v1978 = vadd.f32 %v1955, %v1977
        %1979 = vdwg.mxu0
        %v1980 = vsel %vm425, %v1975, -inf
        %1981 = vmax.xlane.f32.xlu0 %v1980
        %v1982 = vpop.xlane.xlu0 %1981
        %v1983 = vsel %vm425, %v1978, -inf
        %1984 = vmax.xlane.f32.xlu0 %v1983
        %v1985 = vpop.xlane.xlu0 %1984
        %v1986 = vsub.f32 %v1975, %v1982
        %v1987 = vsub.f32 %v1978, %v1985
        %v1988 = vmul.f32 %v1986, 1.442695
        %v1989 = vpow.pop %v1988
        %v1990 = vmul.f32 %v1987, 1.442695
        %v1991 = vpow.pop %v1990
        %v1992 = vsel %vm425, %v1989, 0.0
        %1993 = vadd.xlane.f32.xlu0 %v1992
        %v1994 = vpop.xlane.xlu0 %1993
        %v1995 = vsel %vm425, %v1991, 0.0
        %1996 = vadd.xlane.f32.xlu0 %v1995
        %v1997 = vpop.xlane.xlu0 %1996
        %v1998 = vlog2.pop %v1994
        %v1999 = vmul.f32 %v1998, 0.6931472
        %v2000 = vlog2.pop %v1997
        %v2001 = vmul.f32 %v2000, 0.6931472
        %v2002 = vadd.f32 %v1982, %v1999
        %v2003 = vadd.f32 %v1985, %v2001
        %v2004 = vmul.f32 %v1975, %v361
        %v2005 = vmul.f32 %v1978, %v362
        %v2006 = vsel %vm425, %v2004, 0.0
        %2007 = vadd.xlane.f32.xlu0 %v2006
        %v2008 = vpop.xlane.xlu0 %2007
        %v2009 = vsel %vm425, %v2005, 0.0
        %2010 = vadd.xlane.f32.xlu0 %v2009
        %v2011 = vpop.xlane.xlu0 %2010
        %v2012 = vsub.f32 %v2002, %v2008
        %v2013 = vsub.f32 %v2003, %v2011
        %v2014 = vsel %vm836, %v2012, 0.0
        %v2015 = vsel %vm836, %v2013, 0.0
        %v2016 = vadd.f32 %v2014, %v2015
        %2017 = vadd.xlane.f32.xlu0 %v2016
        %v2018 = vpop.xlane.xlu0 %2017
        %v2019 = vrot.slane %v2018, 4
        %v2020 = vadd.f32 %v2018, %v2019
        %v2021 = vrot.slane %v2020, 2
        %v2022 = vadd.f32 %v2020, %v2021
        %v2023 = vrot.slane %v2022, 1
        %v2024 = vadd.f32 %v2022, %v2023
        %s2025 = vtos %v2024
        %v2026 = vrcp.pop 16.0
        %v2027 = vmul.f32 16.0, %v2026
        %v2028 = vsub.f32 1.0, %v2027
        %v2029 = vmul.f32 %v2026, %v2028
        %v2030 = vadd.f32 %v2026, %v2029
        %vm2031 = vweird.f32 %v2026
        %v2032 = vsel %vm2031, %v2026, %v2030
        %s2033 = vtos %v2032
        %s2034 = smul.f32 %s2025, %s2033
        %vm2035 = vcmp.ge.f32.partialorder %v1975, %v1982
        %vm2036 = vcmp.ge.f32.partialorder %v1978, %v1985
        %v2037 = vsel %vm2035, %v296, 8
        %v2038 = vsel %vm2036, %v296, 8
        %v2039 = vsel %vm425, %v2037, 2147483647
        %v2040 = vand.u32 %v2039, 65535
        %v2041 = vshra.s32 %v2039, 16
        %v2042 = vcvt.s32.f32 %v2040
        %v2043 = vcvt.s32.f32 %v2041
        %2044 = vmin.xlane.f32.xlu0 %v2043
        %v2045 = vpop.xlane.xlu0 %2044
        %vm2046 = vcmp.eq.f32.partialorder %v2043, %v2045
        %v2047 = vsel %vm2046, %v2042, inf
        %2048 = vmin.xlane.f32.xlu0 %v2047
        %v2049 = vpop.xlane.xlu0 %2048
        %v2050 = vcvt.f32.s32 %v2049
        %v2051 = vcvt.f32.s32 %v2045
        %v2052 = vshll.u32 %v2051, 16
        %v2053 = vadd.s32 %v2052, %v2050
        %v2054 = vsel %vm425, %v2038, 2147483647
        %v2055 = vand.u32 %v2054, 65535
        %v2056 = vshra.s32 %v2054, 16
        %v2057 = vcvt.s32.f32 %v2055
        %v2058 = vcvt.s32.f32 %v2056
        %2059 = vmin.xlane.f32.xlu0 %v2058
        %v2060 = vpop.xlane.xlu0 %2059
        %vm2061 = vcmp.eq.f32.partialorder %v2058, %v2060
        %v2062 = vsel %vm2061, %v2057, inf
        %2063 = vmin.xlane.f32.xlu0 %v2062
        %v2064 = vpop.xlane.xlu0 %2063
        %v2065 = vcvt.f32.s32 %v2064
        %v2066 = vcvt.f32.s32 %v2060
        %v2067 = vshll.u32 %v2066, 16
        %v2068 = vadd.s32 %v2067, %v2065
        %vm2069 = vcmp.eq.s32.totalorder %v296, %v2053
        %vm2070 = vcmp.eq.s32.totalorder %v296, %v2068
        %v2071 = vsel %vm2069, %v361, 0.0
        %v2072 = vsel %vm2070, %v362, 0.0
        %v2073 = vsel %vm425, %v2071, 0.0
        %v2074 = vsel %vm425, %v2072, 0.0
        %v2075 = vadd.f32 %v2073, %v2074
        %2076 = vadd.xlane.f32.xlu0 %v2075
        %v2077 = vpop.xlane.xlu0 %2076
        %v2078 = vrot.slane %v2077, 4
        %v2079 = vadd.f32 %v2077, %v2078
        %v2080 = vrot.slane %v2079, 2
        %v2081 = vadd.f32 %v2079, %v2080
        %v2082 = vrot.slane %v2081, 1
        %v2083 = vadd.f32 %v2081, %v2082
        %s2084 = vtos %v2083
        %vm2085 = vmand %vm1628, %vm1336
        %v2086 = vstv %s2084
        %v2087 = vsel %vm2085, %v2086, 0.0
        %v2088 = vadd.f32 %v1838, %v2087
        %v2089 = vstv %s2034
        %v2090 = vsel %vm2085, %v2089, 0.0
        %v2091 = vadd.f32 %v1841, %v2090
        %2092 = vmatpush.xpose.msra.mxu0 0.0
        %2093 = vmatpush.xpose.msra.mxu0 0.0
        %2094 = vmatpush.xpose.msra.mxu0 0.0
        %2095 = vmatpush.xpose.msra.mxu0 0.0
        %2096 = vmatpush.xpose.msra.mxu0 0.0
        %2097 = vmatpush.xpose.msra.mxu0 0.0
        %2098 = vmatpush.xpose.msra.mxu0 0.0
        %2099 = vmatpush.xpose.msra.mxu0 0.0
        %2100 = vmatpush.xpose.msra.mxu0 0.0
        %2101 = vmatpush.xpose.msra.mxu0 0.0
        %2102 = vmatpush.xpose.msra.mxu0 0.0
        %2103 = vmatpush.xpose.msra.mxu0 0.0
        %2104 = vmatpush.xpose.msra.mxu0 0.0
        %2105 = vmatpush.xpose.msra.mxu0 0.0
        %2106 = vmatpush.xpose.msra.mxu0 0.0
        %2107 = vmatpush.xpose.msra.mxu0 %v1951
        %2108 = vmatmul.f32.gmra.mxu0 %v272
        %v2109 = vpop.f32.mrf.mxu0
        %v2110 = vadd.f32 %v1955, %v2109
        %2111 = vdwg.mxu0
        %v2112 = vsel %vm425, %v2110, -inf
        %2113 = vmax.xlane.f32.xlu0 %v2112
        %v2114 = vpop.xlane.xlu0 %2113
        %v2115 = vsub.f32 %v2110, %v2114
        %v2116 = vmul.f32 %v2115, 1.442695
        %v2117 = vpow.pop %v2116
        %v2118 = vsel %vm425, %v2117, 0.0
        %2119 = vadd.xlane.f32.xlu0 %v2118
        %v2120 = vpop.xlane.xlu0 %2119
        %v2121 = vrcp.pop %v2120
        %v2122 = vmul.f32 %v2120, %v2121
        %v2123 = vsub.f32 1.0, %v2122
        %v2124 = vmul.f32 %v2121, %v2123
        %v2125 = vadd.f32 %v2121, %v2124
        %vm2126 = vweird.f32 %v2120
        %vm2127 = vweird.f32 %v2121
        %vm2128 = vmor %vm2126, %vm2127
        %v2129 = vsel %vm2128, %v2121, %v2125
        %v2130 = vand.u32 2147483647, %v2120
        %vm2131 = vcmp.eq.f32.partialorder %v2130, 8.507059e+37
        %v2132 = vand.u32 %v2120, 2147483648
        %v2133 = vor.u32 1.1754944e-38, %v2132
        %v2134 = vsel %vm2131, %v2133, %v2129
        %v2135 = vmul.f32 %v2117, %v2134
        %v2136 = vsub.f32 %v2135, %v360
        %v2137 = vmul.f32 %v2136, %v886
        %2138 = vxpose.xlu0.b32.start [1/16] %v2137, 128
        %2139 = vxpose.xlu0.b32.cont [2/16] 0.0, 128
        %2140 = vxpose.xlu0.b32.cont [3/16] 0.0, 128
        %2141 = vxpose.xlu0.b32.cont [4/16] 0.0, 128
        %2142 = vxpose.xlu0.b32.cont [5/16] 0.0, 128
        %2143 = vxpose.xlu0.b32.cont [6/16] 0.0, 128
        %2144 = vxpose.xlu0.b32.cont [7/16] 0.0, 128
        %2145 = vxpose.xlu0.b32.cont [8/16] 0.0, 128
        %2146 = vxpose.xlu0.b32.cont [9/16] 0.0, 128
        %2147 = vxpose.xlu0.b32.cont [10/16] 0.0, 128
        %2148 = vxpose.xlu0.b32.cont [11/16] 0.0, 128
        %2149 = vxpose.xlu0.b32.cont [12/16] 0.0, 128
        %2150 = vxpose.xlu0.b32.cont [13/16] 0.0, 128
        %2151 = vxpose.xlu0.b32.cont [14/16] 0.0, 128
        %2152 = vxpose.xlu0.b32.cont [15/16] 0.0, 128
        %2153 = vxpose.xlu0.b32.end [16/16] 0.0, 128
        %v2154 = vpop.trf.xlu0
        %v2155 = vpop.trf.xlu0
        %v2156 = vpop.trf.xlu0
        %v2157 = vpop.trf.xlu0
        %v2158 = vpop.trf.xlu0
        %v2159 = vpop.trf.xlu0
        %v2160 = vpop.trf.xlu0
        %v2161 = vpop.trf.xlu0
        %v2162 = vpop.trf.xlu0
        %v2163 = vpop.trf.xlu0
        %v2164 = vpop.trf.xlu0
        %v2165 = vpop.trf.xlu0
        %v2166 = vpop.trf.xlu0
        %v2167 = vpop.trf.xlu0
        %v2168 = vpop.trf.xlu0
        %v2169 = vpop.trf.xlu0
        %v2171 = vsel %vm425, %v2154, 0
        %2173 = vmatpush.msra.mxu0 0.0
        %2174 = vmatpush.msra.mxu0 0.0
        %2175 = vmatpush.msra.mxu0 0.0
        %2176 = vmatpush.msra.mxu0 0.0
        %2177 = vmatpush.msra.mxu0 0.0
        %2178 = vmatpush.msra.mxu0 0.0
        %2179 = vmatpush.msra.mxu0 0.0
        %2180 = vmatpush.msra.mxu0 0.0
        %2181 = vmatpush.msra.mxu0 0.0
        %2182 = vmatpush.msra.mxu0 0.0
        %2183 = vmatpush.msra.mxu0 0.0
        %2184 = vmatpush.msra.mxu0 0.0
        %2185 = vmatpush.msra.mxu0 0.0
        %2186 = vmatpush.msra.mxu0 0.0
        %2187 = vmatpush.msra.mxu0 0.0
        %2188 = vmatpush.msra.mxu0 %v272
        %2189 = vmatmul.f32.gmra.mxu0 %v2171
        %v2190 = vpop.f32.mrf.mxu0
        %v2191 = vadd.f32 0.0, %v2190
        %2192 = vdwg.mxu0
        %v2193 = vsel %vm425, %v2137, 0.0
        %v2194 = vrot.slane %v2193, 4
        %v2195 = vadd.f32 %v2193, %v2194
        %v2196 = vrot.slane %v2195, 2
        %v2197 = vadd.f32 %v2195, %v2196
        %v2198 = vrot.slane %v2197, 1
        %v2199 = vadd.f32 %v2197, %v2198
        %v2200 = vmul.f32 %v2191, 0.4
        %v2201 = vsub.f32 %v1951, %v2200
        %v2202 = vmul.f32 %v2199, 0.4
        %v2203 = vsub.f32 %v1953, %v2202
        %v2205 = vperm.slane %v2203, 0
        %2207 = vmatpush.xpose.msra.mxu0 0.0
        %2208 = vmatpush.xpose.msra.mxu0 0.0
        %2209 = vmatpush.xpose.msra.mxu0 0.0
        %2210 = vmatpush.xpose.msra.mxu0 0.0
        %2211 = vmatpush.xpose.msra.mxu0 0.0
        %2212 = vmatpush.xpose.msra.mxu0 0.0
        %2213 = vmatpush.xpose.msra.mxu0 0.0
        %2214 = vmatpush.xpose.msra.mxu0 0.0
        %2215 = vmatpush.xpose.msra.mxu0 0.0
        %2216 = vmatpush.xpose.msra.mxu0 0.0
        %2217 = vmatpush.xpose.msra.mxu0 0.0
        %2218 = vmatpush.xpose.msra.mxu0 0.0
        %2219 = vmatpush.xpose.msra.mxu0 0.0
        %2220 = vmatpush.xpose.msra.mxu0 0.0
        %2221 = vmatpush.xpose.msra.mxu0 0.0
        %2222 = vmatpush.xpose.msra.mxu0 %v2201
        %2223 = vmatmul.f32.gmra.mxu0 %v273
        %v2224 = vpop.f32.mrf.mxu0
        %v2225 = vadd.f32 %v2205, %v2224
        %2226 = vmatmul.f32.gmra.mxu0 %v274
        %v2227 = vpop.f32.mrf.mxu0
        %v2228 = vadd.f32 %v2205, %v2227
        %2229 = vdwg.mxu0
        %v2230 = vsel %vm425, %v2225, -inf
        %2231 = vmax.xlane.f32.xlu0 %v2230
        %v2232 = vpop.xlane.xlu0 %2231
        %v2233 = vsel %vm425, %v2228, -inf
        %2234 = vmax.xlane.f32.xlu0 %v2233
        %v2235 = vpop.xlane.xlu0 %2234
        %v2236 = vsub.f32 %v2225, %v2232
        %v2237 = vsub.f32 %v2228, %v2235
        %v2238 = vmul.f32 %v2236, 1.442695
        %v2239 = vpow.pop %v2238
        %v2240 = vmul.f32 %v2237, 1.442695
        %v2241 = vpow.pop %v2240
        %v2242 = vsel %vm425, %v2239, 0.0
        %2243 = vadd.xlane.f32.xlu0 %v2242
        %v2244 = vpop.xlane.xlu0 %2243
        %v2245 = vsel %vm425, %v2241, 0.0
        %2246 = vadd.xlane.f32.xlu0 %v2245
        %v2247 = vpop.xlane.xlu0 %2246
        %v2248 = vlog2.pop %v2244
        %v2249 = vmul.f32 %v2248, 0.6931472
        %v2250 = vlog2.pop %v2247
        %v2251 = vmul.f32 %v2250, 0.6931472
        %v2252 = vadd.f32 %v2232, %v2249
        %v2253 = vadd.f32 %v2235, %v2251
        %v2254 = vmul.f32 %v2225, %v361
        %v2255 = vmul.f32 %v2228, %v362
        %v2256 = vsel %vm425, %v2254, 0.0
        %2257 = vadd.xlane.f32.xlu0 %v2256
        %v2258 = vpop.xlane.xlu0 %2257
        %v2259 = vsel %vm425, %v2255, 0.0
        %2260 = vadd.xlane.f32.xlu0 %v2259
        %v2261 = vpop.xlane.xlu0 %2260
        %v2262 = vsub.f32 %v2252, %v2258
        %v2263 = vsub.f32 %v2253, %v2261
        %v2264 = vsel %vm836, %v2262, 0.0
        %v2265 = vsel %vm836, %v2263, 0.0
        %v2266 = vadd.f32 %v2264, %v2265
        %2267 = vadd.xlane.f32.xlu0 %v2266
        %v2268 = vpop.xlane.xlu0 %2267
        %v2269 = vrot.slane %v2268, 4
        %v2270 = vadd.f32 %v2268, %v2269
        %v2271 = vrot.slane %v2270, 2
        %v2272 = vadd.f32 %v2270, %v2271
        %v2273 = vrot.slane %v2272, 1
        %v2274 = vadd.f32 %v2272, %v2273
        %s2275 = vtos %v2274
        %v2276 = vrcp.pop 16.0
        %v2277 = vmul.f32 16.0, %v2276
        %v2278 = vsub.f32 1.0, %v2277
        %v2279 = vmul.f32 %v2276, %v2278
        %v2280 = vadd.f32 %v2276, %v2279
        %vm2281 = vweird.f32 %v2276
        %v2282 = vsel %vm2281, %v2276, %v2280
        %s2283 = vtos %v2282
        %s2284 = smul.f32 %s2275, %s2283
        %vm2285 = vcmp.ge.f32.partialorder %v2225, %v2232
        %vm2286 = vcmp.ge.f32.partialorder %v2228, %v2235
        %v2287 = vsel %vm2285, %v296, 8
        %v2288 = vsel %vm2286, %v296, 8
        %v2289 = vsel %vm425, %v2287, 2147483647
        %v2290 = vand.u32 %v2289, 65535
        %v2291 = vshra.s32 %v2289, 16
        %v2292 = vcvt.s32.f32 %v2290
        %v2293 = vcvt.s32.f32 %v2291
        %2294 = vmin.xlane.f32.xlu0 %v2293
        %v2295 = vpop.xlane.xlu0 %2294
        %vm2296 = vcmp.eq.f32.partialorder %v2293, %v2295
        %v2297 = vsel %vm2296, %v2292, inf
        %2298 = vmin.xlane.f32.xlu0 %v2297
        %v2299 = vpop.xlane.xlu0 %2298
        %v2300 = vcvt.f32.s32 %v2299
        %v2301 = vcvt.f32.s32 %v2295
        %v2302 = vshll.u32 %v2301, 16
        %v2303 = vadd.s32 %v2302, %v2300
        %v2304 = vsel %vm425, %v2288, 2147483647
        %v2305 = vand.u32 %v2304, 65535
        %v2306 = vshra.s32 %v2304, 16
        %v2307 = vcvt.s32.f32 %v2305
        %v2308 = vcvt.s32.f32 %v2306
        %2309 = vmin.xlane.f32.xlu0 %v2308
        %v2310 = vpop.xlane.xlu0 %2309
        %vm2311 = vcmp.eq.f32.partialorder %v2308, %v2310
        %v2312 = vsel %vm2311, %v2307, inf
        %2313 = vmin.xlane.f32.xlu0 %v2312
        %v2314 = vpop.xlane.xlu0 %2313
        %v2315 = vcvt.f32.s32 %v2314
        %v2316 = vcvt.f32.s32 %v2310
        %v2317 = vshll.u32 %v2316, 16
        %v2318 = vadd.s32 %v2317, %v2315
        %vm2319 = vcmp.eq.s32.totalorder %v296, %v2303
        %vm2320 = vcmp.eq.s32.totalorder %v296, %v2318
        %v2321 = vsel %vm2319, %v361, 0.0
        %v2322 = vsel %vm2320, %v362, 0.0
        %v2323 = vsel %vm425, %v2321, 0.0
        %v2324 = vsel %vm425, %v2322, 0.0
        %v2325 = vadd.f32 %v2323, %v2324
        %2326 = vadd.xlane.f32.xlu0 %v2325
        %v2327 = vpop.xlane.xlu0 %2326
        %v2328 = vrot.slane %v2327, 4
        %v2329 = vadd.f32 %v2327, %v2328
        %v2330 = vrot.slane %v2329, 2
        %v2331 = vadd.f32 %v2329, %v2330
        %v2332 = vrot.slane %v2331, 1
        %v2333 = vadd.f32 %v2331, %v2332
        %s2334 = vtos %v2333
        %vm2335 = vmand %vm1628, %vm1587
        %v2336 = vstv %s2334
        %v2337 = vsel %vm2335, %v2336, 0.0
        %v2338 = vadd.f32 %v2088, %v2337
        %v2339 = vstv %s2284
        %v2340 = vsel %vm2335, %v2339, 0.0
        %v2341 = vadd.f32 %v2091, %v2340
        %v2342 = vsel %vm836, %v824, 0.0
        %v2343 = vsel %vm836, %v827, 0.0
        %v2344 = vadd.f32 %v2342, %v2343
        %2345 = vadd.xlane.f32.xlu0 %v2344
        %v2346 = vpop.xlane.xlu0 %2345
        %v2347 = vrot.slane %v2346, 4
        %v2348 = vadd.f32 %v2346, %v2347
        %v2349 = vrot.slane %v2348, 2
        %v2350 = vadd.f32 %v2348, %v2349
        %v2351 = vrot.slane %v2350, 1
        %v2352 = vadd.f32 %v2350, %v2351
        %s2353 = vtos %v2352
        %v2354 = vsel %vm836, %v654, 0.0
        %v2355 = vsel %vm836, %v655, 0.0
        %v2356 = vadd.f32 %v2354, %v2355
        %2357 = vadd.xlane.f32.xlu0 %v2356
        %v2358 = vpop.xlane.xlu0 %2357
        %v2359 = vrot.slane %v2358, 4
        %v2360 = vadd.f32 %v2358, %v2359
        %v2361 = vrot.slane %v2360, 2
        %v2362 = vadd.f32 %v2360, %v2361
        %v2363 = vrot.slane %v2362, 1
        %v2364 = vadd.f32 %v2362, %v2363
        %s2365 = vtos %v2364
        %v2366 = vrcp.pop 16.0
        %v2367 = vmul.f32 16.0, %v2366
        %v2368 = vsub.f32 1.0, %v2367
        %v2369 = vmul.f32 %v2366, %v2368
        %v2370 = vadd.f32 %v2366, %v2369
        %vm2371 = vweird.f32 %v2366
        %v2372 = vsel %vm2371, %v2366, %v2370
        %s2373 = vtos %v2372
        %s2374 = smul.f32 %s2365, %s2373
        %vm2375 = vcmp.eq.s32.totalorder %v835, 2
        %vm2376 = vmand %vm2375, %vm871
        %v2377 = vstv %s2353
        %v2378 = vsel %vm2376, %v2377, 0.0
        %v2379 = vadd.f32 %v2338, %v2378
        %v2380 = vstv %s2374
        %v2381 = vsel %vm2376, %v2380, 0.0
        %v2382 = vadd.f32 %v2341, %v2381
        %v2383 = vsub.f32 %v578, %v363
        %v2384 = vmul.f32 %v2383, %v886
        %2385 = vxpose.xlu0.b32.start [1/16] %v2384, 128
        %2386 = vxpose.xlu0.b32.cont [2/16] 0.0, 128
        %2387 = vxpose.xlu0.b32.cont [3/16] 0.0, 128
        %2388 = vxpose.xlu0.b32.cont [4/16] 0.0, 128
        %2389 = vxpose.xlu0.b32.cont [5/16] 0.0, 128
        %2390 = vxpose.xlu0.b32.cont [6/16] 0.0, 128
        %2391 = vxpose.xlu0.b32.cont [7/16] 0.0, 128
        %2392 = vxpose.xlu0.b32.cont [8/16] 0.0, 128
        %2393 = vxpose.xlu0.b32.cont [9/16] 0.0, 128
        %2394 = vxpose.xlu0.b32.cont [10/16] 0.0, 128
        %2395 = vxpose.xlu0.b32.cont [11/16] 0.0, 128
        %2396 = vxpose.xlu0.b32.cont [12/16] 0.0, 128
        %2397 = vxpose.xlu0.b32.cont [13/16] 0.0, 128
        %2398 = vxpose.xlu0.b32.cont [14/16] 0.0, 128
        %2399 = vxpose.xlu0.b32.cont [15/16] 0.0, 128
        %2400 = vxpose.xlu0.b32.end [16/16] 0.0, 128
        %v2401 = vpop.trf.xlu0
        %v2402 = vpop.trf.xlu0
        %v2403 = vpop.trf.xlu0
        %v2404 = vpop.trf.xlu0
        %v2405 = vpop.trf.xlu0
        %v2406 = vpop.trf.xlu0
        %v2407 = vpop.trf.xlu0
        %v2408 = vpop.trf.xlu0
        %v2409 = vpop.trf.xlu0
        %v2410 = vpop.trf.xlu0
        %v2411 = vpop.trf.xlu0
        %v2412 = vpop.trf.xlu0
        %v2413 = vpop.trf.xlu0
        %v2414 = vpop.trf.xlu0
        %v2415 = vpop.trf.xlu0
        %v2416 = vpop.trf.xlu0
        %v2418 = vsel %vm425, %v2401, 0
        %2420 = vmatpush.msra.mxu0 0.0
        %2421 = vmatpush.msra.mxu0 0.0
        %2422 = vmatpush.msra.mxu0 0.0
        %2423 = vmatpush.msra.mxu0 0.0
        %2424 = vmatpush.msra.mxu0 0.0
        %2425 = vmatpush.msra.mxu0 0.0
        %2426 = vmatpush.msra.mxu0 0.0
        %2427 = vmatpush.msra.mxu0 0.0
        %2428 = vmatpush.msra.mxu0 0.0
        %2429 = vmatpush.msra.mxu0 0.0
        %2430 = vmatpush.msra.mxu0 0.0
        %2431 = vmatpush.msra.mxu0 0.0
        %2432 = vmatpush.msra.mxu0 0.0
        %2433 = vmatpush.msra.mxu0 0.0
        %2434 = vmatpush.msra.mxu0 0.0
        %2435 = vmatpush.msra.mxu0 %v275
        %2436 = vmatmul.f32.gmra.mxu0 %v2418
        %v2437 = vpop.f32.mrf.mxu0
        %v2438 = vadd.f32 0.0, %v2437
        %2439 = vdwg.mxu0
        %v2440 = vsel %vm425, %v2384, 0.0
        %v2441 = vrot.slane %v2440, 4
        %v2442 = vadd.f32 %v2440, %v2441
        %v2443 = vrot.slane %v2442, 2
        %v2444 = vadd.f32 %v2442, %v2443
        %v2445 = vrot.slane %v2444, 1
        %v2446 = vadd.f32 %v2444, %v2445
        %v2447 = vmul.f32 %v2438, 0.4
        %v2448 = vsub.f32 %v293, %v2447
        %v2449 = vmul.f32 %v2446, 0.4
        %v2450 = vsub.f32 %v294, %v2449
        %v2452 = vperm.slane %v2450, 0
        %2454 = vmatpush.xpose.msra.mxu0 0.0
        %2455 = vmatpush.xpose.msra.mxu0 0.0
        %2456 = vmatpush.xpose.msra.mxu0 0.0
        %2457 = vmatpush.xpose.msra.mxu0 0.0
        %2458 = vmatpush.xpose.msra.mxu0 0.0
        %2459 = vmatpush.xpose.msra.mxu0 0.0
        %2460 = vmatpush.xpose.msra.mxu0 0.0
        %2461 = vmatpush.xpose.msra.mxu0 0.0
        %2462 = vmatpush.xpose.msra.mxu0 0.0
        %2463 = vmatpush.xpose.msra.mxu0 0.0
        %2464 = vmatpush.xpose.msra.mxu0 0.0
        %2465 = vmatpush.xpose.msra.mxu0 0.0
        %2466 = vmatpush.xpose.msra.mxu0 0.0
        %2467 = vmatpush.xpose.msra.mxu0 0.0
        %2468 = vmatpush.xpose.msra.mxu0 0.0
        %2469 = vmatpush.xpose.msra.mxu0 %v2448
        %2470 = vmatmul.f32.gmra.mxu0 %v276
        %v2471 = vpop.f32.mrf.mxu0
        %v2472 = vadd.f32 %v2452, %v2471
        %2473 = vmatmul.f32.gmra.mxu0 %v277
        %v2474 = vpop.f32.mrf.mxu0
        %v2475 = vadd.f32 %v2452, %v2474
        %2476 = vdwg.mxu0
        %v2477 = vsel %vm425, %v2472, -inf
        %2478 = vmax.xlane.f32.xlu0 %v2477
        %v2479 = vpop.xlane.xlu0 %2478
        %v2480 = vsel %vm425, %v2475, -inf
        %2481 = vmax.xlane.f32.xlu0 %v2480
        %v2482 = vpop.xlane.xlu0 %2481
        %v2483 = vsub.f32 %v2472, %v2479
        %v2484 = vsub.f32 %v2475, %v2482
        %v2485 = vmul.f32 %v2483, 1.442695
        %v2486 = vpow.pop %v2485
        %v2487 = vmul.f32 %v2484, 1.442695
        %v2488 = vpow.pop %v2487
        %v2489 = vsel %vm425, %v2486, 0.0
        %2490 = vadd.xlane.f32.xlu0 %v2489
        %v2491 = vpop.xlane.xlu0 %2490
        %v2492 = vsel %vm425, %v2488, 0.0
        %2493 = vadd.xlane.f32.xlu0 %v2492
        %v2494 = vpop.xlane.xlu0 %2493
        %v2495 = vlog2.pop %v2491
        %v2496 = vmul.f32 %v2495, 0.6931472
        %v2497 = vlog2.pop %v2494
        %v2498 = vmul.f32 %v2497, 0.6931472
        %v2499 = vadd.f32 %v2479, %v2496
        %v2500 = vadd.f32 %v2482, %v2498
        %v2501 = vmul.f32 %v2472, %v364
        %v2502 = vmul.f32 %v2475, %v365
        %v2503 = vsel %vm425, %v2501, 0.0
        %2504 = vadd.xlane.f32.xlu0 %v2503
        %v2505 = vpop.xlane.xlu0 %2504
        %v2506 = vsel %vm425, %v2502, 0.0
        %2507 = vadd.xlane.f32.xlu0 %v2506
        %v2508 = vpop.xlane.xlu0 %2507
        %v2509 = vsub.f32 %v2499, %v2505
        %v2510 = vsub.f32 %v2500, %v2508
        %v2511 = vsel %vm836, %v2509, 0.0
        %v2512 = vsel %vm836, %v2510, 0.0
        %v2513 = vadd.f32 %v2511, %v2512
        %2514 = vadd.xlane.f32.xlu0 %v2513
        %v2515 = vpop.xlane.xlu0 %2514
        %v2516 = vrot.slane %v2515, 4
        %v2517 = vadd.f32 %v2515, %v2516
        %v2518 = vrot.slane %v2517, 2
        %v2519 = vadd.f32 %v2517, %v2518
        %v2520 = vrot.slane %v2519, 1
        %v2521 = vadd.f32 %v2519, %v2520
        %s2522 = vtos %v2521
        %v2523 = vrcp.pop 16.0
        %v2524 = vmul.f32 16.0, %v2523
        %v2525 = vsub.f32 1.0, %v2524
        %v2526 = vmul.f32 %v2523, %v2525
        %v2527 = vadd.f32 %v2523, %v2526
        %vm2528 = vweird.f32 %v2523
        %v2529 = vsel %vm2528, %v2523, %v2527
        %s2530 = vtos %v2529
        %s2531 = smul.f32 %s2522, %s2530
        %vm2532 = vcmp.ge.f32.partialorder %v2472, %v2479
        %vm2533 = vcmp.ge.f32.partialorder %v2475, %v2482
        %v2534 = vsel %vm2532, %v296, 8
        %v2535 = vsel %vm2533, %v296, 8
        %v2536 = vsel %vm425, %v2534, 2147483647
        %v2537 = vand.u32 %v2536, 65535
        %v2538 = vshra.s32 %v2536, 16
        %v2539 = vcvt.s32.f32 %v2537
        %v2540 = vcvt.s32.f32 %v2538
        %2541 = vmin.xlane.f32.xlu0 %v2540
        %v2542 = vpop.xlane.xlu0 %2541
        %vm2543 = vcmp.eq.f32.partialorder %v2540, %v2542
        %v2544 = vsel %vm2543, %v2539, inf
        %2545 = vmin.xlane.f32.xlu0 %v2544
        %v2546 = vpop.xlane.xlu0 %2545
        %v2547 = vcvt.f32.s32 %v2546
        %v2548 = vcvt.f32.s32 %v2542
        %v2549 = vshll.u32 %v2548, 16
        %v2550 = vadd.s32 %v2549, %v2547
        %v2551 = vsel %vm425, %v2535, 2147483647
        %v2552 = vand.u32 %v2551, 65535
        %v2553 = vshra.s32 %v2551, 16
        %v2554 = vcvt.s32.f32 %v2552
        %v2555 = vcvt.s32.f32 %v2553
        %2556 = vmin.xlane.f32.xlu0 %v2555
        %v2557 = vpop.xlane.xlu0 %2556
        %vm2558 = vcmp.eq.f32.partialorder %v2555, %v2557
        %v2559 = vsel %vm2558, %v2554, inf
        %2560 = vmin.xlane.f32.xlu0 %v2559
        %v2561 = vpop.xlane.xlu0 %2560
        %v2562 = vcvt.f32.s32 %v2561
        %v2563 = vcvt.f32.s32 %v2557
        %v2564 = vshll.u32 %v2563, 16
        %v2565 = vadd.s32 %v2564, %v2562
        %vm2566 = vcmp.eq.s32.totalorder %v296, %v2550
        %vm2567 = vcmp.eq.s32.totalorder %v296, %v2565
        %v2568 = vsel %vm2566, %v364, 0.0
        %v2569 = vsel %vm2567, %v365, 0.0
        %v2570 = vsel %vm425, %v2568, 0.0
        %v2571 = vsel %vm425, %v2569, 0.0
        %v2572 = vadd.f32 %v2570, %v2571
        %2573 = vadd.xlane.f32.xlu0 %v2572
        %v2574 = vpop.xlane.xlu0 %2573
        %v2575 = vrot.slane %v2574, 4
        %v2576 = vadd.f32 %v2574, %v2575
        %v2577 = vrot.slane %v2576, 2
        %v2578 = vadd.f32 %v2576, %v2577
        %v2579 = vrot.slane %v2578, 1
        %v2580 = vadd.f32 %v2578, %v2579
        %s2581 = vtos %v2580
        %vm2582 = vmand %vm2375, %vm1085
        %v2583 = vstv %s2581
        %v2584 = vsel %vm2582, %v2583, 0.0
        %v2585 = vadd.f32 %v2379, %v2584
        %v2586 = vstv %s2531
        %v2587 = vsel %vm2582, %v2586, 0.0
        %v2588 = vadd.f32 %v2382, %v2587
        %2589 = vmatpush.xpose.msra.mxu0 0.0
        %2590 = vmatpush.xpose.msra.mxu0 0.0
        %2591 = vmatpush.xpose.msra.mxu0 0.0
        %2592 = vmatpush.xpose.msra.mxu0 0.0
        %2593 = vmatpush.xpose.msra.mxu0 0.0
        %2594 = vmatpush.xpose.msra.mxu0 0.0
        %2595 = vmatpush.xpose.msra.mxu0 0.0
        %2596 = vmatpush.xpose.msra.mxu0 0.0
        %2597 = vmatpush.xpose.msra.mxu0 0.0
        %2598 = vmatpush.xpose.msra.mxu0 0.0
        %2599 = vmatpush.xpose.msra.mxu0 0.0
        %2600 = vmatpush.xpose.msra.mxu0 0.0
        %2601 = vmatpush.xpose.msra.mxu0 0.0
        %2602 = vmatpush.xpose.msra.mxu0 0.0
        %2603 = vmatpush.xpose.msra.mxu0 0.0
        %2604 = vmatpush.xpose.msra.mxu0 %v2448
        %2605 = vmatmul.f32.gmra.mxu0 %v275
        %v2606 = vpop.f32.mrf.mxu0
        %v2607 = vadd.f32 %v2452, %v2606
        %2608 = vdwg.mxu0
        %v2609 = vsel %vm425, %v2607, -inf
        %2610 = vmax.xlane.f32.xlu0 %v2609
        %v2611 = vpop.xlane.xlu0 %2610
        %v2612 = vsub.f32 %v2607, %v2611
        %v2613 = vmul.f32 %v2612, 1.442695
        %v2614 = vpow.pop %v2613
        %v2615 = vsel %vm425, %v2614, 0.0
        %2616 = vadd.xlane.f32.xlu0 %v2615
        %v2617 = vpop.xlane.xlu0 %2616
        %v2618 = vrcp.pop %v2617
        %v2619 = vmul.f32 %v2617, %v2618
        %v2620 = vsub.f32 1.0, %v2619
        %v2621 = vmul.f32 %v2618, %v2620
        %v2622 = vadd.f32 %v2618, %v2621
        %vm2623 = vweird.f32 %v2617
        %vm2624 = vweird.f32 %v2618
        %vm2625 = vmor %vm2623, %vm2624
        %v2626 = vsel %vm2625, %v2618, %v2622
        %v2627 = vand.u32 2147483647, %v2617
        %vm2628 = vcmp.eq.f32.partialorder %v2627, 8.507059e+37
        %v2629 = vand.u32 %v2617, 2147483648
        %v2630 = vor.u32 1.1754944e-38, %v2629
        %v2631 = vsel %vm2628, %v2630, %v2626
        %v2632 = vmul.f32 %v2614, %v2631
        %v2633 = vsub.f32 %v2632, %v363
        %v2634 = vmul.f32 %v2633, %v886
        %2635 = vxpose.xlu0.b32.start [1/16] %v2634, 128
        %2636 = vxpose.xlu0.b32.cont [2/16] 0.0, 128
        %2637 = vxpose.xlu0.b32.cont [3/16] 0.0, 128
        %2638 = vxpose.xlu0.b32.cont [4/16] 0.0, 128
        %2639 = vxpose.xlu0.b32.cont [5/16] 0.0, 128
        %2640 = vxpose.xlu0.b32.cont [6/16] 0.0, 128
        %2641 = vxpose.xlu0.b32.cont [7/16] 0.0, 128
        %2642 = vxpose.xlu0.b32.cont [8/16] 0.0, 128
        %2643 = vxpose.xlu0.b32.cont [9/16] 0.0, 128
        %2644 = vxpose.xlu0.b32.cont [10/16] 0.0, 128
        %2645 = vxpose.xlu0.b32.cont [11/16] 0.0, 128
        %2646 = vxpose.xlu0.b32.cont [12/16] 0.0, 128
        %2647 = vxpose.xlu0.b32.cont [13/16] 0.0, 128
        %2648 = vxpose.xlu0.b32.cont [14/16] 0.0, 128
        %2649 = vxpose.xlu0.b32.cont [15/16] 0.0, 128
        %2650 = vxpose.xlu0.b32.end [16/16] 0.0, 128
        %v2651 = vpop.trf.xlu0
        %v2652 = vpop.trf.xlu0
        %v2653 = vpop.trf.xlu0
        %v2654 = vpop.trf.xlu0
        %v2655 = vpop.trf.xlu0
        %v2656 = vpop.trf.xlu0
        %v2657 = vpop.trf.xlu0
        %v2658 = vpop.trf.xlu0
        %v2659 = vpop.trf.xlu0
        %v2660 = vpop.trf.xlu0
        %v2661 = vpop.trf.xlu0
        %v2662 = vpop.trf.xlu0
        %v2663 = vpop.trf.xlu0
        %v2664 = vpop.trf.xlu0
        %v2665 = vpop.trf.xlu0
        %v2666 = vpop.trf.xlu0
        %v2668 = vsel %vm425, %v2651, 0
        %2670 = vmatpush.msra.mxu0 0.0
        %2671 = vmatpush.msra.mxu0 0.0
        %2672 = vmatpush.msra.mxu0 0.0
        %2673 = vmatpush.msra.mxu0 0.0
        %2674 = vmatpush.msra.mxu0 0.0
        %2675 = vmatpush.msra.mxu0 0.0
        %2676 = vmatpush.msra.mxu0 0.0
        %2677 = vmatpush.msra.mxu0 0.0
        %2678 = vmatpush.msra.mxu0 0.0
        %2679 = vmatpush.msra.mxu0 0.0
        %2680 = vmatpush.msra.mxu0 0.0
        %2681 = vmatpush.msra.mxu0 0.0
        %2682 = vmatpush.msra.mxu0 0.0
        %2683 = vmatpush.msra.mxu0 0.0
        %2684 = vmatpush.msra.mxu0 0.0
        %2685 = vmatpush.msra.mxu0 %v275
        %2686 = vmatmul.f32.gmra.mxu0 %v2668
        %v2687 = vpop.f32.mrf.mxu0
        %v2688 = vadd.f32 0.0, %v2687
        %2689 = vdwg.mxu0
        %v2690 = vsel %vm425, %v2634, 0.0
        %v2691 = vrot.slane %v2690, 4
        %v2692 = vadd.f32 %v2690, %v2691
        %v2693 = vrot.slane %v2692, 2
        %v2694 = vadd.f32 %v2692, %v2693
        %v2695 = vrot.slane %v2694, 1
        %v2696 = vadd.f32 %v2694, %v2695
        %v2697 = vmul.f32 %v2688, 0.4
        %v2698 = vsub.f32 %v2448, %v2697
        %v2699 = vmul.f32 %v2696, 0.4
        %v2700 = vsub.f32 %v2450, %v2699
        %v2702 = vperm.slane %v2700, 0
        %2704 = vmatpush.xpose.msra.mxu0 0.0
        %2705 = vmatpush.xpose.msra.mxu0 0.0
        %2706 = vmatpush.xpose.msra.mxu0 0.0
        %2707 = vmatpush.xpose.msra.mxu0 0.0
        %2708 = vmatpush.xpose.msra.mxu0 0.0
        %2709 = vmatpush.xpose.msra.mxu0 0.0
        %2710 = vmatpush.xpose.msra.mxu0 0.0
        %2711 = vmatpush.xpose.msra.mxu0 0.0
        %2712 = vmatpush.xpose.msra.mxu0 0.0
        %2713 = vmatpush.xpose.msra.mxu0 0.0
        %2714 = vmatpush.xpose.msra.mxu0 0.0
        %2715 = vmatpush.xpose.msra.mxu0 0.0
        %2716 = vmatpush.xpose.msra.mxu0 0.0
        %2717 = vmatpush.xpose.msra.mxu0 0.0
        %2718 = vmatpush.xpose.msra.mxu0 0.0
        %2719 = vmatpush.xpose.msra.mxu0 %v2698
        %2720 = vmatmul.f32.gmra.mxu0 %v276
        %v2721 = vpop.f32.mrf.mxu0
        %v2722 = vadd.f32 %v2702, %v2721
        %2723 = vmatmul.f32.gmra.mxu0 %v277
        %v2724 = vpop.f32.mrf.mxu0
        %v2725 = vadd.f32 %v2702, %v2724
        %2726 = vdwg.mxu0
        %v2727 = vsel %vm425, %v2722, -inf
        %2728 = vmax.xlane.f32.xlu0 %v2727
        %v2729 = vpop.xlane.xlu0 %2728
        %v2730 = vsel %vm425, %v2725, -inf
        %2731 = vmax.xlane.f32.xlu0 %v2730
        %v2732 = vpop.xlane.xlu0 %2731
        %v2733 = vsub.f32 %v2722, %v2729
        %v2734 = vsub.f32 %v2725, %v2732
        %v2735 = vmul.f32 %v2733, 1.442695
        %v2736 = vpow.pop %v2735
        %v2737 = vmul.f32 %v2734, 1.442695
        %v2738 = vpow.pop %v2737
        %v2739 = vsel %vm425, %v2736, 0.0
        %2740 = vadd.xlane.f32.xlu0 %v2739
        %v2741 = vpop.xlane.xlu0 %2740
        %v2742 = vsel %vm425, %v2738, 0.0
        %2743 = vadd.xlane.f32.xlu0 %v2742
        %v2744 = vpop.xlane.xlu0 %2743
        %v2745 = vlog2.pop %v2741
        %v2746 = vmul.f32 %v2745, 0.6931472
        %v2747 = vlog2.pop %v2744
        %v2748 = vmul.f32 %v2747, 0.6931472
        %v2749 = vadd.f32 %v2729, %v2746
        %v2750 = vadd.f32 %v2732, %v2748
        %v2751 = vmul.f32 %v2722, %v364
        %v2752 = vmul.f32 %v2725, %v365
        %v2753 = vsel %vm425, %v2751, 0.0
        %2754 = vadd.xlane.f32.xlu0 %v2753
        %v2755 = vpop.xlane.xlu0 %2754
        %v2756 = vsel %vm425, %v2752, 0.0
        %2757 = vadd.xlane.f32.xlu0 %v2756
        %v2758 = vpop.xlane.xlu0 %2757
        %v2759 = vsub.f32 %v2749, %v2755
        %v2760 = vsub.f32 %v2750, %v2758
        %v2761 = vsel %vm836, %v2759, 0.0
        %v2762 = vsel %vm836, %v2760, 0.0
        %v2763 = vadd.f32 %v2761, %v2762
        %2764 = vadd.xlane.f32.xlu0 %v2763
        %v2765 = vpop.xlane.xlu0 %2764
        %v2766 = vrot.slane %v2765, 4
        %v2767 = vadd.f32 %v2765, %v2766
        %v2768 = vrot.slane %v2767, 2
        %v2769 = vadd.f32 %v2767, %v2768
        %v2770 = vrot.slane %v2769, 1
        %v2771 = vadd.f32 %v2769, %v2770
        %s2772 = vtos %v2771
        %v2773 = vrcp.pop 16.0
        %v2774 = vmul.f32 16.0, %v2773
        %v2775 = vsub.f32 1.0, %v2774
        %v2776 = vmul.f32 %v2773, %v2775
        %v2777 = vadd.f32 %v2773, %v2776
        %vm2778 = vweird.f32 %v2773
        %v2779 = vsel %vm2778, %v2773, %v2777
        %s2780 = vtos %v2779
        %s2781 = smul.f32 %s2772, %s2780
        %vm2782 = vcmp.ge.f32.partialorder %v2722, %v2729
        %vm2783 = vcmp.ge.f32.partialorder %v2725, %v2732
        %v2784 = vsel %vm2782, %v296, 8
        %v2785 = vsel %vm2783, %v296, 8
        %v2786 = vsel %vm425, %v2784, 2147483647
        %v2787 = vand.u32 %v2786, 65535
        %v2788 = vshra.s32 %v2786, 16
        %v2789 = vcvt.s32.f32 %v2787
        %v2790 = vcvt.s32.f32 %v2788
        %2791 = vmin.xlane.f32.xlu0 %v2790
        %v2792 = vpop.xlane.xlu0 %2791
        %vm2793 = vcmp.eq.f32.partialorder %v2790, %v2792
        %v2794 = vsel %vm2793, %v2789, inf
        %2795 = vmin.xlane.f32.xlu0 %v2794
        %v2796 = vpop.xlane.xlu0 %2795
        %v2797 = vcvt.f32.s32 %v2796
        %v2798 = vcvt.f32.s32 %v2792
        %v2799 = vshll.u32 %v2798, 16
        %v2800 = vadd.s32 %v2799, %v2797
        %v2801 = vsel %vm425, %v2785, 2147483647
        %v2802 = vand.u32 %v2801, 65535
        %v2803 = vshra.s32 %v2801, 16
        %v2804 = vcvt.s32.f32 %v2802
        %v2805 = vcvt.s32.f32 %v2803
        %2806 = vmin.xlane.f32.xlu0 %v2805
        %v2807 = vpop.xlane.xlu0 %2806
        %vm2808 = vcmp.eq.f32.partialorder %v2805, %v2807
        %v2809 = vsel %vm2808, %v2804, inf
        %2810 = vmin.xlane.f32.xlu0 %v2809
        %v2811 = vpop.xlane.xlu0 %2810
        %v2812 = vcvt.f32.s32 %v2811
        %v2813 = vcvt.f32.s32 %v2807
        %v2814 = vshll.u32 %v2813, 16
        %v2815 = vadd.s32 %v2814, %v2812
        %vm2816 = vcmp.eq.s32.totalorder %v296, %v2800
        %vm2817 = vcmp.eq.s32.totalorder %v296, %v2815
        %v2818 = vsel %vm2816, %v364, 0.0
        %v2819 = vsel %vm2817, %v365, 0.0
        %v2820 = vsel %vm425, %v2818, 0.0
        %v2821 = vsel %vm425, %v2819, 0.0
        %v2822 = vadd.f32 %v2820, %v2821
        %2823 = vadd.xlane.f32.xlu0 %v2822
        %v2824 = vpop.xlane.xlu0 %2823
        %v2825 = vrot.slane %v2824, 4
        %v2826 = vadd.f32 %v2824, %v2825
        %v2827 = vrot.slane %v2826, 2
        %v2828 = vadd.f32 %v2826, %v2827
        %v2829 = vrot.slane %v2828, 1
        %v2830 = vadd.f32 %v2828, %v2829
        %s2831 = vtos %v2830
        %vm2832 = vmand %vm2375, %vm1336
        %v2833 = vstv %s2831
        %v2834 = vsel %vm2832, %v2833, 0.0
        %v2835 = vadd.f32 %v2585, %v2834
        %v2836 = vstv %s2781
        %v2837 = vsel %vm2832, %v2836, 0.0
        %v2838 = vadd.f32 %v2588, %v2837
        %2839 = vmatpush.xpose.msra.mxu0 0.0
        %2840 = vmatpush.xpose.msra.mxu0 0.0
        %2841 = vmatpush.xpose.msra.mxu0 0.0
        %2842 = vmatpush.xpose.msra.mxu0 0.0
        %2843 = vmatpush.xpose.msra.mxu0 0.0
        %2844 = vmatpush.xpose.msra.mxu0 0.0
        %2845 = vmatpush.xpose.msra.mxu0 0.0
        %2846 = vmatpush.xpose.msra.mxu0 0.0
        %2847 = vmatpush.xpose.msra.mxu0 0.0
        %2848 = vmatpush.xpose.msra.mxu0 0.0
        %2849 = vmatpush.xpose.msra.mxu0 0.0
        %2850 = vmatpush.xpose.msra.mxu0 0.0
        %2851 = vmatpush.xpose.msra.mxu0 0.0
        %2852 = vmatpush.xpose.msra.mxu0 0.0
        %2853 = vmatpush.xpose.msra.mxu0 0.0
        %2854 = vmatpush.xpose.msra.mxu0 %v2698
        %2855 = vmatmul.f32.gmra.mxu0 %v275
        %v2856 = vpop.f32.mrf.mxu0
        %v2857 = vadd.f32 %v2702, %v2856
        %2858 = vdwg.mxu0
        %v2859 = vsel %vm425, %v2857, -inf
        %2860 = vmax.xlane.f32.xlu0 %v2859
        %v2861 = vpop.xlane.xlu0 %2860
        %v2862 = vsub.f32 %v2857, %v2861
        %v2863 = vmul.f32 %v2862, 1.442695
        %v2864 = vpow.pop %v2863
        %v2865 = vsel %vm425, %v2864, 0.0
        %2866 = vadd.xlane.f32.xlu0 %v2865
        %v2867 = vpop.xlane.xlu0 %2866
        %v2868 = vrcp.pop %v2867
        %v2869 = vmul.f32 %v2867, %v2868
        %v2870 = vsub.f32 1.0, %v2869
        %v2871 = vmul.f32 %v2868, %v2870
        %v2872 = vadd.f32 %v2868, %v2871
        %vm2873 = vweird.f32 %v2867
        %vm2874 = vweird.f32 %v2868
        %vm2875 = vmor %vm2873, %vm2874
        %v2876 = vsel %vm2875, %v2868, %v2872
        %v2877 = vand.u32 2147483647, %v2867
        %vm2878 = vcmp.eq.f32.partialorder %v2877, 8.507059e+37
        %v2879 = vand.u32 %v2867, 2147483648
        %v2880 = vor.u32 1.1754944e-38, %v2879
        %v2881 = vsel %vm2878, %v2880, %v2876
        %v2882 = vmul.f32 %v2864, %v2881
        %v2883 = vsub.f32 %v2882, %v363
        %v2884 = vmul.f32 %v2883, %v886
        %2885 = vxpose.xlu0.b32.start [1/16] %v2884, 128
        %2886 = vxpose.xlu0.b32.cont [2/16] 0.0, 128
        %2887 = vxpose.xlu0.b32.cont [3/16] 0.0, 128
        %2888 = vxpose.xlu0.b32.cont [4/16] 0.0, 128
        %2889 = vxpose.xlu0.b32.cont [5/16] 0.0, 128
        %2890 = vxpose.xlu0.b32.cont [6/16] 0.0, 128
        %2891 = vxpose.xlu0.b32.cont [7/16] 0.0, 128
        %2892 = vxpose.xlu0.b32.cont [8/16] 0.0, 128
        %2893 = vxpose.xlu0.b32.cont [9/16] 0.0, 128
        %2894 = vxpose.xlu0.b32.cont [10/16] 0.0, 128
        %2895 = vxpose.xlu0.b32.cont [11/16] 0.0, 128
        %2896 = vxpose.xlu0.b32.cont [12/16] 0.0, 128
        %2897 = vxpose.xlu0.b32.cont [13/16] 0.0, 128
        %2898 = vxpose.xlu0.b32.cont [14/16] 0.0, 128
        %2899 = vxpose.xlu0.b32.cont [15/16] 0.0, 128
        %2900 = vxpose.xlu0.b32.end [16/16] 0.0, 128
        %v2901 = vpop.trf.xlu0
        %v2902 = vpop.trf.xlu0
        %v2903 = vpop.trf.xlu0
        %v2904 = vpop.trf.xlu0
        %v2905 = vpop.trf.xlu0
        %v2906 = vpop.trf.xlu0
        %v2907 = vpop.trf.xlu0
        %v2908 = vpop.trf.xlu0
        %v2909 = vpop.trf.xlu0
        %v2910 = vpop.trf.xlu0
        %v2911 = vpop.trf.xlu0
        %v2912 = vpop.trf.xlu0
        %v2913 = vpop.trf.xlu0
        %v2914 = vpop.trf.xlu0
        %v2915 = vpop.trf.xlu0
        %v2916 = vpop.trf.xlu0
        %v2918 = vsel %vm425, %v2901, 0
        %2920 = vmatpush.msra.mxu0 0.0
        %2921 = vmatpush.msra.mxu0 0.0
        %2922 = vmatpush.msra.mxu0 0.0
        %2923 = vmatpush.msra.mxu0 0.0
        %2924 = vmatpush.msra.mxu0 0.0
        %2925 = vmatpush.msra.mxu0 0.0
        %2926 = vmatpush.msra.mxu0 0.0
        %2927 = vmatpush.msra.mxu0 0.0
        %2928 = vmatpush.msra.mxu0 0.0
        %2929 = vmatpush.msra.mxu0 0.0
        %2930 = vmatpush.msra.mxu0 0.0
        %2931 = vmatpush.msra.mxu0 0.0
        %2932 = vmatpush.msra.mxu0 0.0
        %2933 = vmatpush.msra.mxu0 0.0
        %2934 = vmatpush.msra.mxu0 0.0
        %2935 = vmatpush.msra.mxu0 %v275
        %2936 = vmatmul.f32.gmra.mxu0 %v2918
        %v2937 = vpop.f32.mrf.mxu0
        %v2938 = vadd.f32 0.0, %v2937
        %2939 = vdwg.mxu0
        %v2940 = vsel %vm425, %v2884, 0.0
        %v2941 = vrot.slane %v2940, 4
        %v2942 = vadd.f32 %v2940, %v2941
        %v2943 = vrot.slane %v2942, 2
        %v2944 = vadd.f32 %v2942, %v2943
        %v2945 = vrot.slane %v2944, 1
        %v2946 = vadd.f32 %v2944, %v2945
        %v2947 = vmul.f32 %v2938, 0.4
        %v2948 = vsub.f32 %v2698, %v2947
        %v2949 = vmul.f32 %v2946, 0.4
        %v2950 = vsub.f32 %v2700, %v2949
        %v2952 = vperm.slane %v2950, 0
        %2954 = vmatpush.xpose.msra.mxu0 0.0
        %2955 = vmatpush.xpose.msra.mxu0 0.0
        %2956 = vmatpush.xpose.msra.mxu0 0.0
        %2957 = vmatpush.xpose.msra.mxu0 0.0
        %2958 = vmatpush.xpose.msra.mxu0 0.0
        %2959 = vmatpush.xpose.msra.mxu0 0.0
        %2960 = vmatpush.xpose.msra.mxu0 0.0
        %2961 = vmatpush.xpose.msra.mxu0 0.0
        %2962 = vmatpush.xpose.msra.mxu0 0.0
        %2963 = vmatpush.xpose.msra.mxu0 0.0
        %2964 = vmatpush.xpose.msra.mxu0 0.0
        %2965 = vmatpush.xpose.msra.mxu0 0.0
        %2966 = vmatpush.xpose.msra.mxu0 0.0
        %2967 = vmatpush.xpose.msra.mxu0 0.0
        %2968 = vmatpush.xpose.msra.mxu0 0.0
        %2969 = vmatpush.xpose.msra.mxu0 %v2948
        %2970 = vmatmul.f32.gmra.mxu0 %v276
        %v2971 = vpop.f32.mrf.mxu0
        %v2972 = vadd.f32 %v2952, %v2971
        %2973 = vmatmul.f32.gmra.mxu0 %v277
        %v2974 = vpop.f32.mrf.mxu0
        %v2975 = vadd.f32 %v2952, %v2974
        %2976 = vdwg.mxu0
        %v2977 = vsel %vm425, %v2972, -inf
        %2978 = vmax.xlane.f32.xlu0 %v2977
        %v2979 = vpop.xlane.xlu0 %2978
        %v2980 = vsel %vm425, %v2975, -inf
        %2981 = vmax.xlane.f32.xlu0 %v2980
        %v2982 = vpop.xlane.xlu0 %2981
        %v2983 = vsub.f32 %v2972, %v2979
        %v2984 = vsub.f32 %v2975, %v2982
        %v2985 = vmul.f32 %v2983, 1.442695
        %v2986 = vpow.pop %v2985
        %v2987 = vmul.f32 %v2984, 1.442695
        %v2988 = vpow.pop %v2987
        %v2989 = vsel %vm425, %v2986, 0.0
        %2990 = vadd.xlane.f32.xlu0 %v2989
        %v2991 = vpop.xlane.xlu0 %2990
        %v2992 = vsel %vm425, %v2988, 0.0
        %2993 = vadd.xlane.f32.xlu0 %v2992
        %v2994 = vpop.xlane.xlu0 %2993
        %v2995 = vlog2.pop %v2991
        %v2996 = vmul.f32 %v2995, 0.6931472
        %v2997 = vlog2.pop %v2994
        %v2998 = vmul.f32 %v2997, 0.6931472
        %v2999 = vadd.f32 %v2979, %v2996
        %v3000 = vadd.f32 %v2982, %v2998
        %v3001 = vmul.f32 %v2972, %v364
        %v3002 = vmul.f32 %v2975, %v365
        %v3003 = vsel %vm425, %v3001, 0.0
        %3004 = vadd.xlane.f32.xlu0 %v3003
        %v3005 = vpop.xlane.xlu0 %3004
        %v3006 = vsel %vm425, %v3002, 0.0
        %3007 = vadd.xlane.f32.xlu0 %v3006
        %v3008 = vpop.xlane.xlu0 %3007
        %v3009 = vsub.f32 %v2999, %v3005
        %v3010 = vsub.f32 %v3000, %v3008
        %v3011 = vsel %vm836, %v3009, 0.0
        %v3012 = vsel %vm836, %v3010, 0.0
        %v3013 = vadd.f32 %v3011, %v3012
        %3014 = vadd.xlane.f32.xlu0 %v3013
        %v3015 = vpop.xlane.xlu0 %3014
        %v3016 = vrot.slane %v3015, 4
        %v3017 = vadd.f32 %v3015, %v3016
        %v3018 = vrot.slane %v3017, 2
        %v3019 = vadd.f32 %v3017, %v3018
        %v3020 = vrot.slane %v3019, 1
        %v3021 = vadd.f32 %v3019, %v3020
        %s3022 = vtos %v3021
        %v3023 = vrcp.pop 16.0
        %v3024 = vmul.f32 16.0, %v3023
        %v3025 = vsub.f32 1.0, %v3024
        %v3026 = vmul.f32 %v3023, %v3025
        %v3027 = vadd.f32 %v3023, %v3026
        %vm3028 = vweird.f32 %v3023
        %v3029 = vsel %vm3028, %v3023, %v3027
        %s3030 = vtos %v3029
        %s3031 = smul.f32 %s3022, %s3030
        %vm3032 = vcmp.ge.f32.partialorder %v2972, %v2979
        %vm3033 = vcmp.ge.f32.partialorder %v2975, %v2982
        %v3034 = vsel %vm3032, %v296, 8
        %v3035 = vsel %vm3033, %v296, 8
        %v3036 = vsel %vm425, %v3034, 2147483647
        %v3037 = vand.u32 %v3036, 65535
        %v3038 = vshra.s32 %v3036, 16
        %v3039 = vcvt.s32.f32 %v3037
        %v3040 = vcvt.s32.f32 %v3038
        %3041 = vmin.xlane.f32.xlu0 %v3040
        %v3042 = vpop.xlane.xlu0 %3041
        %vm3043 = vcmp.eq.f32.partialorder %v3040, %v3042
        %v3044 = vsel %vm3043, %v3039, inf
        %3045 = vmin.xlane.f32.xlu0 %v3044
        %v3046 = vpop.xlane.xlu0 %3045
        %v3047 = vcvt.f32.s32 %v3046
        %v3048 = vcvt.f32.s32 %v3042
        %v3049 = vshll.u32 %v3048, 16
        %v3050 = vadd.s32 %v3049, %v3047
        %v3051 = vsel %vm425, %v3035, 2147483647
        %v3052 = vand.u32 %v3051, 65535
        %v3053 = vshra.s32 %v3051, 16
        %v3054 = vcvt.s32.f32 %v3052
        %v3055 = vcvt.s32.f32 %v3053
        %3056 = vmin.xlane.f32.xlu0 %v3055
        %v3057 = vpop.xlane.xlu0 %3056
        %vm3058 = vcmp.eq.f32.partialorder %v3055, %v3057
        %v3059 = vsel %vm3058, %v3054, inf
        %3060 = vmin.xlane.f32.xlu0 %v3059
        %v3061 = vpop.xlane.xlu0 %3060
        %v3062 = vcvt.f32.s32 %v3061
        %v3063 = vcvt.f32.s32 %v3057
        %v3064 = vshll.u32 %v3063, 16
        %v3065 = vadd.s32 %v3064, %v3062
        %vm3066 = vcmp.eq.s32.totalorder %v296, %v3050
        %vm3067 = vcmp.eq.s32.totalorder %v296, %v3065
        %v3068 = vsel %vm3066, %v364, 0.0
        %v3069 = vsel %vm3067, %v365, 0.0
        %v3070 = vsel %vm425, %v3068, 0.0
        %v3071 = vsel %vm425, %v3069, 0.0
        %v3072 = vadd.f32 %v3070, %v3071
        %3073 = vadd.xlane.f32.xlu0 %v3072
        %v3074 = vpop.xlane.xlu0 %3073
        %v3075 = vrot.slane %v3074, 4
        %v3076 = vadd.f32 %v3074, %v3075
        %v3077 = vrot.slane %v3076, 2
        %v3078 = vadd.f32 %v3076, %v3077
        %v3079 = vrot.slane %v3078, 1
        %v3080 = vadd.f32 %v3078, %v3079
        %s3081 = vtos %v3080
        %vm3082 = vmand %vm2375, %vm1587
        %v3083 = vstv %s3081
        %v3084 = vsel %vm3082, %v3083, 0.0
        %v3085 = vadd.f32 %v2835, %v3084
        %v3086 = vstv %s3031
        %v3087 = vsel %vm3082, %v3086, 0.0
        %v3088 = vadd.f32 %v2838, %v3087
        %v3089 = vsel %vm836, %v830, 0.0
        %v3090 = vsel %vm836, %v833, 0.0
        %v3091 = vadd.f32 %v3089, %v3090
        %3092 = vadd.xlane.f32.xlu0 %v3091
        %v3093 = vpop.xlane.xlu0 %3092
        %v3094 = vrot.slane %v3093, 4
        %v3095 = vadd.f32 %v3093, %v3094
        %v3096 = vrot.slane %v3095, 2
        %v3097 = vadd.f32 %v3095, %v3096
        %v3098 = vrot.slane %v3097, 1
        %v3099 = vadd.f32 %v3097, %v3098
        %s3100 = vtos %v3099
        %v3101 = vsel %vm836, %v656, 0.0
        %v3102 = vsel %vm836, %v657, 0.0
        %v3103 = vadd.f32 %v3101, %v3102
        %3104 = vadd.xlane.f32.xlu0 %v3103
        %v3105 = vpop.xlane.xlu0 %3104
        %v3106 = vrot.slane %v3105, 4
        %v3107 = vadd.f32 %v3105, %v3106
        %v3108 = vrot.slane %v3107, 2
        %v3109 = vadd.f32 %v3107, %v3108
        %v3110 = vrot.slane %v3109, 1
        %v3111 = vadd.f32 %v3109, %v3110
        %s3112 = vtos %v3111
        %v3113 = vrcp.pop 16.0
        %v3114 = vmul.f32 16.0, %v3113
        %v3115 = vsub.f32 1.0, %v3114
        %v3116 = vmul.f32 %v3113, %v3115
        %v3117 = vadd.f32 %v3113, %v3116
        %vm3118 = vweird.f32 %v3113
        %v3119 = vsel %vm3118, %v3113, %v3117
        %s3120 = vtos %v3119
        %s3121 = smul.f32 %s3112, %s3120
        %vm3122 = vcmp.eq.s32.totalorder %v835, 3
        %vm3123 = vmand %vm3122, %vm871
        %v3124 = vstv %s3100
        %v3125 = vsel %vm3123, %v3124, 0.0
        %v3126 = vadd.f32 %v3085, %v3125
        %v3127 = vstv %s3121
        %v3128 = vsel %vm3123, %v3127, 0.0
        %v3129 = vadd.f32 %v3088, %v3128
        %v3130 = vsub.f32 %v593, %v366
        %v3131 = vmul.f32 %v3130, %v886
        %3132 = vxpose.xlu0.b32.start [1/16] %v3131, 128
        %3133 = vxpose.xlu0.b32.cont [2/16] 0.0, 128
        %3134 = vxpose.xlu0.b32.cont [3/16] 0.0, 128
        %3135 = vxpose.xlu0.b32.cont [4/16] 0.0, 128
        %3136 = vxpose.xlu0.b32.cont [5/16] 0.0, 128
        %3137 = vxpose.xlu0.b32.cont [6/16] 0.0, 128
        %3138 = vxpose.xlu0.b32.cont [7/16] 0.0, 128
        %3139 = vxpose.xlu0.b32.cont [8/16] 0.0, 128
        %3140 = vxpose.xlu0.b32.cont [9/16] 0.0, 128
        %3141 = vxpose.xlu0.b32.cont [10/16] 0.0, 128
        %3142 = vxpose.xlu0.b32.cont [11/16] 0.0, 128
        %3143 = vxpose.xlu0.b32.cont [12/16] 0.0, 128
        %3144 = vxpose.xlu0.b32.cont [13/16] 0.0, 128
        %3145 = vxpose.xlu0.b32.cont [14/16] 0.0, 128
        %3146 = vxpose.xlu0.b32.cont [15/16] 0.0, 128
        %3147 = vxpose.xlu0.b32.end [16/16] 0.0, 128
        %v3148 = vpop.trf.xlu0
        %v3149 = vpop.trf.xlu0
        %v3150 = vpop.trf.xlu0
        %v3151 = vpop.trf.xlu0
        %v3152 = vpop.trf.xlu0
        %v3153 = vpop.trf.xlu0
        %v3154 = vpop.trf.xlu0
        %v3155 = vpop.trf.xlu0
        %v3156 = vpop.trf.xlu0
        %v3157 = vpop.trf.xlu0
        %v3158 = vpop.trf.xlu0
        %v3159 = vpop.trf.xlu0
        %v3160 = vpop.trf.xlu0
        %v3161 = vpop.trf.xlu0
        %v3162 = vpop.trf.xlu0
        %v3163 = vpop.trf.xlu0
        %v3165 = vsel %vm425, %v3148, 0
        %3167 = vmatpush.msra.mxu0 0.0
        %3168 = vmatpush.msra.mxu0 0.0
        %3169 = vmatpush.msra.mxu0 0.0
        %3170 = vmatpush.msra.mxu0 0.0
        %3171 = vmatpush.msra.mxu0 0.0
        %3172 = vmatpush.msra.mxu0 0.0
        %3173 = vmatpush.msra.mxu0 0.0
        %3174 = vmatpush.msra.mxu0 0.0
        %3175 = vmatpush.msra.mxu0 0.0
        %3176 = vmatpush.msra.mxu0 0.0
        %3177 = vmatpush.msra.mxu0 0.0
        %3178 = vmatpush.msra.mxu0 0.0
        %3179 = vmatpush.msra.mxu0 0.0
        %3180 = vmatpush.msra.mxu0 0.0
        %3181 = vmatpush.msra.mxu0 0.0
        %3182 = vmatpush.msra.mxu0 %v278
        %3183 = vmatmul.f32.gmra.mxu0 %v3165
        %v3184 = vpop.f32.mrf.mxu0
        %v3185 = vadd.f32 0.0, %v3184
        %3186 = vdwg.mxu0
        %v3187 = vsel %vm425, %v3131, 0.0
        %v3188 = vrot.slane %v3187, 4
        %v3189 = vadd.f32 %v3187, %v3188
        %v3190 = vrot.slane %v3189, 2
        %v3191 = vadd.f32 %v3189, %v3190
        %v3192 = vrot.slane %v3191, 1
        %v3193 = vadd.f32 %v3191, %v3192
        %v3194 = vmul.f32 %v3185, 0.4
        %v3195 = vsub.f32 %v293, %v3194
        %v3196 = vmul.f32 %v3193, 0.4
        %v3197 = vsub.f32 %v294, %v3196
        %v3199 = vperm.slane %v3197, 0
        %3201 = vmatpush.xpose.msra.mxu0 0.0
        %3202 = vmatpush.xpose.msra.mxu0 0.0
        %3203 = vmatpush.xpose.msra.mxu0 0.0
        %3204 = vmatpush.xpose.msra.mxu0 0.0
        %3205 = vmatpush.xpose.msra.mxu0 0.0
        %3206 = vmatpush.xpose.msra.mxu0 0.0
        %3207 = vmatpush.xpose.msra.mxu0 0.0
        %3208 = vmatpush.xpose.msra.mxu0 0.0
        %3209 = vmatpush.xpose.msra.mxu0 0.0
        %3210 = vmatpush.xpose.msra.mxu0 0.0
        %3211 = vmatpush.xpose.msra.mxu0 0.0
        %3212 = vmatpush.xpose.msra.mxu0 0.0
        %3213 = vmatpush.xpose.msra.mxu0 0.0
        %3214 = vmatpush.xpose.msra.mxu0 0.0
        %3215 = vmatpush.xpose.msra.mxu0 0.0
        %3216 = vmatpush.xpose.msra.mxu0 %v3195
        %3217 = vmatmul.f32.gmra.mxu0 %v279
        %v3218 = vpop.f32.mrf.mxu0
        %v3219 = vadd.f32 %v3199, %v3218
        %3220 = vmatmul.f32.gmra.mxu0 %v280
        %v3221 = vpop.f32.mrf.mxu0
        %v3222 = vadd.f32 %v3199, %v3221
        %3223 = vdwg.mxu0
        %v3224 = vsel %vm425, %v3219, -inf
        %3225 = vmax.xlane.f32.xlu0 %v3224
        %v3226 = vpop.xlane.xlu0 %3225
        %v3227 = vsel %vm425, %v3222, -inf
        %3228 = vmax.xlane.f32.xlu0 %v3227
        %v3229 = vpop.xlane.xlu0 %3228
        %v3230 = vsub.f32 %v3219, %v3226
        %v3231 = vsub.f32 %v3222, %v3229
        %v3232 = vmul.f32 %v3230, 1.442695
        %v3233 = vpow.pop %v3232
        %v3234 = vmul.f32 %v3231, 1.442695
        %v3235 = vpow.pop %v3234
        %v3236 = vsel %vm425, %v3233, 0.0
        %3237 = vadd.xlane.f32.xlu0 %v3236
        %v3238 = vpop.xlane.xlu0 %3237
        %v3239 = vsel %vm425, %v3235, 0.0
        %3240 = vadd.xlane.f32.xlu0 %v3239
        %v3241 = vpop.xlane.xlu0 %3240
        %v3242 = vlog2.pop %v3238
        %v3243 = vmul.f32 %v3242, 0.6931472
        %v3244 = vlog2.pop %v3241
        %v3245 = vmul.f32 %v3244, 0.6931472
        %v3246 = vadd.f32 %v3226, %v3243
        %v3247 = vadd.f32 %v3229, %v3245
        %v3248 = vmul.f32 %v3219, %v367
        %v3249 = vmul.f32 %v3222, %v368
        %v3250 = vsel %vm425, %v3248, 0.0
        %3251 = vadd.xlane.f32.xlu0 %v3250
        %v3252 = vpop.xlane.xlu0 %3251
        %v3253 = vsel %vm425, %v3249, 0.0
        %3254 = vadd.xlane.f32.xlu0 %v3253
        %v3255 = vpop.xlane.xlu0 %3254
        %v3256 = vsub.f32 %v3246, %v3252
        %v3257 = vsub.f32 %v3247, %v3255
        %v3258 = vsel %vm836, %v3256, 0.0
        %v3259 = vsel %vm836, %v3257, 0.0
        %v3260 = vadd.f32 %v3258, %v3259
        %3261 = vadd.xlane.f32.xlu0 %v3260
        %v3262 = vpop.xlane.xlu0 %3261
        %v3263 = vrot.slane %v3262, 4
        %v3264 = vadd.f32 %v3262, %v3263
        %v3265 = vrot.slane %v3264, 2
        %v3266 = vadd.f32 %v3264, %v3265
        %v3267 = vrot.slane %v3266, 1
        %v3268 = vadd.f32 %v3266, %v3267
        %s3269 = vtos %v3268
        %v3270 = vrcp.pop 16.0
        %v3271 = vmul.f32 16.0, %v3270
        %v3272 = vsub.f32 1.0, %v3271
        %v3273 = vmul.f32 %v3270, %v3272
        %v3274 = vadd.f32 %v3270, %v3273
        %vm3275 = vweird.f32 %v3270
        %v3276 = vsel %vm3275, %v3270, %v3274
        %s3277 = vtos %v3276
        %s3278 = smul.f32 %s3269, %s3277
        %vm3279 = vcmp.ge.f32.partialorder %v3219, %v3226
        %vm3280 = vcmp.ge.f32.partialorder %v3222, %v3229
        %v3281 = vsel %vm3279, %v296, 8
        %v3282 = vsel %vm3280, %v296, 8
        %v3283 = vsel %vm425, %v3281, 2147483647
        %v3284 = vand.u32 %v3283, 65535
        %v3285 = vshra.s32 %v3283, 16
        %v3286 = vcvt.s32.f32 %v3284
        %v3287 = vcvt.s32.f32 %v3285
        %3288 = vmin.xlane.f32.xlu0 %v3287
        %v3289 = vpop.xlane.xlu0 %3288
        %vm3290 = vcmp.eq.f32.partialorder %v3287, %v3289
        %v3291 = vsel %vm3290, %v3286, inf
        %3292 = vmin.xlane.f32.xlu0 %v3291
        %v3293 = vpop.xlane.xlu0 %3292
        %v3294 = vcvt.f32.s32 %v3293
        %v3295 = vcvt.f32.s32 %v3289
        %v3296 = vshll.u32 %v3295, 16
        %v3297 = vadd.s32 %v3296, %v3294
        %v3298 = vsel %vm425, %v3282, 2147483647
        %v3299 = vand.u32 %v3298, 65535
        %v3300 = vshra.s32 %v3298, 16
        %v3301 = vcvt.s32.f32 %v3299
        %v3302 = vcvt.s32.f32 %v3300
        %3303 = vmin.xlane.f32.xlu0 %v3302
        %v3304 = vpop.xlane.xlu0 %3303
        %vm3305 = vcmp.eq.f32.partialorder %v3302, %v3304
        %v3306 = vsel %vm3305, %v3301, inf
        %3307 = vmin.xlane.f32.xlu0 %v3306
        %v3308 = vpop.xlane.xlu0 %3307
        %v3309 = vcvt.f32.s32 %v3308
        %v3310 = vcvt.f32.s32 %v3304
        %v3311 = vshll.u32 %v3310, 16
        %v3312 = vadd.s32 %v3311, %v3309
        %vm3313 = vcmp.eq.s32.totalorder %v296, %v3297
        %vm3314 = vcmp.eq.s32.totalorder %v296, %v3312
        %v3315 = vsel %vm3313, %v367, 0.0
        %v3316 = vsel %vm3314, %v368, 0.0
        %v3317 = vsel %vm425, %v3315, 0.0
        %v3318 = vsel %vm425, %v3316, 0.0
        %v3319 = vadd.f32 %v3317, %v3318
        %3320 = vadd.xlane.f32.xlu0 %v3319
        %v3321 = vpop.xlane.xlu0 %3320
        %v3322 = vrot.slane %v3321, 4
        %v3323 = vadd.f32 %v3321, %v3322
        %v3324 = vrot.slane %v3323, 2
        %v3325 = vadd.f32 %v3323, %v3324
        %v3326 = vrot.slane %v3325, 1
        %v3327 = vadd.f32 %v3325, %v3326
        %s3328 = vtos %v3327
        %vm3329 = vmand %vm3122, %vm1085
        %v3330 = vstv %s3328
        %v3331 = vsel %vm3329, %v3330, 0.0
        %v3332 = vadd.f32 %v3126, %v3331
        %v3333 = vstv %s3278
        %v3334 = vsel %vm3329, %v3333, 0.0
        %v3335 = vadd.f32 %v3129, %v3334
        %3336 = vmatpush.xpose.msra.mxu0 0.0
        %3337 = vmatpush.xpose.msra.mxu0 0.0
        %3338 = vmatpush.xpose.msra.mxu0 0.0
        %3339 = vmatpush.xpose.msra.mxu0 0.0
        %3340 = vmatpush.xpose.msra.mxu0 0.0
        %3341 = vmatpush.xpose.msra.mxu0 0.0
        %3342 = vmatpush.xpose.msra.mxu0 0.0
        %3343 = vmatpush.xpose.msra.mxu0 0.0
        %3344 = vmatpush.xpose.msra.mxu0 0.0
        %3345 = vmatpush.xpose.msra.mxu0 0.0
        %3346 = vmatpush.xpose.msra.mxu0 0.0
        %3347 = vmatpush.xpose.msra.mxu0 0.0
        %3348 = vmatpush.xpose.msra.mxu0 0.0
        %3349 = vmatpush.xpose.msra.mxu0 0.0
        %3350 = vmatpush.xpose.msra.mxu0 0.0
        %3351 = vmatpush.xpose.msra.mxu0 %v3195
        %3352 = vmatmul.f32.gmra.mxu0 %v278
        %v3353 = vpop.f32.mrf.mxu0
        %v3354 = vadd.f32 %v3199, %v3353
        %3355 = vdwg.mxu0
        %v3356 = vsel %vm425, %v3354, -inf
        %3357 = vmax.xlane.f32.xlu0 %v3356
        %v3358 = vpop.xlane.xlu0 %3357
        %v3359 = vsub.f32 %v3354, %v3358
        %v3360 = vmul.f32 %v3359, 1.442695
        %v3361 = vpow.pop %v3360
        %v3362 = vsel %vm425, %v3361, 0.0
        %3363 = vadd.xlane.f32.xlu0 %v3362
        %v3364 = vpop.xlane.xlu0 %3363
        %v3365 = vrcp.pop %v3364
        %v3366 = vmul.f32 %v3364, %v3365
        %v3367 = vsub.f32 1.0, %v3366
        %v3368 = vmul.f32 %v3365, %v3367
        %v3369 = vadd.f32 %v3365, %v3368
        %vm3370 = vweird.f32 %v3364
        %vm3371 = vweird.f32 %v3365
        %vm3372 = vmor %vm3370, %vm3371
        %v3373 = vsel %vm3372, %v3365, %v3369
        %v3374 = vand.u32 2147483647, %v3364
        %vm3375 = vcmp.eq.f32.partialorder %v3374, 8.507059e+37
        %v3376 = vand.u32 %v3364, 2147483648
        %v3377 = vor.u32 1.1754944e-38, %v3376
        %v3378 = vsel %vm3375, %v3377, %v3373
        %v3379 = vmul.f32 %v3361, %v3378
        %v3380 = vsub.f32 %v3379, %v366
        %v3381 = vmul.f32 %v3380, %v886
        %3382 = vxpose.xlu0.b32.start [1/16] %v3381, 128
        %3383 = vxpose.xlu0.b32.cont [2/16] 0.0, 128
        %3384 = vxpose.xlu0.b32.cont [3/16] 0.0, 128
        %3385 = vxpose.xlu0.b32.cont [4/16] 0.0, 128
        %3386 = vxpose.xlu0.b32.cont [5/16] 0.0, 128
        %3387 = vxpose.xlu0.b32.cont [6/16] 0.0, 128
        %3388 = vxpose.xlu0.b32.cont [7/16] 0.0, 128
        %3389 = vxpose.xlu0.b32.cont [8/16] 0.0, 128
        %3390 = vxpose.xlu0.b32.cont [9/16] 0.0, 128
        %3391 = vxpose.xlu0.b32.cont [10/16] 0.0, 128
        %3392 = vxpose.xlu0.b32.cont [11/16] 0.0, 128
        %3393 = vxpose.xlu0.b32.cont [12/16] 0.0, 128
        %3394 = vxpose.xlu0.b32.cont [13/16] 0.0, 128
        %3395 = vxpose.xlu0.b32.cont [14/16] 0.0, 128
        %3396 = vxpose.xlu0.b32.cont [15/16] 0.0, 128
        %3397 = vxpose.xlu0.b32.end [16/16] 0.0, 128
        %v3398 = vpop.trf.xlu0
        %v3399 = vpop.trf.xlu0
        %v3400 = vpop.trf.xlu0
        %v3401 = vpop.trf.xlu0
        %v3402 = vpop.trf.xlu0
        %v3403 = vpop.trf.xlu0
        %v3404 = vpop.trf.xlu0
        %v3405 = vpop.trf.xlu0
        %v3406 = vpop.trf.xlu0
        %v3407 = vpop.trf.xlu0
        %v3408 = vpop.trf.xlu0
        %v3409 = vpop.trf.xlu0
        %v3410 = vpop.trf.xlu0
        %v3411 = vpop.trf.xlu0
        %v3412 = vpop.trf.xlu0
        %v3413 = vpop.trf.xlu0
        %v3415 = vsel %vm425, %v3398, 0
        %3417 = vmatpush.msra.mxu0 0.0
        %3418 = vmatpush.msra.mxu0 0.0
        %3419 = vmatpush.msra.mxu0 0.0
        %3420 = vmatpush.msra.mxu0 0.0
        %3421 = vmatpush.msra.mxu0 0.0
        %3422 = vmatpush.msra.mxu0 0.0
        %3423 = vmatpush.msra.mxu0 0.0
        %3424 = vmatpush.msra.mxu0 0.0
        %3425 = vmatpush.msra.mxu0 0.0
        %3426 = vmatpush.msra.mxu0 0.0
        %3427 = vmatpush.msra.mxu0 0.0
        %3428 = vmatpush.msra.mxu0 0.0
        %3429 = vmatpush.msra.mxu0 0.0
        %3430 = vmatpush.msra.mxu0 0.0
        %3431 = vmatpush.msra.mxu0 0.0
        %3432 = vmatpush.msra.mxu0 %v278
        %3433 = vmatmul.f32.gmra.mxu0 %v3415
        %v3434 = vpop.f32.mrf.mxu0
        %v3435 = vadd.f32 0.0, %v3434
        %3436 = vdwg.mxu0
        %v3437 = vsel %vm425, %v3381, 0.0
        %v3438 = vrot.slane %v3437, 4
        %v3439 = vadd.f32 %v3437, %v3438
        %v3440 = vrot.slane %v3439, 2
        %v3441 = vadd.f32 %v3439, %v3440
        %v3442 = vrot.slane %v3441, 1
        %v3443 = vadd.f32 %v3441, %v3442
        %v3444 = vmul.f32 %v3435, 0.4
        %v3445 = vsub.f32 %v3195, %v3444
        %v3446 = vmul.f32 %v3443, 0.4
        %v3447 = vsub.f32 %v3197, %v3446
        %v3449 = vperm.slane %v3447, 0
        %3451 = vmatpush.xpose.msra.mxu0 0.0
        %3452 = vmatpush.xpose.msra.mxu0 0.0
        %3453 = vmatpush.xpose.msra.mxu0 0.0
        %3454 = vmatpush.xpose.msra.mxu0 0.0
        %3455 = vmatpush.xpose.msra.mxu0 0.0
        %3456 = vmatpush.xpose.msra.mxu0 0.0
        %3457 = vmatpush.xpose.msra.mxu0 0.0
        %3458 = vmatpush.xpose.msra.mxu0 0.0
        %3459 = vmatpush.xpose.msra.mxu0 0.0
        %3460 = vmatpush.xpose.msra.mxu0 0.0
        %3461 = vmatpush.xpose.msra.mxu0 0.0
        %3462 = vmatpush.xpose.msra.mxu0 0.0
        %3463 = vmatpush.xpose.msra.mxu0 0.0
        %3464 = vmatpush.xpose.msra.mxu0 0.0
        %3465 = vmatpush.xpose.msra.mxu0 0.0
        %3466 = vmatpush.xpose.msra.mxu0 %v3445
        %3467 = vmatmul.f32.gmra.mxu0 %v279
        %v3468 = vpop.f32.mrf.mxu0
        %v3469 = vadd.f32 %v3449, %v3468
        %3470 = vmatmul.f32.gmra.mxu0 %v280
        %v3471 = vpop.f32.mrf.mxu0
        %v3472 = vadd.f32 %v3449, %v3471
        %3473 = vdwg.mxu0
        %v3474 = vsel %vm425, %v3469, -inf
        %3475 = vmax.xlane.f32.xlu0 %v3474
        %v3476 = vpop.xlane.xlu0 %3475
        %v3477 = vsel %vm425, %v3472, -inf
        %3478 = vmax.xlane.f32.xlu0 %v3477
        %v3479 = vpop.xlane.xlu0 %3478
        %v3480 = vsub.f32 %v3469, %v3476
        %v3481 = vsub.f32 %v3472, %v3479
        %v3482 = vmul.f32 %v3480, 1.442695
        %v3483 = vpow.pop %v3482
        %v3484 = vmul.f32 %v3481, 1.442695
        %v3485 = vpow.pop %v3484
        %v3486 = vsel %vm425, %v3483, 0.0
        %3487 = vadd.xlane.f32.xlu0 %v3486
        %v3488 = vpop.xlane.xlu0 %3487
        %v3489 = vsel %vm425, %v3485, 0.0
        %3490 = vadd.xlane.f32.xlu0 %v3489
        %v3491 = vpop.xlane.xlu0 %3490
        %v3492 = vlog2.pop %v3488
        %v3493 = vmul.f32 %v3492, 0.6931472
        %v3494 = vlog2.pop %v3491
        %v3495 = vmul.f32 %v3494, 0.6931472
        %v3496 = vadd.f32 %v3476, %v3493
        %v3497 = vadd.f32 %v3479, %v3495
        %v3498 = vmul.f32 %v3469, %v367
        %v3499 = vmul.f32 %v3472, %v368
        %v3500 = vsel %vm425, %v3498, 0.0
        %3501 = vadd.xlane.f32.xlu0 %v3500
        %v3502 = vpop.xlane.xlu0 %3501
        %v3503 = vsel %vm425, %v3499, 0.0
        %3504 = vadd.xlane.f32.xlu0 %v3503
        %v3505 = vpop.xlane.xlu0 %3504
        %v3506 = vsub.f32 %v3496, %v3502
        %v3507 = vsub.f32 %v3497, %v3505
        %v3508 = vsel %vm836, %v3506, 0.0
        %v3509 = vsel %vm836, %v3507, 0.0
        %v3510 = vadd.f32 %v3508, %v3509
        %3511 = vadd.xlane.f32.xlu0 %v3510
        %v3512 = vpop.xlane.xlu0 %3511
        %v3513 = vrot.slane %v3512, 4
        %v3514 = vadd.f32 %v3512, %v3513
        %v3515 = vrot.slane %v3514, 2
        %v3516 = vadd.f32 %v3514, %v3515
        %v3517 = vrot.slane %v3516, 1
        %v3518 = vadd.f32 %v3516, %v3517
        %s3519 = vtos %v3518
        %v3520 = vrcp.pop 16.0
        %v3521 = vmul.f32 16.0, %v3520
        %v3522 = vsub.f32 1.0, %v3521
        %v3523 = vmul.f32 %v3520, %v3522
        %v3524 = vadd.f32 %v3520, %v3523
        %vm3525 = vweird.f32 %v3520
        %v3526 = vsel %vm3525, %v3520, %v3524
        %s3527 = vtos %v3526
        %s3528 = smul.f32 %s3519, %s3527
        %vm3529 = vcmp.ge.f32.partialorder %v3469, %v3476
        %vm3530 = vcmp.ge.f32.partialorder %v3472, %v3479
        %v3531 = vsel %vm3529, %v296, 8
        %v3532 = vsel %vm3530, %v296, 8
        %v3533 = vsel %vm425, %v3531, 2147483647
        %v3534 = vand.u32 %v3533, 65535
        %v3535 = vshra.s32 %v3533, 16
        %v3536 = vcvt.s32.f32 %v3534
        %v3537 = vcvt.s32.f32 %v3535
        %3538 = vmin.xlane.f32.xlu0 %v3537
        %v3539 = vpop.xlane.xlu0 %3538
        %vm3540 = vcmp.eq.f32.partialorder %v3537, %v3539
        %v3541 = vsel %vm3540, %v3536, inf
        %3542 = vmin.xlane.f32.xlu0 %v3541
        %v3543 = vpop.xlane.xlu0 %3542
        %v3544 = vcvt.f32.s32 %v3543
        %v3545 = vcvt.f32.s32 %v3539
        %v3546 = vshll.u32 %v3545, 16
        %v3547 = vadd.s32 %v3546, %v3544
        %v3548 = vsel %vm425, %v3532, 2147483647
        %v3549 = vand.u32 %v3548, 65535
        %v3550 = vshra.s32 %v3548, 16
        %v3551 = vcvt.s32.f32 %v3549
        %v3552 = vcvt.s32.f32 %v3550
        %3553 = vmin.xlane.f32.xlu0 %v3552
        %v3554 = vpop.xlane.xlu0 %3553
        %vm3555 = vcmp.eq.f32.partialorder %v3552, %v3554
        %v3556 = vsel %vm3555, %v3551, inf
        %3557 = vmin.xlane.f32.xlu0 %v3556
        %v3558 = vpop.xlane.xlu0 %3557
        %v3559 = vcvt.f32.s32 %v3558
        %v3560 = vcvt.f32.s32 %v3554
        %v3561 = vshll.u32 %v3560, 16
        %v3562 = vadd.s32 %v3561, %v3559
        %vm3563 = vcmp.eq.s32.totalorder %v296, %v3547
        %vm3564 = vcmp.eq.s32.totalorder %v296, %v3562
        %v3565 = vsel %vm3563, %v367, 0.0
        %v3566 = vsel %vm3564, %v368, 0.0
        %v3567 = vsel %vm425, %v3565, 0.0
        %v3568 = vsel %vm425, %v3566, 0.0
        %v3569 = vadd.f32 %v3567, %v3568
        %3570 = vadd.xlane.f32.xlu0 %v3569
        %v3571 = vpop.xlane.xlu0 %3570
        %v3572 = vrot.slane %v3571, 4
        %v3573 = vadd.f32 %v3571, %v3572
        %v3574 = vrot.slane %v3573, 2
        %v3575 = vadd.f32 %v3573, %v3574
        %v3576 = vrot.slane %v3575, 1
        %v3577 = vadd.f32 %v3575, %v3576
        %s3578 = vtos %v3577
        %vm3579 = vmand %vm3122, %vm1336
        %v3580 = vstv %s3578
        %v3581 = vsel %vm3579, %v3580, 0.0
        %v3582 = vadd.f32 %v3332, %v3581
        %v3583 = vstv %s3528
        %v3584 = vsel %vm3579, %v3583, 0.0
        %v3585 = vadd.f32 %v3335, %v3584
        %3586 = vmatpush.xpose.msra.mxu0 0.0
        %3587 = vmatpush.xpose.msra.mxu0 0.0
        %3588 = vmatpush.xpose.msra.mxu0 0.0
        %3589 = vmatpush.xpose.msra.mxu0 0.0
        %3590 = vmatpush.xpose.msra.mxu0 0.0
        %3591 = vmatpush.xpose.msra.mxu0 0.0
        %3592 = vmatpush.xpose.msra.mxu0 0.0
        %3593 = vmatpush.xpose.msra.mxu0 0.0
        %3594 = vmatpush.xpose.msra.mxu0 0.0
        %3595 = vmatpush.xpose.msra.mxu0 0.0
        %3596 = vmatpush.xpose.msra.mxu0 0.0
        %3597 = vmatpush.xpose.msra.mxu0 0.0
        %3598 = vmatpush.xpose.msra.mxu0 0.0
        %3599 = vmatpush.xpose.msra.mxu0 0.0
        %3600 = vmatpush.xpose.msra.mxu0 0.0
        %3601 = vmatpush.xpose.msra.mxu0 %v3445
        %3602 = vmatmul.f32.gmra.mxu0 %v278
        %v3603 = vpop.f32.mrf.mxu0
        %v3604 = vadd.f32 %v3449, %v3603
        %3605 = vdwg.mxu0
        %v3606 = vsel %vm425, %v3604, -inf
        %3607 = vmax.xlane.f32.xlu0 %v3606
        %v3608 = vpop.xlane.xlu0 %3607
        %v3609 = vsub.f32 %v3604, %v3608
        %v3610 = vmul.f32 %v3609, 1.442695
        %v3611 = vpow.pop %v3610
        %v3612 = vsel %vm425, %v3611, 0.0
        %3613 = vadd.xlane.f32.xlu0 %v3612
        %v3614 = vpop.xlane.xlu0 %3613
        %v3615 = vrcp.pop %v3614
        %v3616 = vmul.f32 %v3614, %v3615
        %v3617 = vsub.f32 1.0, %v3616
        %v3618 = vmul.f32 %v3615, %v3617
        %v3619 = vadd.f32 %v3615, %v3618
        %vm3620 = vweird.f32 %v3614
        %vm3621 = vweird.f32 %v3615
        %vm3622 = vmor %vm3620, %vm3621
        %v3623 = vsel %vm3622, %v3615, %v3619
        %v3624 = vand.u32 2147483647, %v3614
        %vm3625 = vcmp.eq.f32.partialorder %v3624, 8.507059e+37
        %v3626 = vand.u32 %v3614, 2147483648
        %v3627 = vor.u32 1.1754944e-38, %v3626
        %v3628 = vsel %vm3625, %v3627, %v3623
        %v3629 = vmul.f32 %v3611, %v3628
        %v3630 = vsub.f32 %v3629, %v366
        %v3631 = vmul.f32 %v3630, %v886
        %3632 = vxpose.xlu0.b32.start [1/16] %v3631, 128
        %3633 = vxpose.xlu0.b32.cont [2/16] 0.0, 128
        %3634 = vxpose.xlu0.b32.cont [3/16] 0.0, 128
        %3635 = vxpose.xlu0.b32.cont [4/16] 0.0, 128
        %3636 = vxpose.xlu0.b32.cont [5/16] 0.0, 128
        %3637 = vxpose.xlu0.b32.cont [6/16] 0.0, 128
        %3638 = vxpose.xlu0.b32.cont [7/16] 0.0, 128
        %3639 = vxpose.xlu0.b32.cont [8/16] 0.0, 128
        %3640 = vxpose.xlu0.b32.cont [9/16] 0.0, 128
        %3641 = vxpose.xlu0.b32.cont [10/16] 0.0, 128
        %3642 = vxpose.xlu0.b32.cont [11/16] 0.0, 128
        %3643 = vxpose.xlu0.b32.cont [12/16] 0.0, 128
        %3644 = vxpose.xlu0.b32.cont [13/16] 0.0, 128
        %3645 = vxpose.xlu0.b32.cont [14/16] 0.0, 128
        %3646 = vxpose.xlu0.b32.cont [15/16] 0.0, 128
        %3647 = vxpose.xlu0.b32.end [16/16] 0.0, 128
        %v3648 = vpop.trf.xlu0
        %v3649 = vpop.trf.xlu0
        %v3650 = vpop.trf.xlu0
        %v3651 = vpop.trf.xlu0
        %v3652 = vpop.trf.xlu0
        %v3653 = vpop.trf.xlu0
        %v3654 = vpop.trf.xlu0
        %v3655 = vpop.trf.xlu0
        %v3656 = vpop.trf.xlu0
        %v3657 = vpop.trf.xlu0
        %v3658 = vpop.trf.xlu0
        %v3659 = vpop.trf.xlu0
        %v3660 = vpop.trf.xlu0
        %v3661 = vpop.trf.xlu0
        %v3662 = vpop.trf.xlu0
        %v3663 = vpop.trf.xlu0
        %v3665 = vsel %vm425, %v3648, 0
        %3667 = vmatpush.msra.mxu0 0.0
        %3668 = vmatpush.msra.mxu0 0.0
        %3669 = vmatpush.msra.mxu0 0.0
        %3670 = vmatpush.msra.mxu0 0.0
        %3671 = vmatpush.msra.mxu0 0.0
        %3672 = vmatpush.msra.mxu0 0.0
        %3673 = vmatpush.msra.mxu0 0.0
        %3674 = vmatpush.msra.mxu0 0.0
        %3675 = vmatpush.msra.mxu0 0.0
        %3676 = vmatpush.msra.mxu0 0.0
        %3677 = vmatpush.msra.mxu0 0.0
        %3678 = vmatpush.msra.mxu0 0.0
        %3679 = vmatpush.msra.mxu0 0.0
        %3680 = vmatpush.msra.mxu0 0.0
        %3681 = vmatpush.msra.mxu0 0.0
        %3682 = vmatpush.msra.mxu0 %v278
        %3683 = vmatmul.f32.gmra.mxu0 %v3665
        %v3684 = vpop.f32.mrf.mxu0
        %v3685 = vadd.f32 0.0, %v3684
        %3686 = vdwg.mxu0
        %v3687 = vsel %vm425, %v3631, 0.0
        %v3688 = vrot.slane %v3687, 4
        %v3689 = vadd.f32 %v3687, %v3688
        %v3690 = vrot.slane %v3689, 2
        %v3691 = vadd.f32 %v3689, %v3690
        %v3692 = vrot.slane %v3691, 1
        %v3693 = vadd.f32 %v3691, %v3692
        %v3694 = vmul.f32 %v3685, 0.4
        %v3695 = vsub.f32 %v3445, %v3694
        %v3696 = vmul.f32 %v3693, 0.4
        %v3697 = vsub.f32 %v3447, %v3696
        %v3699 = vperm.slane %v3697, 0
        %3701 = vmatpush.xpose.msra.mxu0 0.0
        %3702 = vmatpush.xpose.msra.mxu0 0.0
        %3703 = vmatpush.xpose.msra.mxu0 0.0
        %3704 = vmatpush.xpose.msra.mxu0 0.0
        %3705 = vmatpush.xpose.msra.mxu0 0.0
        %3706 = vmatpush.xpose.msra.mxu0 0.0
        %3707 = vmatpush.xpose.msra.mxu0 0.0
        %3708 = vmatpush.xpose.msra.mxu0 0.0
        %3709 = vmatpush.xpose.msra.mxu0 0.0
        %3710 = vmatpush.xpose.msra.mxu0 0.0
        %3711 = vmatpush.xpose.msra.mxu0 0.0
        %3712 = vmatpush.xpose.msra.mxu0 0.0
        %3713 = vmatpush.xpose.msra.mxu0 0.0
        %3714 = vmatpush.xpose.msra.mxu0 0.0
        %3715 = vmatpush.xpose.msra.mxu0 0.0
        %3716 = vmatpush.xpose.msra.mxu0 %v3695
        %3717 = vmatmul.f32.gmra.mxu0 %v279
        %v3718 = vpop.f32.mrf.mxu0
        %v3719 = vadd.f32 %v3699, %v3718
        %3720 = vmatmul.f32.gmra.mxu0 %v280
        %v3721 = vpop.f32.mrf.mxu0
        %v3722 = vadd.f32 %v3699, %v3721
        %3723 = vdwg.mxu0
        %v3724 = vsel %vm425, %v3719, -inf
        %3725 = vmax.xlane.f32.xlu0 %v3724
        %v3726 = vpop.xlane.xlu0 %3725
        %v3727 = vsel %vm425, %v3722, -inf
        %3728 = vmax.xlane.f32.xlu0 %v3727
        %v3729 = vpop.xlane.xlu0 %3728
        %v3730 = vsub.f32 %v3719, %v3726
        %v3731 = vsub.f32 %v3722, %v3729
        %v3732 = vmul.f32 %v3730, 1.442695
        %v3733 = vpow.pop %v3732
        %v3734 = vmul.f32 %v3731, 1.442695
        %v3735 = vpow.pop %v3734
        %v3736 = vsel %vm425, %v3733, 0.0
        %3737 = vadd.xlane.f32.xlu0 %v3736
        %v3738 = vpop.xlane.xlu0 %3737
        %v3739 = vsel %vm425, %v3735, 0.0
        %3740 = vadd.xlane.f32.xlu0 %v3739
        %v3741 = vpop.xlane.xlu0 %3740
        %v3742 = vlog2.pop %v3738
        %v3743 = vmul.f32 %v3742, 0.6931472
        %v3744 = vlog2.pop %v3741
        %v3745 = vmul.f32 %v3744, 0.6931472
        %v3746 = vadd.f32 %v3726, %v3743
        %v3747 = vadd.f32 %v3729, %v3745
        %v3748 = vmul.f32 %v3719, %v367
        %v3749 = vmul.f32 %v3722, %v368
        %v3750 = vsel %vm425, %v3748, 0.0
        %3751 = vadd.xlane.f32.xlu0 %v3750
        %v3752 = vpop.xlane.xlu0 %3751
        %v3753 = vsel %vm425, %v3749, 0.0
        %3754 = vadd.xlane.f32.xlu0 %v3753
        %v3755 = vpop.xlane.xlu0 %3754
        %v3756 = vsub.f32 %v3746, %v3752
        %v3757 = vsub.f32 %v3747, %v3755
        %v3758 = vsel %vm836, %v3756, 0.0
        %v3759 = vsel %vm836, %v3757, 0.0
        %v3760 = vadd.f32 %v3758, %v3759
        %3761 = vadd.xlane.f32.xlu0 %v3760
        %v3762 = vpop.xlane.xlu0 %3761
        %v3763 = vrot.slane %v3762, 4
        %v3764 = vadd.f32 %v3762, %v3763
        %v3765 = vrot.slane %v3764, 2
        %v3766 = vadd.f32 %v3764, %v3765
        %v3767 = vrot.slane %v3766, 1
        %v3768 = vadd.f32 %v3766, %v3767
        %s3769 = vtos %v3768
        %v3770 = vrcp.pop 16.0
        %v3771 = vmul.f32 16.0, %v3770
        %v3772 = vsub.f32 1.0, %v3771
        %v3773 = vmul.f32 %v3770, %v3772
        %v3774 = vadd.f32 %v3770, %v3773
        %vm3775 = vweird.f32 %v3770
        %v3776 = vsel %vm3775, %v3770, %v3774
        %s3777 = vtos %v3776
        %s3778 = smul.f32 %s3769, %s3777
        %vm3779 = vcmp.ge.f32.partialorder %v3719, %v3726
        %vm3780 = vcmp.ge.f32.partialorder %v3722, %v3729
        %v3781 = vsel %vm3779, %v296, 8
        %v3782 = vsel %vm3780, %v296, 8
        %v3783 = vsel %vm425, %v3781, 2147483647
        %v3784 = vand.u32 %v3783, 65535
        %v3785 = vshra.s32 %v3783, 16
        %v3786 = vcvt.s32.f32 %v3784
        %v3787 = vcvt.s32.f32 %v3785
        %3788 = vmin.xlane.f32.xlu0 %v3787
        %v3789 = vpop.xlane.xlu0 %3788
        %vm3790 = vcmp.eq.f32.partialorder %v3787, %v3789
        %v3791 = vsel %vm3790, %v3786, inf
        %3792 = vmin.xlane.f32.xlu0 %v3791
        %v3793 = vpop.xlane.xlu0 %3792
        %v3794 = vcvt.f32.s32 %v3793
        %v3795 = vcvt.f32.s32 %v3789
        %v3796 = vshll.u32 %v3795, 16
        %v3797 = vadd.s32 %v3796, %v3794
        %v3798 = vsel %vm425, %v3782, 2147483647
        %v3799 = vand.u32 %v3798, 65535
        %v3800 = vshra.s32 %v3798, 16
        %v3801 = vcvt.s32.f32 %v3799
        %v3802 = vcvt.s32.f32 %v3800
        %3803 = vmin.xlane.f32.xlu0 %v3802
        %v3804 = vpop.xlane.xlu0 %3803
        %vm3805 = vcmp.eq.f32.partialorder %v3802, %v3804
        %v3806 = vsel %vm3805, %v3801, inf
        %3807 = vmin.xlane.f32.xlu0 %v3806
        %v3808 = vpop.xlane.xlu0 %3807
        %v3809 = vcvt.f32.s32 %v3808
        %v3810 = vcvt.f32.s32 %v3804
        %v3811 = vshll.u32 %v3810, 16
        %v3812 = vadd.s32 %v3811, %v3809
        %vm3813 = vcmp.eq.s32.totalorder %v296, %v3797
        %vm3814 = vcmp.eq.s32.totalorder %v296, %v3812
        %v3815 = vsel %vm3813, %v367, 0.0
        %v3816 = vsel %vm3814, %v368, 0.0
        %v3817 = vsel %vm425, %v3815, 0.0
        %v3818 = vsel %vm425, %v3816, 0.0
        %v3819 = vadd.f32 %v3817, %v3818
        %3820 = vadd.xlane.f32.xlu0 %v3819
        %v3821 = vpop.xlane.xlu0 %3820
        %v3822 = vrot.slane %v3821, 4
        %v3823 = vadd.f32 %v3821, %v3822
        %v3824 = vrot.slane %v3823, 2
        %v3825 = vadd.f32 %v3823, %v3824
        %v3826 = vrot.slane %v3825, 1
        %v3827 = vadd.f32 %v3825, %v3826
        %s3828 = vtos %v3827
        %vm3829 = vmand %vm3122, %vm1587
        %v3830 = vstv %s3828
        %v3831 = vsel %vm3829, %v3830, 0.0
        %v3832 = vadd.f32 %v3582, %v3831
        %v3833 = vstv %s3778
        %v3834 = vsel %vm3829, %v3833, 0.0
        %v3835 = vadd.f32 %v3585, %v3834
        %vm3836 = vcmask 27648
        %3837 = vst.msk [vmem:[%s251] sm:$0xf] %vm3836, %v3832
        %3838 = vst.msk [vmem:[%s258] sm:$0xf] %vm3836, %v3835
        %s3839 = sand.u32 %s126, 1
        %s3840 = scalar_lea.sflag [#allocation4], %s3839
        %s3841 = sand.u32 %s126, 1
        %s3842 = smul.addr %s3841, 4
        %s3843 = scalar_lea.vmem [#allocation5], %s3842
        %s3844 = sand.u32 %s152, 1
        %s3845 = scalar_lea.sflag [#allocation7], %s3844
        %s3846 = sand.u32 %s152, 1
        %s3847 = smul.addr %s3846, 4
        %s3848 = scalar_lea.vmem [#allocation6], %s3847
        // Predicated region
        $region41: #{tpu_custom_call.1} parent=35 // pred_check
          %p3849 = pneg %p136
        $region42: #{tpu_custom_call.1} parent=35 // pred_check_branch
          %3851 = sbr.rel (%p3849) target = $region44
        $region43: #{tpu_custom_call.1} parent=35 // pred_region
          %3853 = vsyncadd %s3840, 0
          %s3854 = smul.addr %s24, 4
          %s3855 = scalar_lea.hbm %s4, %s3854
          %s3857 = sshll.u32 %s3843, 4
          %s3858 = int_to_ptr.vmem [resolvable:$true] %s3857
          %s3859 = sshll.u32 %s3855, 4
          %s3860 = int_to_ptr.hbm [resolvable:$true] %s3859
          %3862 = dma.vmem_to_hbm [thread:$0]  %s3858, 64, %s3860, %s3840
        $region44: #{tpu_custom_call.1} parent=35 // pred_fallthru
          _
        // Predicated region
        $region45: #{tpu_custom_call.1} parent=35 // pred_check
          %p3863 = pneg %p162
        $region46: #{tpu_custom_call.1} parent=35 // pred_check_branch
          %3865 = sbr.rel (%p3863) target = $region48
        $region47: #{tpu_custom_call.1} parent=35 // pred_region
          %3867 = vsyncadd %s3845, 0
          %s3868 = smul.addr %s24, 4
          %s3869 = scalar_lea.hbm %s5, %s3868
          %s3871 = sshll.u32 %s3848, 4
          %s3872 = int_to_ptr.vmem [resolvable:$true] %s3871
          %s3873 = sshll.u32 %s3869, 4
          %s3874 = int_to_ptr.hbm [resolvable:$true] %s3873
          %3876 = dma.vmem_to_hbm [thread:$0]  %s3872, 64, %s3874, %s3845
        $region48: #{tpu_custom_call.1} parent=35 // pred_fallthru
          _
      $region36: #{tpu_custom_call.1} parent=5 // pred_fallthru
        _
      %p3877 = scmp.le.s32.totalorder 2, %s19
      // Predicated region
      $region49: #{tpu_custom_call.1} parent=5 // pred_check
        %p3878 = pneg %p3877
      $region50: #{tpu_custom_call.1} parent=5 // pred_check_branch
        %3880 = sbr.rel (%p3878) target = $region52
      $region51: #{tpu_custom_call.1} parent=5 // pred_region
        %s3881 = ssub.s32 %s19, 2
        // Predicated region
        $region53: #{tpu_custom_call.1} parent=51 // pred_check
          %p3882 = pneg %p142
        $region54: #{tpu_custom_call.1} parent=51 // pred_check_branch
          %3884 = sbr.rel (%p3882) target = $region56
        $region55: #{tpu_custom_call.1} parent=51 // pred_region
          %s3885 = sand.u32 %s127, 1
          %s3886 = scalar_lea.sflag [#allocation4], %s3885
          %s3887 = sand.u32 %s127, 1
          %s3888 = smul.addr %s3887, 4
          %s3889 = scalar_lea.vmem [#allocation5], %s3888
          %3891 = dma.done %s3886, 64
        $region56: #{tpu_custom_call.1} parent=51 // pred_fallthru
          _
        // Predicated region
        $region57: #{tpu_custom_call.1} parent=51 // pred_check
          %p3892 = pneg %p168
        $region58: #{tpu_custom_call.1} parent=51 // pred_check_branch
          %3894 = sbr.rel (%p3892) target = $region60
        $region59: #{tpu_custom_call.1} parent=51 // pred_region
          %s3895 = sand.u32 %s153, 1
          %s3896 = scalar_lea.sflag [#allocation7], %s3895
          %s3897 = sand.u32 %s153, 1
          %s3898 = smul.addr %s3897, 4
          %s3899 = scalar_lea.vmem [#allocation6], %s3898
          %3901 = dma.done %s3896, 64
        $region60: #{tpu_custom_call.1} parent=51 // pred_fallthru
          _
      $region52: #{tpu_custom_call.1} parent=5 // pred_fallthru
        _
    $region6: #{tpu_custom_call.1} parent=1 // loop_footer
      %s23 = sadd.s32 1, %s19
    $region7: #{tpu_custom_call.1} parent=1 // loop_footer_branch
      %18 = sbr.rel target = $region3
    $region8: #{tpu_custom_call.1} parent=1 // loop_exit
      _
    %3902 = vsyncpa [#allocation3], 1
    %s3903 = scalar_lea.sflag [#allocation3], 1
    %3904 = vsyncpa %s3903, 1
    %3905 = vsyncpa [#allocation4], 1
    %s3906 = scalar_lea.sflag [#allocation4], 1
    %3907 = vsyncpa %s3906, 1
    %3908 = vsyncpa [#allocation7], 1
    %s3909 = scalar_lea.sflag [#allocation7], 1
    %3910 = vsyncpa %s3909, 1

</llo_original>
